<compile_context>
chip_gen: v7x
topology: tpu7x:2x2x1
jax: 0.10.0
libtpu: 0.0.40
codegen_flags: <defaults>
</compile_context>

<pallas_src>
import functools

import jax
import jax.numpy as jnp
from jax.experimental import pallas as pl
from jax.experimental.pallas import tpu as pltpu

# Large finite sentinel (avoids inf arithmetic / NaN edge cases in add+max).
_NEG = -3.0e38


def _hnet_max_kernel(x_ref, pen_ref, o_ref, acc_ref):
    """One grid step (pts-tile i, cmp-tile j, node-tile k).

    x_ref  : (tp, tn)  energies tile
    pen_ref: (tn, tc)  additive penalty tile (0.0 edge / -3e38 null)
    o_ref  : (tp, tc)  output tile (written on last node tile)
    acc_ref: (tp, tc)  f32 scratch carrying the running max across node tiles
    """
    k = pl.program_id(2)
    tn = x_ref.shape[1]

    @pl.when(k == 0)
    def _():
        acc_ref[...] = jnp.full(acc_ref.shape, _NEG, dtype=acc_ref.dtype)

    # Accumulator lives in vregs for the whole node loop; scratch is touched
    # exactly once per grid step.
    acc = acc_ref[...]
    for j in range(tn):                        # static unroll over the node tile
        col = x_ref[:, j:j + 1]                # (tp, 1)  -> lane-broadcast (XLU)
        row = pen_ref[j:j + 1, :]              # (1, tc)  -> sublane-broadcast
        acc = jnp.maximum(acc, col + row)      # add + max: 2 VALU ops / element
    acc_ref[...] = acc

    @pl.when(k == pl.num_programs(2) - 1)
    def _():
        o_ref[...] = acc.astype(o_ref.dtype)


def _round_up(a, b):
    return ((a + b - 1) // b) * b


@functools.partial(jax.jit, static_argnames=("tp", "tc", "tn"))
def hnet_max(x, mask_not_null, *, tp=64, tc=256, tn=256):
    """x: (n_pts, n_nodes) float; mask_not_null: (n_nodes, n_cmp) {0,1}.

    Returns (n_pts, n_cmp) float32, matching HNetMax.forward.
    """
    n_pts, n_nodes = x.shape
    n_nodes2, n_cmp = mask_not_null.shape
    assert n_nodes == n_nodes2

    # Clamp tiles to the aligned problem size (tp multiple of 8; tc, tn
    # multiples of 128) so tiny problems do not pay for full-size tiles.
    tp = min(tp, _round_up(n_pts, 8))
    tc = min(tc, _round_up(n_cmp, 128))
    tn = min(tn, _round_up(n_nodes, 128))
    P = _round_up(n_pts, tp)
    C = _round_up(n_cmp, tc)
    N = _round_up(n_nodes, tn)
    pad_n = N - n_nodes
    pad_c = C - n_cmp

    x = x.astype(jnp.float32)
    if (P, N) != (n_pts, n_nodes):   # skip the pad copy when already aligned
        x = jnp.pad(x, ((0, P - n_pts), (0, N - n_nodes)))  # pad rows are 0.0

    # Additive penalty: 0 where there is an edge, -3e38 where null.
    pen = jnp.where(mask_not_null > 0, 0.0, _NEG).astype(jnp.float32)
    if pad_n > 0:
        # First padded node row is a sentinel: penalty 0 exactly where the
        # component column has no edges.  Since the padded x rows are 0, an
        # empty column resolves to max(..., 0 + 0) = 0 inside the kernel --
        # no post-kernel fixup pass over the output.  Remaining pad rows get
        # the full penalty so they can never win the max.
        has_edge = jnp.any(mask_not_null > 0, axis=0)              # (n_cmp,)
        sentinel = jnp.where(has_edge, _NEG, 0.0)[None, :].astype(jnp.float32)
        rest = jnp.full((pad_n - 1, n_cmp), _NEG, jnp.float32)
        pen = jnp.concatenate([pen, sentinel, rest], axis=0)
    if pad_c > 0:
        pen = jnp.pad(pen, ((0, 0), (0, pad_c)), constant_values=_NEG)

    out = pl.pallas_call(
        _hnet_max_kernel,
        out_shape=jax.ShapeDtypeStruct((P, C), jnp.float32),
        grid_spec=pltpu.PrefetchScalarGridSpec(
            num_scalar_prefetch=0,
            grid=(P // tp, C // tc, N // tn),
            in_specs=[
                pl.BlockSpec((tp, tn), lambda i, j, k: (i, k)),   # x tile
                pl.BlockSpec((tn, tc), lambda i, j, k: (k, j)),   # penalty tile
            ],
            out_specs=pl.BlockSpec((tp, tc), lambda i, j, k: (i, j)),
            scratch_shapes=[
                pltpu.VMEM((tp, tc), jnp.float32),   # running max accumulator
            ],
        ),
        compiler_params=pltpu.CompilerParams(
            dimension_semantics=("parallel", "parallel", "arbitrary")),
    )(x, pen)

    out = out[:n_pts, :n_cmp]
    if pad_n == 0:
        # No pad row available for the sentinel trick: components with no
        # non-null edge are forced to exactly 0 here instead.
        has_any = jnp.any(mask_not_null > 0, axis=0)
        out = jnp.where(has_any[None, :], out, 0.0)
    return out.astype(jnp.float32)


def hnet_max_reference(x, mask_not_null):
    """Pure-JAX reference of HNetMax.forward for validation."""
    x = x.astype(jnp.float32)
    m = mask_not_null > 0
    masked = jnp.where(m[None, :, :], x[:, :, None], -jnp.inf)
    mx = jnp.max(masked, axis=1)
    has_any = jnp.any(m, axis=0)[None, :]
    return jnp.where(has_any, mx, 0.0)


if __name__ == "__main__":
    key = jax.random.PRNGKey(0)
    k_x, k_e, k_x2, k_e2 = jax.random.split(key, 4)

    EDG_NULL = 0

    # Case 1: small unaligned shapes (exercises the sentinel / padded path).
    n_pts, n_nodes, n_cmp = 16, 12, 10
    x = jax.random.normal(k_x, (n_pts, n_nodes), dtype=jnp.float32)
    learned_edge_states = jax.random.randint(
        k_e, (n_nodes, n_cmp), minval=0, maxval=3).astype(jnp.float32)
    # Force one fully-null component column to exercise the "stays zero" path.
    learned_edge_states = learned_edge_states.at[:, 3].set(0.0)
    mask_not_null = (learned_edge_states != EDG_NULL).astype(jnp.float32)

    out = jax.block_until_ready(hnet_max(x, mask_not_null))
    ref = hnet_max_reference(x, mask_not_null)
    assert out.shape == (n_pts, n_cmp)
    assert out.dtype == jnp.float32
    assert jnp.allclose(out, ref, atol=1e-6, rtol=1e-6)

    # Case 2: node count exactly tile-aligned (exercises the no-pad fallback).
    n_pts2, n_nodes2, n_cmp2 = 8, 128, 6
    x2 = jax.random.normal(k_x2, (n_pts2, n_nodes2), dtype=jnp.float32)
    les2 = jax.random.randint(
        k_e2, (n_nodes2, n_cmp2), minval=0, maxval=2).astype(jnp.float32)
    les2 = les2.at[:, 1].set(0.0)   # one empty component column
    mask2 = (les2 != EDG_NULL).astype(jnp.float32)

    out2 = jax.block_until_ready(hnet_max(x2, mask2))
    ref2 = hnet_max_reference(x2, mask2)
    assert jnp.allclose(out2, ref2, atol=1e-6, rtol=1e-6)

    print("KERNEL_OK")
</pallas_src>

<mosaic_0001>
module attributes {stable_mosaic.version = 11 : i64} {
  func.func @_hnet_max_kernel(%arg0: i32, %arg1: i32, %arg2: i32, %arg3: memref<16x128xf32, #tpu.memory_space<vmem>>, %arg4: memref<128x128xf32, #tpu.memory_space<vmem>>, %arg5: memref<16x128xf32, #tpu.memory_space<vmem>>, %arg6: memref<16x128xf32, #tpu.memory_space<vmem>>) attributes {dimension_semantics = [#tpu.dimension_semantics<parallel>, #tpu.dimension_semantics<parallel>, #tpu.dimension_semantics<arbitrary>], iteration_bounds = array<i64: 1, 1, 1>, scalar_prefetch = 0 : i64, scratch_operands = 1 : i64, tpu.core_type = #tpu.core_type<tc>, window_params = [{transform_indices = @transform_0, window_bounds = array<i64: 16, 128>}, {transform_indices = @transform_1, window_bounds = array<i64: 128, 128>}, {transform_indices = @transform_2, window_bounds = array<i64: 16, 128>}]} {
    %c0_i32 = arith.constant 0 : i32
    %0 = arith.cmpi eq, %arg2, %c0_i32 : i32
    %1 = arith.extui %0 : i1 to i32
    %c0_i32_0 = arith.constant 0 : i32
    %2 = arith.cmpi ne, %1, %c0_i32_0 : i32
    scf.if %2 {
      %cst = arith.constant -3.000000e+38 : f32
      %776 = vector.broadcast %cst : f32 to vector<16x128xf32>
      %c0_391 = arith.constant 0 : index
      %c0_392 = arith.constant 0 : index
      %777 = vector.load %arg6[%c0_391, %c0_392] : memref<16x128xf32, #tpu.memory_space<vmem>>, vector<16x128xf32>
      tpu.vector_store %arg6[%c0_391, %c0_392], %776 {strides = array<i32>} : memref<16x128xf32, #tpu.memory_space<vmem>>, vector<16x128xf32>,
    } else {
    }
    %c0 = arith.constant 0 : index
    %c0_1 = arith.constant 0 : index
    %3 = vector.load %arg6[%c0, %c0_1] : memref<16x128xf32, #tpu.memory_space<vmem>>, vector<16x128xf32>
    %c0_2 = arith.constant 0 : index
    %c0_3 = arith.constant 0 : index
    %4 = vector.load %arg3[%c0_2, %c0_3] : memref<16x128xf32, #tpu.memory_space<vmem>>, vector<16x1xf32>
    %c0_4 = arith.constant 0 : index
    %c0_5 = arith.constant 0 : index
    %5 = vector.load %arg4[%c0_4, %c0_5] : memref<128x128xf32, #tpu.memory_space<vmem>>, vector<1x128xf32>
    %6 = vector.broadcast %4 : vector<16x1xf32> to vector<16x128xf32>
    %7 = vector.broadcast %5 : vector<1x128xf32> to vector<16x128xf32>
    %8 = arith.addf %6, %7 : vector<16x128xf32>
    %9 = arith.maximumf %3, %8 : vector<16x128xf32>
    %c0_6 = arith.constant 0 : index
    %c1 = arith.constant 1 : index
    %10 = vector.load %arg3[%c0_6, %c1] : memref<16x128xf32, #tpu.memory_space<vmem>>, vector<16x1xf32>
    %c1_7 = arith.constant 1 : index
    %c0_8 = arith.constant 0 : index
    %11 = vector.load %arg4[%c1_7, %c0_8] : memref<128x128xf32, #tpu.memory_space<vmem>>, vector<1x128xf32>
    %12 = vector.broadcast %10 : vector<16x1xf32> to vector<16x128xf32>
    %13 = vector.broadcast %11 : vector<1x128xf32> to vector<16x128xf32>
    %14 = arith.addf %12, %13 : vector<16x128xf32>
    %15 = arith.maximumf %9, %14 : vector<16x128xf32>
    %c0_9 = arith.constant 0 : index
    %c2 = arith.constant 2 : index
    %16 = vector.load %arg3[%c0_9, %c2] : memref<16x128xf32, #tpu.memory_space<vmem>>, vector<16x1xf32>
    %c2_10 = arith.constant 2 : index
    %c0_11 = arith.constant 0 : index
    %17 = vector.load %arg4[%c2_10, %c0_11] : memref<128x128xf32, #tpu.memory_space<vmem>>, vector<1x128xf32>
    %18 = vector.broadcast %16 : vector<16x1xf32> to vector<16x128xf32>
    %19 = vector.broadcast %17 : vector<1x128xf32> to vector<16x128xf32>
    %20 = arith.addf %18, %19 : vector<16x128xf32>
    %21 = arith.maximumf %15, %20 : vector<16x128xf32>
    %c0_12 = arith.constant 0 : index
    %c3 = arith.constant 3 : index
    %22 = vector.load %arg3[%c0_12, %c3] : memref<16x128xf32, #tpu.memory_space<vmem>>, vector<16x1xf32>
    %c3_13 = arith.constant 3 : index
    %c0_14 = arith.constant 0 : index
    %23 = vector.load %arg4[%c3_13, %c0_14] : memref<128x128xf32, #tpu.memory_space<vmem>>, vector<1x128xf32>
    %24 = vector.broadcast %22 : vector<16x1xf32> to vector<16x128xf32>
    %25 = vector.broadcast %23 : vector<1x128xf32> to vector<16x128xf32>
    %26 = arith.addf %24, %25 : vector<16x128xf32>
    %27 = arith.maximumf %21, %26 : vector<16x128xf32>
    %c0_15 = arith.constant 0 : index
    %c4 = arith.constant 4 : index
    %28 = vector.load %arg3[%c0_15, %c4] : memref<16x128xf32, #tpu.memory_space<vmem>>, vector<16x1xf32>
    %c4_16 = arith.constant 4 : index
    %c0_17 = arith.constant 0 : index
    %29 = vector.load %arg4[%c4_16, %c0_17] : memref<128x128xf32, #tpu.memory_space<vmem>>, vector<1x128xf32>
    %30 = vector.broadcast %28 : vector<16x1xf32> to vector<16x128xf32>
    %31 = vector.broadcast %29 : vector<1x128xf32> to vector<16x128xf32>
    %32 = arith.addf %30, %31 : vector<16x128xf32>
    %33 = arith.maximumf %27, %32 : vector<16x128xf32>
    %c0_18 = arith.constant 0 : index
    %c5 = arith.constant 5 : index
    %34 = vector.load %arg3[%c0_18, %c5] : memref<16x128xf32, #tpu.memory_space<vmem>>, vector<16x1xf32>
    %c5_19 = arith.constant 5 : index
    %c0_20 = arith.constant 0 : index
    %35 = vector.load %arg4[%c5_19, %c0_20] : memref<128x128xf32, #tpu.memory_space<vmem>>, vector<1x128xf32>
    %36 = vector.broadcast %34 : vector<16x1xf32> to vector<16x128xf32>
    %37 = vector.broadcast %35 : vector<1x128xf32> to vector<16x128xf32>
    %38 = arith.addf %36, %37 : vector<16x128xf32>
    %39 = arith.maximumf %33, %38 : vector<16x128xf32>
    %c0_21 = arith.constant 0 : index
    %c6 = arith.constant 6 : index
    %40 = vector.load %arg3[%c0_21, %c6] : memref<16x128xf32, #tpu.memory_space<vmem>>, vector<16x1xf32>
    %c6_22 = arith.constant 6 : index
    %c0_23 = arith.constant 0 : index
    %41 = vector.load %arg4[%c6_22, %c0_23] : memref<128x128xf32, #tpu.memory_space<vmem>>, vector<1x128xf32>
    %42 = vector.broadcast %40 : vector<16x1xf32> to vector<16x128xf32>
    %43 = vector.broadcast %41 : vector<1x128xf32> to vector<16x128xf32>
    %44 = arith.addf %42, %43 : vector<16x128xf32>
    %45 = arith.maximumf %39, %44 : vector<16x128xf32>
    %c0_24 = arith.constant 0 : index
    %c7 = arith.constant 7 : index
    %46 = vector.load %arg3[%c0_24, %c7] : memref<16x128xf32, #tpu.memory_space<vmem>>, vector<16x1xf32>
    %c7_25 = arith.constant 7 : index
    %c0_26 = arith.constant 0 : index
    %47 = vector.load %arg4[%c7_25, %c0_26] : memref<128x128xf32, #tpu.memory_space<vmem>>, vector<1x128xf32>
    %48 = vector.broadcast %46 : vector<16x1xf32> to vector<16x128xf32>
    %49 = vector.broadcast %47 : vector<1x128xf32> to vector<16x128xf32>
    %50 = arith.addf %48, %49 : vector<16x128xf32>
    %51 = arith.maximumf %45, %50 : vector<16x128xf32>
    %c0_27 = arith.constant 0 : index
    %c8 = arith.constant 8 : index
    %52 = vector.load %arg3[%c0_27, %c8] : memref<16x128xf32, #tpu.memory_space<vmem>>, vector<16x1xf32>
    %c8_28 = arith.constant 8 : index
    %c0_29 = arith.constant 0 : index
    %53 = vector.load %arg4[%c8_28, %c0_29] : memref<128x128xf32, #tpu.memory_space<vmem>>, vector<1x128xf32>
    %54 = vector.broadcast %52 : vector<16x1xf32> to vector<16x128xf32>
    %55 = vector.broadcast %53 : vector<1x128xf32> to vector<16x128xf32>
    %56 = arith.addf %54, %55 : vector<16x128xf32>
    %57 = arith.maximumf %51, %56 : vector<16x128xf32>
    %c0_30 = arith.constant 0 : index
    %c9 = arith.constant 9 : index
    %58 = vector.load %arg3[%c0_30, %c9] : memref<16x128xf32, #tpu.memory_space<vmem>>, vector<16x1xf32>
    %c9_31 = arith.constant 9 : index
    %c0_32 = arith.constant 0 : index
    %59 = vector.load %arg4[%c9_31, %c0_32] : memref<128x128xf32, #tpu.memory_space<vmem>>, vector<1x128xf32>
    %60 = vector.broadcast %58 : vector<16x1xf32> to vector<16x128xf32>
    %61 = vector.broadcast %59 : vector<1x128xf32> to vector<16x128xf32>
    %62 = arith.addf %60, %61 : vector<16x128xf32>
    %63 = arith.maximumf %57, %62 : vector<16x128xf32>
    %c0_33 = arith.constant 0 : index
    %c10 = arith.constant 10 : index
    %64 = vector.load %arg3[%c0_33, %c10] : memref<16x128xf32, #tpu.memory_space<vmem>>, vector<16x1xf32>
    %c10_34 = arith.constant 10 : index
    %c0_35 = arith.constant 0 : index
    %65 = vector.load %arg4[%c10_34, %c0_35] : memref<128x128xf32, #tpu.memory_space<vmem>>, vector<1x128xf32>
    %66 = vector.broadcast %64 : vector<16x1xf32> to vector<16x128xf32>
    %67 = vector.broadcast %65 : vector<1x128xf32> to vector<16x128xf32>
    %68 = arith.addf %66, %67 : vector<16x128xf32>
    %69 = arith.maximumf %63, %68 : vector<16x128xf32>
    %c0_36 = arith.constant 0 : index
    %c11 = arith.constant 11 : index
    %70 = vector.load %arg3[%c0_36, %c11] : memref<16x128xf32, #tpu.memory_space<vmem>>, vector<16x1xf32>
    %c11_37 = arith.constant 11 : index
    %c0_38 = arith.constant 0 : index
    %71 = vector.load %arg4[%c11_37, %c0_38] : memref<128x128xf32, #tpu.memory_space<vmem>>, vector<1x128xf32>
    %72 = vector.broadcast %70 : vector<16x1xf32> to vector<16x128xf32>
    %73 = vector.broadcast %71 : vector<1x128xf32> to vector<16x128xf32>
    %74 = arith.addf %72, %73 : vector<16x128xf32>
    %75 = arith.maximumf %69, %74 : vector<16x128xf32>
    %c0_39 = arith.constant 0 : index
    %c12 = arith.constant 12 : index
    %76 = vector.load %arg3[%c0_39, %c12] : memref<16x128xf32, #tpu.memory_space<vmem>>, vector<16x1xf32>
    %c12_40 = arith.constant 12 : index
    %c0_41 = arith.constant 0 : index
    %77 = vector.load %arg4[%c12_40, %c0_41] : memref<128x128xf32, #tpu.memory_space<vmem>>, vector<1x128xf32>
    %78 = vector.broadcast %76 : vector<16x1xf32> to vector<16x128xf32>
    %79 = vector.broadcast %77 : vector<1x128xf32> to vector<16x128xf32>
    %80 = arith.addf %78, %79 : vector<16x128xf32>
    %81 = arith.maximumf %75, %80 : vector<16x128xf32>
    %c0_42 = arith.constant 0 : index
    %c13 = arith.constant 13 : index
    %82 = vector.load %arg3[%c0_42, %c13] : memref<16x128xf32, #tpu.memory_space<vmem>>, vector<16x1xf32>
    %c13_43 = arith.constant 13 : index
    %c0_44 = arith.constant 0 : index
    %83 = vector.load %arg4[%c13_43, %c0_44] : memref<128x128xf32, #tpu.memory_space<vmem>>, vector<1x128xf32>
    %84 = vector.broadcast %82 : vector<16x1xf32> to vector<16x128xf32>
    %85 = vector.broadcast %83 : vector<1x128xf32> to vector<16x128xf32>
    %86 = arith.addf %84, %85 : vector<16x128xf32>
    %87 = arith.maximumf %81, %86 : vector<16x128xf32>
    %c0_45 = arith.constant 0 : index
    %c14 = arith.constant 14 : index
    %88 = vector.load %arg3[%c0_45, %c14] : memref<16x128xf32, #tpu.memory_space<vmem>>, vector<16x1xf32>
    %c14_46 = arith.constant 14 : index
    %c0_47 = arith.constant 0 : index
    %89 = vector.load %arg4[%c14_46, %c0_47] : memref<128x128xf32, #tpu.memory_space<vmem>>, vector<1x128xf32>
    %90 = vector.broadcast %88 : vector<16x1xf32> to vector<16x128xf32>
    %91 = vector.broadcast %89 : vector<1x128xf32> to vector<16x128xf32>
    %92 = arith.addf %90, %91 : vector<16x128xf32>
    %93 = arith.maximumf %87, %92 : vector<16x128xf32>
    %c0_48 = arith.constant 0 : index
    %c15 = arith.constant 15 : index
    %94 = vector.load %arg3[%c0_48, %c15] : memref<16x128xf32, #tpu.memory_space<vmem>>, vector<16x1xf32>
    %c15_49 = arith.constant 15 : index
    %c0_50 = arith.constant 0 : index
    %95 = vector.load %arg4[%c15_49, %c0_50] : memref<128x128xf32, #tpu.memory_space<vmem>>, vector<1x128xf32>
    %96 = vector.broadcast %94 : vector<16x1xf32> to vector<16x128xf32>
    %97 = vector.broadcast %95 : vector<1x128xf32> to vector<16x128xf32>
    %98 = arith.addf %96, %97 : vector<16x128xf32>
    %99 = arith.maximumf %93, %98 : vector<16x128xf32>
    %c0_51 = arith.constant 0 : index
    %c16 = arith.constant 16 : index
    %100 = vector.load %arg3[%c0_51, %c16] : memref<16x128xf32, #tpu.memory_space<vmem>>, vector<16x1xf32>
    %c16_52 = arith.constant 16 : index
    %c0_53 = arith.constant 0 : index
    %101 = vector.load %arg4[%c16_52, %c0_53] : memref<128x128xf32, #tpu.memory_space<vmem>>, vector<1x128xf32>
    %102 = vector.broadcast %100 : vector<16x1xf32> to vector<16x128xf32>
    %103 = vector.broadcast %101 : vector<1x128xf32> to vector<16x128xf32>
    %104 = arith.addf %102, %103 : vector<16x128xf32>
    %105 = arith.maximumf %99, %104 : vector<16x128xf32>
    %c0_54 = arith.constant 0 : index
    %c17 = arith.constant 17 : index
    %106 = vector.load %arg3[%c0_54, %c17] : memref<16x128xf32, #tpu.memory_space<vmem>>, vector<16x1xf32>
    %c17_55 = arith.constant 17 : index
    %c0_56 = arith.constant 0 : index
    %107 = vector.load %arg4[%c17_55, %c0_56] : memref<128x128xf32, #tpu.memory_space<vmem>>, vector<1x128xf32>
    %108 = vector.broadcast %106 : vector<16x1xf32> to vector<16x128xf32>
    %109 = vector.broadcast %107 : vector<1x128xf32> to vector<16x128xf32>
    %110 = arith.addf %108, %109 : vector<16x128xf32>
    %111 = arith.maximumf %105, %110 : vector<16x128xf32>
    %c0_57 = arith.constant 0 : index
    %c18 = arith.constant 18 : index
    %112 = vector.load %arg3[%c0_57, %c18] : memref<16x128xf32, #tpu.memory_space<vmem>>, vector<16x1xf32>
    %c18_58 = arith.constant 18 : index
    %c0_59 = arith.constant 0 : index
    %113 = vector.load %arg4[%c18_58, %c0_59] : memref<128x128xf32, #tpu.memory_space<vmem>>, vector<1x128xf32>
    %114 = vector.broadcast %112 : vector<16x1xf32> to vector<16x128xf32>
    %115 = vector.broadcast %113 : vector<1x128xf32> to vector<16x128xf32>
    %116 = arith.addf %114, %115 : vector<16x128xf32>
    %117 = arith.maximumf %111, %116 : vector<16x128xf32>
    %c0_60 = arith.constant 0 : index
    %c19 = arith.constant 19 : index
    %118 = vector.load %arg3[%c0_60, %c19] : memref<16x128xf32, #tpu.memory_space<vmem>>, vector<16x1xf32>
    %c19_61 = arith.constant 19 : index
    %c0_62 = arith.constant 0 : index
    %119 = vector.load %arg4[%c19_61, %c0_62] : memref<128x128xf32, #tpu.memory_space<vmem>>, vector<1x128xf32>
    %120 = vector.broadcast %118 : vector<16x1xf32> to vector<16x128xf32>
    %121 = vector.broadcast %119 : vector<1x128xf32> to vector<16x128xf32>
    %122 = arith.addf %120, %121 : vector<16x128xf32>
    %123 = arith.maximumf %117, %122 : vector<16x128xf32>
    %c0_63 = arith.constant 0 : index
    %c20 = arith.constant 20 : index
    %124 = vector.load %arg3[%c0_63, %c20] : memref<16x128xf32, #tpu.memory_space<vmem>>, vector<16x1xf32>
    %c20_64 = arith.constant 20 : index
    %c0_65 = arith.constant 0 : index
    %125 = vector.load %arg4[%c20_64, %c0_65] : memref<128x128xf32, #tpu.memory_space<vmem>>, vector<1x128xf32>
    %126 = vector.broadcast %124 : vector<16x1xf32> to vector<16x128xf32>
    %127 = vector.broadcast %125 : vector<1x128xf32> to vector<16x128xf32>
    %128 = arith.addf %126, %127 : vector<16x128xf32>
    %129 = arith.maximumf %123, %128 : vector<16x128xf32>
    %c0_66 = arith.constant 0 : index
    %c21 = arith.constant 21 : index
    %130 = vector.load %arg3[%c0_66, %c21] : memref<16x128xf32, #tpu.memory_space<vmem>>, vector<16x1xf32>
    %c21_67 = arith.constant 21 : index
    %c0_68 = arith.constant 0 : index
    %131 = vector.load %arg4[%c21_67, %c0_68] : memref<128x128xf32, #tpu.memory_space<vmem>>, vector<1x128xf32>
    %132 = vector.broadcast %130 : vector<16x1xf32> to vector<16x128xf32>
    %133 = vector.broadcast %131 : vector<1x128xf32> to vector<16x128xf32>
    %134 = arith.addf %132, %133 : vector<16x128xf32>
    %135 = arith.maximumf %129, %134 : vector<16x128xf32>
    %c0_69 = arith.constant 0 : index
    %c22 = arith.constant 22 : index
    %136 = vector.load %arg3[%c0_69, %c22] : memref<16x128xf32, #tpu.memory_space<vmem>>, vector<16x1xf32>
    %c22_70 = arith.constant 22 : index
    %c0_71 = arith.constant 0 : index
    %137 = vector.load %arg4[%c22_70, %c0_71] : memref<128x128xf32, #tpu.memory_space<vmem>>, vector<1x128xf32>
    %138 = vector.broadcast %136 : vector<16x1xf32> to vector<16x128xf32>
    %139 = vector.broadcast %137 : vector<1x128xf32> to vector<16x128xf32>
    %140 = arith.addf %138, %139 : vector<16x128xf32>
    %141 = arith.maximumf %135, %140 : vector<16x128xf32>
    %c0_72 = arith.constant 0 : index
    %c23 = arith.constant 23 : index
    %142 = vector.load %arg3[%c0_72, %c23] : memref<16x128xf32, #tpu.memory_space<vmem>>, vector<16x1xf32>
    %c23_73 = arith.constant 23 : index
    %c0_74 = arith.constant 0 : index
    %143 = vector.load %arg4[%c23_73, %c0_74] : memref<128x128xf32, #tpu.memory_space<vmem>>, vector<1x128xf32>
    %144 = vector.broadcast %142 : vector<16x1xf32> to vector<16x128xf32>
    %145 = vector.broadcast %143 : vector<1x128xf32> to vector<16x128xf32>
    %146 = arith.addf %144, %145 : vector<16x128xf32>
    %147 = arith.maximumf %141, %146 : vector<16x128xf32>
    %c0_75 = arith.constant 0 : index
    %c24 = arith.constant 24 : index
    %148 = vector.load %arg3[%c0_75, %c24] : memref<16x128xf32, #tpu.memory_space<vmem>>, vector<16x1xf32>
    %c24_76 = arith.constant 24 : index
    %c0_77 = arith.constant 0 : index
    %149 = vector.load %arg4[%c24_76, %c0_77] : memref<128x128xf32, #tpu.memory_space<vmem>>, vector<1x128xf32>
    %150 = vector.broadcast %148 : vector<16x1xf32> to vector<16x128xf32>
    %151 = vector.broadcast %149 : vector<1x128xf32> to vector<16x128xf32>
    %152 = arith.addf %150, %151 : vector<16x128xf32>
    %153 = arith.maximumf %147, %152 : vector<16x128xf32>
    %c0_78 = arith.constant 0 : index
    %c25 = arith.constant 25 : index
    %154 = vector.load %arg3[%c0_78, %c25] : memref<16x128xf32, #tpu.memory_space<vmem>>, vector<16x1xf32>
    %c25_79 = arith.constant 25 : index
    %c0_80 = arith.constant 0 : index
    %155 = vector.load %arg4[%c25_79, %c0_80] : memref<128x128xf32, #tpu.memory_space<vmem>>, vector<1x128xf32>
    %156 = vector.broadcast %154 : vector<16x1xf32> to vector<16x128xf32>
    %157 = vector.broadcast %155 : vector<1x128xf32> to vector<16x128xf32>
    %158 = arith.addf %156, %157 : vector<16x128xf32>
    %159 = arith.maximumf %153, %158 : vector<16x128xf32>
    %c0_81 = arith.constant 0 : index
    %c26 = arith.constant 26 : index
    %160 = vector.load %arg3[%c0_81, %c26] : memref<16x128xf32, #tpu.memory_space<vmem>>, vector<16x1xf32>
    %c26_82 = arith.constant 26 : index
    %c0_83 = arith.constant 0 : index
    %161 = vector.load %arg4[%c26_82, %c0_83] : memref<128x128xf32, #tpu.memory_space<vmem>>, vector<1x128xf32>
    %162 = vector.broadcast %160 : vector<16x1xf32> to vector<16x128xf32>
    %163 = vector.broadcast %161 : vector<1x128xf32> to vector<16x128xf32>
    %164 = arith.addf %162, %163 : vector<16x128xf32>
    %165 = arith.maximumf %159, %164 : vector<16x128xf32>
    %c0_84 = arith.constant 0 : index
    %c27 = arith.constant 27 : index
    %166 = vector.load %arg3[%c0_84, %c27] : memref<16x128xf32, #tpu.memory_space<vmem>>, vector<16x1xf32>
    %c27_85 = arith.constant 27 : index
    %c0_86 = arith.constant 0 : index
    %167 = vector.load %arg4[%c27_85, %c0_86] : memref<128x128xf32, #tpu.memory_space<vmem>>, vector<1x128xf32>
    %168 = vector.broadcast %166 : vector<16x1xf32> to vector<16x128xf32>
    %169 = vector.broadcast %167 : vector<1x128xf32> to vector<16x128xf32>
    %170 = arith.addf %168, %169 : vector<16x128xf32>
    %171 = arith.maximumf %165, %170 : vector<16x128xf32>
    %c0_87 = arith.constant 0 : index
    %c28 = arith.constant 28 : index
    %172 = vector.load %arg3[%c0_87, %c28] : memref<16x128xf32, #tpu.memory_space<vmem>>, vector<16x1xf32>
    %c28_88 = arith.constant 28 : index
    %c0_89 = arith.constant 0 : index
    %173 = vector.load %arg4[%c28_88, %c0_89] : memref<128x128xf32, #tpu.memory_space<vmem>>, vector<1x128xf32>
    %174 = vector.broadcast %172 : vector<16x1xf32> to vector<16x128xf32>
    %175 = vector.broadcast %173 : vector<1x128xf32> to vector<16x128xf32>
    %176 = arith.addf %174, %175 : vector<16x128xf32>
    %177 = arith.maximumf %171, %176 : vector<16x128xf32>
    %c0_90 = arith.constant 0 : index
    %c29 = arith.constant 29 : index
    %178 = vector.load %arg3[%c0_90, %c29] : memref<16x128xf32, #tpu.memory_space<vmem>>, vector<16x1xf32>
    %c29_91 = arith.constant 29 : index
    %c0_92 = arith.constant 0 : index
    %179 = vector.load %arg4[%c29_91, %c0_92] : memref<128x128xf32, #tpu.memory_space<vmem>>, vector<1x128xf32>
    %180 = vector.broadcast %178 : vector<16x1xf32> to vector<16x128xf32>
    %181 = vector.broadcast %179 : vector<1x128xf32> to vector<16x128xf32>
    %182 = arith.addf %180, %181 : vector<16x128xf32>
    %183 = arith.maximumf %177, %182 : vector<16x128xf32>
    %c0_93 = arith.constant 0 : index
    %c30 = arith.constant 30 : index
    %184 = vector.load %arg3[%c0_93, %c30] : memref<16x128xf32, #tpu.memory_space<vmem>>, vector<16x1xf32>
    %c30_94 = arith.constant 30 : index
    %c0_95 = arith.constant 0 : index
    %185 = vector.load %arg4[%c30_94, %c0_95] : memref<128x128xf32, #tpu.memory_space<vmem>>, vector<1x128xf32>
    %186 = vector.broadcast %184 : vector<16x1xf32> to vector<16x128xf32>
    %187 = vector.broadcast %185 : vector<1x128xf32> to vector<16x128xf32>
    %188 = arith.addf %186, %187 : vector<16x128xf32>
    %189 = arith.maximumf %183, %188 : vector<16x128xf32>
    %c0_96 = arith.constant 0 : index
    %c31 = arith.constant 31 : index
    %190 = vector.load %arg3[%c0_96, %c31] : memref<16x128xf32, #tpu.memory_space<vmem>>, vector<16x1xf32>
    %c31_97 = arith.constant 31 : index
    %c0_98 = arith.constant 0 : index
    %191 = vector.load %arg4[%c31_97, %c0_98] : memref<128x128xf32, #tpu.memory_space<vmem>>, vector<1x128xf32>
    %192 = vector.broadcast %190 : vector<16x1xf32> to vector<16x128xf32>
    %193 = vector.broadcast %191 : vector<1x128xf32> to vector<16x128xf32>
    %194 = arith.addf %192, %193 : vector<16x128xf32>
    %195 = arith.maximumf %189, %194 : vector<16x128xf32>
    %c0_99 = arith.constant 0 : index
    %c32 = arith.constant 32 : index
    %196 = vector.load %arg3[%c0_99, %c32] : memref<16x128xf32, #tpu.memory_space<vmem>>, vector<16x1xf32>
    %c32_100 = arith.constant 32 : index
    %c0_101 = arith.constant 0 : index
    %197 = vector.load %arg4[%c32_100, %c0_101] : memref<128x128xf32, #tpu.memory_space<vmem>>, vector<1x128xf32>
    %198 = vector.broadcast %196 : vector<16x1xf32> to vector<16x128xf32>
    %199 = vector.broadcast %197 : vector<1x128xf32> to vector<16x128xf32>
    %200 = arith.addf %198, %199 : vector<16x128xf32>
    %201 = arith.maximumf %195, %200 : vector<16x128xf32>
    %c0_102 = arith.constant 0 : index
    %c33 = arith.constant 33 : index
    %202 = vector.load %arg3[%c0_102, %c33] : memref<16x128xf32, #tpu.memory_space<vmem>>, vector<16x1xf32>
    %c33_103 = arith.constant 33 : index
    %c0_104 = arith.constant 0 : index
    %203 = vector.load %arg4[%c33_103, %c0_104] : memref<128x128xf32, #tpu.memory_space<vmem>>, vector<1x128xf32>
    %204 = vector.broadcast %202 : vector<16x1xf32> to vector<16x128xf32>
    %205 = vector.broadcast %203 : vector<1x128xf32> to vector<16x128xf32>
    %206 = arith.addf %204, %205 : vector<16x128xf32>
    %207 = arith.maximumf %201, %206 : vector<16x128xf32>
    %c0_105 = arith.constant 0 : index
    %c34 = arith.constant 34 : index
    %208 = vector.load %arg3[%c0_105, %c34] : memref<16x128xf32, #tpu.memory_space<vmem>>, vector<16x1xf32>
    %c34_106 = arith.constant 34 : index
    %c0_107 = arith.constant 0 : index
    %209 = vector.load %arg4[%c34_106, %c0_107] : memref<128x128xf32, #tpu.memory_space<vmem>>, vector<1x128xf32>
    %210 = vector.broadcast %208 : vector<16x1xf32> to vector<16x128xf32>
    %211 = vector.broadcast %209 : vector<1x128xf32> to vector<16x128xf32>
    %212 = arith.addf %210, %211 : vector<16x128xf32>
    %213 = arith.maximumf %207, %212 : vector<16x128xf32>
    %c0_108 = arith.constant 0 : index
    %c35 = arith.constant 35 : index
    %214 = vector.load %arg3[%c0_108, %c35] : memref<16x128xf32, #tpu.memory_space<vmem>>, vector<16x1xf32>
    %c35_109 = arith.constant 35 : index
    %c0_110 = arith.constant 0 : index
    %215 = vector.load %arg4[%c35_109, %c0_110] : memref<128x128xf32, #tpu.memory_space<vmem>>, vector<1x128xf32>
    %216 = vector.broadcast %214 : vector<16x1xf32> to vector<16x128xf32>
    %217 = vector.broadcast %215 : vector<1x128xf32> to vector<16x128xf32>
    %218 = arith.addf %216, %217 : vector<16x128xf32>
    %219 = arith.maximumf %213, %218 : vector<16x128xf32>
    %c0_111 = arith.constant 0 : index
    %c36 = arith.constant 36 : index
    %220 = vector.load %arg3[%c0_111, %c36] : memref<16x128xf32, #tpu.memory_space<vmem>>, vector<16x1xf32>
    %c36_112 = arith.constant 36 : index
    %c0_113 = arith.constant 0 : index
    %221 = vector.load %arg4[%c36_112, %c0_113] : memref<128x128xf32, #tpu.memory_space<vmem>>, vector<1x128xf32>
    %222 = vector.broadcast %220 : vector<16x1xf32> to vector<16x128xf32>
    %223 = vector.broadcast %221 : vector<1x128xf32> to vector<16x128xf32>
    %224 = arith.addf %222, %223 : vector<16x128xf32>
    %225 = arith.maximumf %219, %224 : vector<16x128xf32>
    %c0_114 = arith.constant 0 : index
    %c37 = arith.constant 37 : index
    %226 = vector.load %arg3[%c0_114, %c37] : memref<16x128xf32, #tpu.memory_space<vmem>>, vector<16x1xf32>
    %c37_115 = arith.constant 37 : index
    %c0_116 = arith.constant 0 : index
    %227 = vector.load %arg4[%c37_115, %c0_116] : memref<128x128xf32, #tpu.memory_space<vmem>>, vector<1x128xf32>
    %228 = vector.broadcast %226 : vector<16x1xf32> to vector<16x128xf32>
    %229 = vector.broadcast %227 : vector<1x128xf32> to vector<16x128xf32>
    %230 = arith.addf %228, %229 : vector<16x128xf32>
    %231 = arith.maximumf %225, %230 : vector<16x128xf32>
    %c0_117 = arith.constant 0 : index
    %c38 = arith.constant 38 : index
    %232 = vector.load %arg3[%c0_117, %c38] : memref<16x128xf32, #tpu.memory_space<vmem>>, vector<16x1xf32>
    %c38_118 = arith.constant 38 : index
    %c0_119 = arith.constant 0 : index
    %233 = vector.load %arg4[%c38_118, %c0_119] : memref<128x128xf32, #tpu.memory_space<vmem>>, vector<1x128xf32>
    %234 = vector.broadcast %232 : vector<16x1xf32> to vector<16x128xf32>
    %235 = vector.broadcast %233 : vector<1x128xf32> to vector<16x128xf32>
    %236 = arith.addf %234, %235 : vector<16x128xf32>
    %237 = arith.maximumf %231, %236 : vector<16x128xf32>
    %c0_120 = arith.constant 0 : index
    %c39 = arith.constant 39 : index
    %238 = vector.load %arg3[%c0_120, %c39] : memref<16x128xf32, #tpu.memory_space<vmem>>, vector<16x1xf32>
    %c39_121 = arith.constant 39 : index
    %c0_122 = arith.constant 0 : index
    %239 = vector.load %arg4[%c39_121, %c0_122] : memref<128x128xf32, #tpu.memory_space<vmem>>, vector<1x128xf32>
    %240 = vector.broadcast %238 : vector<16x1xf32> to vector<16x128xf32>
    %241 = vector.broadcast %239 : vector<1x128xf32> to vector<16x128xf32>
    %242 = arith.addf %240, %241 : vector<16x128xf32>
    %243 = arith.maximumf %237, %242 : vector<16x128xf32>
    %c0_123 = arith.constant 0 : index
    %c40 = arith.constant 40 : index
    %244 = vector.load %arg3[%c0_123, %c40] : memref<16x128xf32, #tpu.memory_space<vmem>>, vector<16x1xf32>
    %c40_124 = arith.constant 40 : index
    %c0_125 = arith.constant 0 : index
    %245 = vector.load %arg4[%c40_124, %c0_125] : memref<128x128xf32, #tpu.memory_space<vmem>>, vector<1x128xf32>
    %246 = vector.broadcast %244 : vector<16x1xf32> to vector<16x128xf32>
    %247 = vector.broadcast %245 : vector<1x128xf32> to vector<16x128xf32>
    %248 = arith.addf %246, %247 : vector<16x128xf32>
    %249 = arith.maximumf %243, %248 : vector<16x128xf32>
    %c0_126 = arith.constant 0 : index
    %c41 = arith.constant 41 : index
    %250 = vector.load %arg3[%c0_126, %c41] : memref<16x128xf32, #tpu.memory_space<vmem>>, vector<16x1xf32>
    %c41_127 = arith.constant 41 : index
    %c0_128 = arith.constant 0 : index
    %251 = vector.load %arg4[%c41_127, %c0_128] : memref<128x128xf32, #tpu.memory_space<vmem>>, vector<1x128xf32>
    %252 = vector.broadcast %250 : vector<16x1xf32> to vector<16x128xf32>
    %253 = vector.broadcast %251 : vector<1x128xf32> to vector<16x128xf32>
    %254 = arith.addf %252, %253 : vector<16x128xf32>
    %255 = arith.maximumf %249, %254 : vector<16x128xf32>
    %c0_129 = arith.constant 0 : index
    %c42 = arith.constant 42 : index
    %256 = vector.load %arg3[%c0_129, %c42] : memref<16x128xf32, #tpu.memory_space<vmem>>, vector<16x1xf32>
    %c42_130 = arith.constant 42 : index
    %c0_131 = arith.constant 0 : index
    %257 = vector.load %arg4[%c42_130, %c0_131] : memref<128x128xf32, #tpu.memory_space<vmem>>, vector<1x128xf32>
    %258 = vector.broadcast %256 : vector<16x1xf32> to vector<16x128xf32>
    %259 = vector.broadcast %257 : vector<1x128xf32> to vector<16x128xf32>
    %260 = arith.addf %258, %259 : vector<16x128xf32>
    %261 = arith.maximumf %255, %260 : vector<16x128xf32>
    %c0_132 = arith.constant 0 : index
    %c43 = arith.constant 43 : index
    %262 = vector.load %arg3[%c0_132, %c43] : memref<16x128xf32, #tpu.memory_space<vmem>>, vector<16x1xf32>
    %c43_133 = arith.constant 43 : index
    %c0_134 = arith.constant 0 : index
    %263 = vector.load %arg4[%c43_133, %c0_134] : memref<128x128xf32, #tpu.memory_space<vmem>>, vector<1x128xf32>
    %264 = vector.broadcast %262 : vector<16x1xf32> to vector<16x128xf32>
    %265 = vector.broadcast %263 : vector<1x128xf32> to vector<16x128xf32>
    %266 = arith.addf %264, %265 : vector<16x128xf32>
    %267 = arith.maximumf %261, %266 : vector<16x128xf32>
    %c0_135 = arith.constant 0 : index
    %c44 = arith.constant 44 : index
    %268 = vector.load %arg3[%c0_135, %c44] : memref<16x128xf32, #tpu.memory_space<vmem>>, vector<16x1xf32>
    %c44_136 = arith.constant 44 : index
    %c0_137 = arith.constant 0 : index
    %269 = vector.load %arg4[%c44_136, %c0_137] : memref<128x128xf32, #tpu.memory_space<vmem>>, vector<1x128xf32>
    %270 = vector.broadcast %268 : vector<16x1xf32> to vector<16x128xf32>
    %271 = vector.broadcast %269 : vector<1x128xf32> to vector<16x128xf32>
    %272 = arith.addf %270, %271 : vector<16x128xf32>
    %273 = arith.maximumf %267, %272 : vector<16x128xf32>
    %c0_138 = arith.constant 0 : index
    %c45 = arith.constant 45 : index
    %274 = vector.load %arg3[%c0_138, %c45] : memref<16x128xf32, #tpu.memory_space<vmem>>, vector<16x1xf32>
    %c45_139 = arith.constant 45 : index
    %c0_140 = arith.constant 0 : index
    %275 = vector.load %arg4[%c45_139, %c0_140] : memref<128x128xf32, #tpu.memory_space<vmem>>, vector<1x128xf32>
    %276 = vector.broadcast %274 : vector<16x1xf32> to vector<16x128xf32>
    %277 = vector.broadcast %275 : vector<1x128xf32> to vector<16x128xf32>
    %278 = arith.addf %276, %277 : vector<16x128xf32>
    %279 = arith.maximumf %273, %278 : vector<16x128xf32>
    %c0_141 = arith.constant 0 : index
    %c46 = arith.constant 46 : index
    %280 = vector.load %arg3[%c0_141, %c46] : memref<16x128xf32, #tpu.memory_space<vmem>>, vector<16x1xf32>
    %c46_142 = arith.constant 46 : index
    %c0_143 = arith.constant 0 : index
    %281 = vector.load %arg4[%c46_142, %c0_143] : memref<128x128xf32, #tpu.memory_space<vmem>>, vector<1x128xf32>
    %282 = vector.broadcast %280 : vector<16x1xf32> to vector<16x128xf32>
    %283 = vector.broadcast %281 : vector<1x128xf32> to vector<16x128xf32>
    %284 = arith.addf %282, %283 : vector<16x128xf32>
    %285 = arith.maximumf %279, %284 : vector<16x128xf32>
    %c0_144 = arith.constant 0 : index
    %c47 = arith.constant 47 : index
    %286 = vector.load %arg3[%c0_144, %c47] : memref<16x128xf32, #tpu.memory_space<vmem>>, vector<16x1xf32>
    %c47_145 = arith.constant 47 : index
    %c0_146 = arith.constant 0 : index
    %287 = vector.load %arg4[%c47_145, %c0_146] : memref<128x128xf32, #tpu.memory_space<vmem>>, vector<1x128xf32>
    %288 = vector.broadcast %286 : vector<16x1xf32> to vector<16x128xf32>
    %289 = vector.broadcast %287 : vector<1x128xf32> to vector<16x128xf32>
    %290 = arith.addf %288, %289 : vector<16x128xf32>
    %291 = arith.maximumf %285, %290 : vector<16x128xf32>
    %c0_147 = arith.constant 0 : index
    %c48 = arith.constant 48 : index
    %292 = vector.load %arg3[%c0_147, %c48] : memref<16x128xf32, #tpu.memory_space<vmem>>, vector<16x1xf32>
    %c48_148 = arith.constant 48 : index
    %c0_149 = arith.constant 0 : index
    %293 = vector.load %arg4[%c48_148, %c0_149] : memref<128x128xf32, #tpu.memory_space<vmem>>, vector<1x128xf32>
    %294 = vector.broadcast %292 : vector<16x1xf32> to vector<16x128xf32>
    %295 = vector.broadcast %293 : vector<1x128xf32> to vector<16x128xf32>
    %296 = arith.addf %294, %295 : vector<16x128xf32>
    %297 = arith.maximumf %291, %296 : vector<16x128xf32>
    %c0_150 = arith.constant 0 : index
    %c49 = arith.constant 49 : index
    %298 = vector.load %arg3[%c0_150, %c49] : memref<16x128xf32, #tpu.memory_space<vmem>>, vector<16x1xf32>
    %c49_151 = arith.constant 49 : index
    %c0_152 = arith.constant 0 : index
    %299 = vector.load %arg4[%c49_151, %c0_152] : memref<128x128xf32, #tpu.memory_space<vmem>>, vector<1x128xf32>
    %300 = vector.broadcast %298 : vector<16x1xf32> to vector<16x128xf32>
    %301 = vector.broadcast %299 : vector<1x128xf32> to vector<16x128xf32>
    %302 = arith.addf %300, %301 : vector<16x128xf32>
    %303 = arith.maximumf %297, %302 : vector<16x128xf32>
    %c0_153 = arith.constant 0 : index
    %c50 = arith.constant 50 : index
    %304 = vector.load %arg3[%c0_153, %c50] : memref<16x128xf32, #tpu.memory_space<vmem>>, vector<16x1xf32>
    %c50_154 = arith.constant 50 : index
    %c0_155 = arith.constant 0 : index
    %305 = vector.load %arg4[%c50_154, %c0_155] : memref<128x128xf32, #tpu.memory_space<vmem>>, vector<1x128xf32>
    %306 = vector.broadcast %304 : vector<16x1xf32> to vector<16x128xf32>
    %307 = vector.broadcast %305 : vector<1x128xf32> to vector<16x128xf32>
    %308 = arith.addf %306, %307 : vector<16x128xf32>
    %309 = arith.maximumf %303, %308 : vector<16x128xf32>
    %c0_156 = arith.constant 0 : index
    %c51 = arith.constant 51 : index
    %310 = vector.load %arg3[%c0_156, %c51] : memref<16x128xf32, #tpu.memory_space<vmem>>, vector<16x1xf32>
    %c51_157 = arith.constant 51 : index
    %c0_158 = arith.constant 0 : index
    %311 = vector.load %arg4[%c51_157, %c0_158] : memref<128x128xf32, #tpu.memory_space<vmem>>, vector<1x128xf32>
    %312 = vector.broadcast %310 : vector<16x1xf32> to vector<16x128xf32>
    %313 = vector.broadcast %311 : vector<1x128xf32> to vector<16x128xf32>
    %314 = arith.addf %312, %313 : vector<16x128xf32>
    %315 = arith.maximumf %309, %314 : vector<16x128xf32>
    %c0_159 = arith.constant 0 : index
    %c52 = arith.constant 52 : index
    %316 = vector.load %arg3[%c0_159, %c52] : memref<16x128xf32, #tpu.memory_space<vmem>>, vector<16x1xf32>
    %c52_160 = arith.constant 52 : index
    %c0_161 = arith.constant 0 : index
    %317 = vector.load %arg4[%c52_160, %c0_161] : memref<128x128xf32, #tpu.memory_space<vmem>>, vector<1x128xf32>
    %318 = vector.broadcast %316 : vector<16x1xf32> to vector<16x128xf32>
    %319 = vector.broadcast %317 : vector<1x128xf32> to vector<16x128xf32>
    %320 = arith.addf %318, %319 : vector<16x128xf32>
    %321 = arith.maximumf %315, %320 : vector<16x128xf32>
    %c0_162 = arith.constant 0 : index
    %c53 = arith.constant 53 : index
    %322 = vector.load %arg3[%c0_162, %c53] : memref<16x128xf32, #tpu.memory_space<vmem>>, vector<16x1xf32>
    %c53_163 = arith.constant 53 : index
    %c0_164 = arith.constant 0 : index
    %323 = vector.load %arg4[%c53_163, %c0_164] : memref<128x128xf32, #tpu.memory_space<vmem>>, vector<1x128xf32>
    %324 = vector.broadcast %322 : vector<16x1xf32> to vector<16x128xf32>
    %325 = vector.broadcast %323 : vector<1x128xf32> to vector<16x128xf32>
    %326 = arith.addf %324, %325 : vector<16x128xf32>
    %327 = arith.maximumf %321, %326 : vector<16x128xf32>
    %c0_165 = arith.constant 0 : index
    %c54 = arith.constant 54 : index
    %328 = vector.load %arg3[%c0_165, %c54] : memref<16x128xf32, #tpu.memory_space<vmem>>, vector<16x1xf32>
    %c54_166 = arith.constant 54 : index
    %c0_167 = arith.constant 0 : index
    %329 = vector.load %arg4[%c54_166, %c0_167] : memref<128x128xf32, #tpu.memory_space<vmem>>, vector<1x128xf32>
    %330 = vector.broadcast %328 : vector<16x1xf32> to vector<16x128xf32>
    %331 = vector.broadcast %329 : vector<1x128xf32> to vector<16x128xf32>
    %332 = arith.addf %330, %331 : vector<16x128xf32>
    %333 = arith.maximumf %327, %332 : vector<16x128xf32>
    %c0_168 = arith.constant 0 : index
    %c55 = arith.constant 55 : index
    %334 = vector.load %arg3[%c0_168, %c55] : memref<16x128xf32, #tpu.memory_space<vmem>>, vector<16x1xf32>
    %c55_169 = arith.constant 55 : index
    %c0_170 = arith.constant 0 : index
    %335 = vector.load %arg4[%c55_169, %c0_170] : memref<128x128xf32, #tpu.memory_space<vmem>>, vector<1x128xf32>
    %336 = vector.broadcast %334 : vector<16x1xf32> to vector<16x128xf32>
    %337 = vector.broadcast %335 : vector<1x128xf32> to vector<16x128xf32>
    %338 = arith.addf %336, %337 : vector<16x128xf32>
    %339 = arith.maximumf %333, %338 : vector<16x128xf32>
    %c0_171 = arith.constant 0 : index
    %c56 = arith.constant 56 : index
    %340 = vector.load %arg3[%c0_171, %c56] : memref<16x128xf32, #tpu.memory_space<vmem>>, vector<16x1xf32>
    %c56_172 = arith.constant 56 : index
    %c0_173 = arith.constant 0 : index
    %341 = vector.load %arg4[%c56_172, %c0_173] : memref<128x128xf32, #tpu.memory_space<vmem>>, vector<1x128xf32>
    %342 = vector.broadcast %340 : vector<16x1xf32> to vector<16x128xf32>
    %343 = vector.broadcast %341 : vector<1x128xf32> to vector<16x128xf32>
    %344 = arith.addf %342, %343 : vector<16x128xf32>
    %345 = arith.maximumf %339, %344 : vector<16x128xf32>
    %c0_174 = arith.constant 0 : index
    %c57 = arith.constant 57 : index
    %346 = vector.load %arg3[%c0_174, %c57] : memref<16x128xf32, #tpu.memory_space<vmem>>, vector<16x1xf32>
    %c57_175 = arith.constant 57 : index
    %c0_176 = arith.constant 0 : index
    %347 = vector.load %arg4[%c57_175, %c0_176] : memref<128x128xf32, #tpu.memory_space<vmem>>, vector<1x128xf32>
    %348 = vector.broadcast %346 : vector<16x1xf32> to vector<16x128xf32>
    %349 = vector.broadcast %347 : vector<1x128xf32> to vector<16x128xf32>
    %350 = arith.addf %348, %349 : vector<16x128xf32>
    %351 = arith.maximumf %345, %350 : vector<16x128xf32>
    %c0_177 = arith.constant 0 : index
    %c58 = arith.constant 58 : index
    %352 = vector.load %arg3[%c0_177, %c58] : memref<16x128xf32, #tpu.memory_space<vmem>>, vector<16x1xf32>
    %c58_178 = arith.constant 58 : index
    %c0_179 = arith.constant 0 : index
    %353 = vector.load %arg4[%c58_178, %c0_179] : memref<128x128xf32, #tpu.memory_space<vmem>>, vector<1x128xf32>
    %354 = vector.broadcast %352 : vector<16x1xf32> to vector<16x128xf32>
    %355 = vector.broadcast %353 : vector<1x128xf32> to vector<16x128xf32>
    %356 = arith.addf %354, %355 : vector<16x128xf32>
    %357 = arith.maximumf %351, %356 : vector<16x128xf32>
    %c0_180 = arith.constant 0 : index
    %c59 = arith.constant 59 : index
    %358 = vector.load %arg3[%c0_180, %c59] : memref<16x128xf32, #tpu.memory_space<vmem>>, vector<16x1xf32>
    %c59_181 = arith.constant 59 : index
    %c0_182 = arith.constant 0 : index
    %359 = vector.load %arg4[%c59_181, %c0_182] : memref<128x128xf32, #tpu.memory_space<vmem>>, vector<1x128xf32>
    %360 = vector.broadcast %358 : vector<16x1xf32> to vector<16x128xf32>
    %361 = vector.broadcast %359 : vector<1x128xf32> to vector<16x128xf32>
    %362 = arith.addf %360, %361 : vector<16x128xf32>
    %363 = arith.maximumf %357, %362 : vector<16x128xf32>
    %c0_183 = arith.constant 0 : index
    %c60 = arith.constant 60 : index
    %364 = vector.load %arg3[%c0_183, %c60] : memref<16x128xf32, #tpu.memory_space<vmem>>, vector<16x1xf32>
    %c60_184 = arith.constant 60 : index
    %c0_185 = arith.constant 0 : index
    %365 = vector.load %arg4[%c60_184, %c0_185] : memref<128x128xf32, #tpu.memory_space<vmem>>, vector<1x128xf32>
    %366 = vector.broadcast %364 : vector<16x1xf32> to vector<16x128xf32>
    %367 = vector.broadcast %365 : vector<1x128xf32> to vector<16x128xf32>
    %368 = arith.addf %366, %367 : vector<16x128xf32>
    %369 = arith.maximumf %363, %368 : vector<16x128xf32>
    %c0_186 = arith.constant 0 : index
    %c61 = arith.constant 61 : index
    %370 = vector.load %arg3[%c0_186, %c61] : memref<16x128xf32, #tpu.memory_space<vmem>>, vector<16x1xf32>
    %c61_187 = arith.constant 61 : index
    %c0_188 = arith.constant 0 : index
    %371 = vector.load %arg4[%c61_187, %c0_188] : memref<128x128xf32, #tpu.memory_space<vmem>>, vector<1x128xf32>
    %372 = vector.broadcast %370 : vector<16x1xf32> to vector<16x128xf32>
    %373 = vector.broadcast %371 : vector<1x128xf32> to vector<16x128xf32>
    %374 = arith.addf %372, %373 : vector<16x128xf32>
    %375 = arith.maximumf %369, %374 : vector<16x128xf32>
    %c0_189 = arith.constant 0 : index
    %c62 = arith.constant 62 : index
    %376 = vector.load %arg3[%c0_189, %c62] : memref<16x128xf32, #tpu.memory_space<vmem>>, vector<16x1xf32>
    %c62_190 = arith.constant 62 : index
    %c0_191 = arith.constant 0 : index
    %377 = vector.load %arg4[%c62_190, %c0_191] : memref<128x128xf32, #tpu.memory_space<vmem>>, vector<1x128xf32>
    %378 = vector.broadcast %376 : vector<16x1xf32> to vector<16x128xf32>
    %379 = vector.broadcast %377 : vector<1x128xf32> to vector<16x128xf32>
    %380 = arith.addf %378, %379 : vector<16x128xf32>
    %381 = arith.maximumf %375, %380 : vector<16x128xf32>
    %c0_192 = arith.constant 0 : index
    %c63 = arith.constant 63 : index
    %382 = vector.load %arg3[%c0_192, %c63] : memref<16x128xf32, #tpu.memory_space<vmem>>, vector<16x1xf32>
    %c63_193 = arith.constant 63 : index
    %c0_194 = arith.constant 0 : index
    %383 = vector.load %arg4[%c63_193, %c0_194] : memref<128x128xf32, #tpu.memory_space<vmem>>, vector<1x128xf32>
    %384 = vector.broadcast %382 : vector<16x1xf32> to vector<16x128xf32>
    %385 = vector.broadcast %383 : vector<1x128xf32> to vector<16x128xf32>
    %386 = arith.addf %384, %385 : vector<16x128xf32>
    %387 = arith.maximumf %381, %386 : vector<16x128xf32>
    %c0_195 = arith.constant 0 : index
    %c64 = arith.constant 64 : index
    %388 = vector.load %arg3[%c0_195, %c64] : memref<16x128xf32, #tpu.memory_space<vmem>>, vector<16x1xf32>
    %c64_196 = arith.constant 64 : index
    %c0_197 = arith.constant 0 : index
    %389 = vector.load %arg4[%c64_196, %c0_197] : memref<128x128xf32, #tpu.memory_space<vmem>>, vector<1x128xf32>
    %390 = vector.broadcast %388 : vector<16x1xf32> to vector<16x128xf32>
    %391 = vector.broadcast %389 : vector<1x128xf32> to vector<16x128xf32>
    %392 = arith.addf %390, %391 : vector<16x128xf32>
    %393 = arith.maximumf %387, %392 : vector<16x128xf32>
    %c0_198 = arith.constant 0 : index
    %c65 = arith.constant 65 : index
    %394 = vector.load %arg3[%c0_198, %c65] : memref<16x128xf32, #tpu.memory_space<vmem>>, vector<16x1xf32>
    %c65_199 = arith.constant 65 : index
    %c0_200 = arith.constant 0 : index
    %395 = vector.load %arg4[%c65_199, %c0_200] : memref<128x128xf32, #tpu.memory_space<vmem>>, vector<1x128xf32>
    %396 = vector.broadcast %394 : vector<16x1xf32> to vector<16x128xf32>
    %397 = vector.broadcast %395 : vector<1x128xf32> to vector<16x128xf32>
    %398 = arith.addf %396, %397 : vector<16x128xf32>
    %399 = arith.maximumf %393, %398 : vector<16x128xf32>
    %c0_201 = arith.constant 0 : index
    %c66 = arith.constant 66 : index
    %400 = vector.load %arg3[%c0_201, %c66] : memref<16x128xf32, #tpu.memory_space<vmem>>, vector<16x1xf32>
    %c66_202 = arith.constant 66 : index
    %c0_203 = arith.constant 0 : index
    %401 = vector.load %arg4[%c66_202, %c0_203] : memref<128x128xf32, #tpu.memory_space<vmem>>, vector<1x128xf32>
    %402 = vector.broadcast %400 : vector<16x1xf32> to vector<16x128xf32>
    %403 = vector.broadcast %401 : vector<1x128xf32> to vector<16x128xf32>
    %404 = arith.addf %402, %403 : vector<16x128xf32>
    %405 = arith.maximumf %399, %404 : vector<16x128xf32>
    %c0_204 = arith.constant 0 : index
    %c67 = arith.constant 67 : index
    %406 = vector.load %arg3[%c0_204, %c67] : memref<16x128xf32, #tpu.memory_space<vmem>>, vector<16x1xf32>
    %c67_205 = arith.constant 67 : index
    %c0_206 = arith.constant 0 : index
    %407 = vector.load %arg4[%c67_205, %c0_206] : memref<128x128xf32, #tpu.memory_space<vmem>>, vector<1x128xf32>
    %408 = vector.broadcast %406 : vector<16x1xf32> to vector<16x128xf32>
    %409 = vector.broadcast %407 : vector<1x128xf32> to vector<16x128xf32>
    %410 = arith.addf %408, %409 : vector<16x128xf32>
    %411 = arith.maximumf %405, %410 : vector<16x128xf32>
    %c0_207 = arith.constant 0 : index
    %c68 = arith.constant 68 : index
    %412 = vector.load %arg3[%c0_207, %c68] : memref<16x128xf32, #tpu.memory_space<vmem>>, vector<16x1xf32>
    %c68_208 = arith.constant 68 : index
    %c0_209 = arith.constant 0 : index
    %413 = vector.load %arg4[%c68_208, %c0_209] : memref<128x128xf32, #tpu.memory_space<vmem>>, vector<1x128xf32>
    %414 = vector.broadcast %412 : vector<16x1xf32> to vector<16x128xf32>
    %415 = vector.broadcast %413 : vector<1x128xf32> to vector<16x128xf32>
    %416 = arith.addf %414, %415 : vector<16x128xf32>
    %417 = arith.maximumf %411, %416 : vector<16x128xf32>
    %c0_210 = arith.constant 0 : index
    %c69 = arith.constant 69 : index
    %418 = vector.load %arg3[%c0_210, %c69] : memref<16x128xf32, #tpu.memory_space<vmem>>, vector<16x1xf32>
    %c69_211 = arith.constant 69 : index
    %c0_212 = arith.constant 0 : index
    %419 = vector.load %arg4[%c69_211, %c0_212] : memref<128x128xf32, #tpu.memory_space<vmem>>, vector<1x128xf32>
    %420 = vector.broadcast %418 : vector<16x1xf32> to vector<16x128xf32>
    %421 = vector.broadcast %419 : vector<1x128xf32> to vector<16x128xf32>
    %422 = arith.addf %420, %421 : vector<16x128xf32>
    %423 = arith.maximumf %417, %422 : vector<16x128xf32>
    %c0_213 = arith.constant 0 : index
    %c70 = arith.constant 70 : index
    %424 = vector.load %arg3[%c0_213, %c70] : memref<16x128xf32, #tpu.memory_space<vmem>>, vector<16x1xf32>
    %c70_214 = arith.constant 70 : index
    %c0_215 = arith.constant 0 : index
    %425 = vector.load %arg4[%c70_214, %c0_215] : memref<128x128xf32, #tpu.memory_space<vmem>>, vector<1x128xf32>
    %426 = vector.broadcast %424 : vector<16x1xf32> to vector<16x128xf32>
    %427 = vector.broadcast %425 : vector<1x128xf32> to vector<16x128xf32>
    %428 = arith.addf %426, %427 : vector<16x128xf32>
    %429 = arith.maximumf %423, %428 : vector<16x128xf32>
    %c0_216 = arith.constant 0 : index
    %c71 = arith.constant 71 : index
    %430 = vector.load %arg3[%c0_216, %c71] : memref<16x128xf32, #tpu.memory_space<vmem>>, vector<16x1xf32>
    %c71_217 = arith.constant 71 : index
    %c0_218 = arith.constant 0 : index
    %431 = vector.load %arg4[%c71_217, %c0_218] : memref<128x128xf32, #tpu.memory_space<vmem>>, vector<1x128xf32>
    %432 = vector.broadcast %430 : vector<16x1xf32> to vector<16x128xf32>
    %433 = vector.broadcast %431 : vector<1x128xf32> to vector<16x128xf32>
    %434 = arith.addf %432, %433 : vector<16x128xf32>
    %435 = arith.maximumf %429, %434 : vector<16x128xf32>
    %c0_219 = arith.constant 0 : index
    %c72 = arith.constant 72 : index
    %436 = vector.load %arg3[%c0_219, %c72] : memref<16x128xf32, #tpu.memory_space<vmem>>, vector<16x1xf32>
    %c72_220 = arith.constant 72 : index
    %c0_221 = arith.constant 0 : index
    %437 = vector.load %arg4[%c72_220, %c0_221] : memref<128x128xf32, #tpu.memory_space<vmem>>, vector<1x128xf32>
    %438 = vector.broadcast %436 : vector<16x1xf32> to vector<16x128xf32>
    %439 = vector.broadcast %437 : vector<1x128xf32> to vector<16x128xf32>
    %440 = arith.addf %438, %439 : vector<16x128xf32>
    %441 = arith.maximumf %435, %440 : vector<16x128xf32>
    %c0_222 = arith.constant 0 : index
    %c73 = arith.constant 73 : index
    %442 = vector.load %arg3[%c0_222, %c73] : memref<16x128xf32, #tpu.memory_space<vmem>>, vector<16x1xf32>
    %c73_223 = arith.constant 73 : index
    %c0_224 = arith.constant 0 : index
    %443 = vector.load %arg4[%c73_223, %c0_224] : memref<128x128xf32, #tpu.memory_space<vmem>>, vector<1x128xf32>
    %444 = vector.broadcast %442 : vector<16x1xf32> to vector<16x128xf32>
    %445 = vector.broadcast %443 : vector<1x128xf32> to vector<16x128xf32>
    %446 = arith.addf %444, %445 : vector<16x128xf32>
    %447 = arith.maximumf %441, %446 : vector<16x128xf32>
    %c0_225 = arith.constant 0 : index
    %c74 = arith.constant 74 : index
    %448 = vector.load %arg3[%c0_225, %c74] : memref<16x128xf32, #tpu.memory_space<vmem>>, vector<16x1xf32>
    %c74_226 = arith.constant 74 : index
    %c0_227 = arith.constant 0 : index
    %449 = vector.load %arg4[%c74_226, %c0_227] : memref<128x128xf32, #tpu.memory_space<vmem>>, vector<1x128xf32>
    %450 = vector.broadcast %448 : vector<16x1xf32> to vector<16x128xf32>
    %451 = vector.broadcast %449 : vector<1x128xf32> to vector<16x128xf32>
    %452 = arith.addf %450, %451 : vector<16x128xf32>
    %453 = arith.maximumf %447, %452 : vector<16x128xf32>
    %c0_228 = arith.constant 0 : index
    %c75 = arith.constant 75 : index
    %454 = vector.load %arg3[%c0_228, %c75] : memref<16x128xf32, #tpu.memory_space<vmem>>, vector<16x1xf32>
    %c75_229 = arith.constant 75 : index
    %c0_230 = arith.constant 0 : index
    %455 = vector.load %arg4[%c75_229, %c0_230] : memref<128x128xf32, #tpu.memory_space<vmem>>, vector<1x128xf32>
    %456 = vector.broadcast %454 : vector<16x1xf32> to vector<16x128xf32>
    %457 = vector.broadcast %455 : vector<1x128xf32> to vector<16x128xf32>
    %458 = arith.addf %456, %457 : vector<16x128xf32>
    %459 = arith.maximumf %453, %458 : vector<16x128xf32>
    %c0_231 = arith.constant 0 : index
    %c76 = arith.constant 76 : index
    %460 = vector.load %arg3[%c0_231, %c76] : memref<16x128xf32, #tpu.memory_space<vmem>>, vector<16x1xf32>
    %c76_232 = arith.constant 76 : index
    %c0_233 = arith.constant 0 : index
    %461 = vector.load %arg4[%c76_232, %c0_233] : memref<128x128xf32, #tpu.memory_space<vmem>>, vector<1x128xf32>
    %462 = vector.broadcast %460 : vector<16x1xf32> to vector<16x128xf32>
    %463 = vector.broadcast %461 : vector<1x128xf32> to vector<16x128xf32>
    %464 = arith.addf %462, %463 : vector<16x128xf32>
    %465 = arith.maximumf %459, %464 : vector<16x128xf32>
    %c0_234 = arith.constant 0 : index
    %c77 = arith.constant 77 : index
    %466 = vector.load %arg3[%c0_234, %c77] : memref<16x128xf32, #tpu.memory_space<vmem>>, vector<16x1xf32>
    %c77_235 = arith.constant 77 : index
    %c0_236 = arith.constant 0 : index
    %467 = vector.load %arg4[%c77_235, %c0_236] : memref<128x128xf32, #tpu.memory_space<vmem>>, vector<1x128xf32>
    %468 = vector.broadcast %466 : vector<16x1xf32> to vector<16x128xf32>
    %469 = vector.broadcast %467 : vector<1x128xf32> to vector<16x128xf32>
    %470 = arith.addf %468, %469 : vector<16x128xf32>
    %471 = arith.maximumf %465, %470 : vector<16x128xf32>
    %c0_237 = arith.constant 0 : index
    %c78 = arith.constant 78 : index
    %472 = vector.load %arg3[%c0_237, %c78] : memref<16x128xf32, #tpu.memory_space<vmem>>, vector<16x1xf32>
    %c78_238 = arith.constant 78 : index
    %c0_239 = arith.constant 0 : index
    %473 = vector.load %arg4[%c78_238, %c0_239] : memref<128x128xf32, #tpu.memory_space<vmem>>, vector<1x128xf32>
    %474 = vector.broadcast %472 : vector<16x1xf32> to vector<16x128xf32>
    %475 = vector.broadcast %473 : vector<1x128xf32> to vector<16x128xf32>
    %476 = arith.addf %474, %475 : vector<16x128xf32>
    %477 = arith.maximumf %471, %476 : vector<16x128xf32>
    %c0_240 = arith.constant 0 : index
    %c79 = arith.constant 79 : index
    %478 = vector.load %arg3[%c0_240, %c79] : memref<16x128xf32, #tpu.memory_space<vmem>>, vector<16x1xf32>
    %c79_241 = arith.constant 79 : index
    %c0_242 = arith.constant 0 : index
    %479 = vector.load %arg4[%c79_241, %c0_242] : memref<128x128xf32, #tpu.memory_space<vmem>>, vector<1x128xf32>
    %480 = vector.broadcast %478 : vector<16x1xf32> to vector<16x128xf32>
    %481 = vector.broadcast %479 : vector<1x128xf32> to vector<16x128xf32>
    %482 = arith.addf %480, %481 : vector<16x128xf32>
    %483 = arith.maximumf %477, %482 : vector<16x128xf32>
    %c0_243 = arith.constant 0 : index
    %c80 = arith.constant 80 : index
    %484 = vector.load %arg3[%c0_243, %c80] : memref<16x128xf32, #tpu.memory_space<vmem>>, vector<16x1xf32>
    %c80_244 = arith.constant 80 : index
    %c0_245 = arith.constant 0 : index
    %485 = vector.load %arg4[%c80_244, %c0_245] : memref<128x128xf32, #tpu.memory_space<vmem>>, vector<1x128xf32>
    %486 = vector.broadcast %484 : vector<16x1xf32> to vector<16x128xf32>
    %487 = vector.broadcast %485 : vector<1x128xf32> to vector<16x128xf32>
    %488 = arith.addf %486, %487 : vector<16x128xf32>
    %489 = arith.maximumf %483, %488 : vector<16x128xf32>
    %c0_246 = arith.constant 0 : index
    %c81 = arith.constant 81 : index
    %490 = vector.load %arg3[%c0_246, %c81] : memref<16x128xf32, #tpu.memory_space<vmem>>, vector<16x1xf32>
    %c81_247 = arith.constant 81 : index
    %c0_248 = arith.constant 0 : index
    %491 = vector.load %arg4[%c81_247, %c0_248] : memref<128x128xf32, #tpu.memory_space<vmem>>, vector<1x128xf32>
    %492 = vector.broadcast %490 : vector<16x1xf32> to vector<16x128xf32>
    %493 = vector.broadcast %491 : vector<1x128xf32> to vector<16x128xf32>
    %494 = arith.addf %492, %493 : vector<16x128xf32>
    %495 = arith.maximumf %489, %494 : vector<16x128xf32>
    %c0_249 = arith.constant 0 : index
    %c82 = arith.constant 82 : index
    %496 = vector.load %arg3[%c0_249, %c82] : memref<16x128xf32, #tpu.memory_space<vmem>>, vector<16x1xf32>
    %c82_250 = arith.constant 82 : index
    %c0_251 = arith.constant 0 : index
    %497 = vector.load %arg4[%c82_250, %c0_251] : memref<128x128xf32, #tpu.memory_space<vmem>>, vector<1x128xf32>
    %498 = vector.broadcast %496 : vector<16x1xf32> to vector<16x128xf32>
    %499 = vector.broadcast %497 : vector<1x128xf32> to vector<16x128xf32>
    %500 = arith.addf %498, %499 : vector<16x128xf32>
    %501 = arith.maximumf %495, %500 : vector<16x128xf32>
    %c0_252 = arith.constant 0 : index
    %c83 = arith.constant 83 : index
    %502 = vector.load %arg3[%c0_252, %c83] : memref<16x128xf32, #tpu.memory_space<vmem>>, vector<16x1xf32>
    %c83_253 = arith.constant 83 : index
    %c0_254 = arith.constant 0 : index
    %503 = vector.load %arg4[%c83_253, %c0_254] : memref<128x128xf32, #tpu.memory_space<vmem>>, vector<1x128xf32>
    %504 = vector.broadcast %502 : vector<16x1xf32> to vector<16x128xf32>
    %505 = vector.broadcast %503 : vector<1x128xf32> to vector<16x128xf32>
    %506 = arith.addf %504, %505 : vector<16x128xf32>
    %507 = arith.maximumf %501, %506 : vector<16x128xf32>
    %c0_255 = arith.constant 0 : index
    %c84 = arith.constant 84 : index
    %508 = vector.load %arg3[%c0_255, %c84] : memref<16x128xf32, #tpu.memory_space<vmem>>, vector<16x1xf32>
    %c84_256 = arith.constant 84 : index
    %c0_257 = arith.constant 0 : index
    %509 = vector.load %arg4[%c84_256, %c0_257] : memref<128x128xf32, #tpu.memory_space<vmem>>, vector<1x128xf32>
    %510 = vector.broadcast %508 : vector<16x1xf32> to vector<16x128xf32>
    %511 = vector.broadcast %509 : vector<1x128xf32> to vector<16x128xf32>
    %512 = arith.addf %510, %511 : vector<16x128xf32>
    %513 = arith.maximumf %507, %512 : vector<16x128xf32>
    %c0_258 = arith.constant 0 : index
    %c85 = arith.constant 85 : index
    %514 = vector.load %arg3[%c0_258, %c85] : memref<16x128xf32, #tpu.memory_space<vmem>>, vector<16x1xf32>
    %c85_259 = arith.constant 85 : index
    %c0_260 = arith.constant 0 : index
    %515 = vector.load %arg4[%c85_259, %c0_260] : memref<128x128xf32, #tpu.memory_space<vmem>>, vector<1x128xf32>
    %516 = vector.broadcast %514 : vector<16x1xf32> to vector<16x128xf32>
    %517 = vector.broadcast %515 : vector<1x128xf32> to vector<16x128xf32>
    %518 = arith.addf %516, %517 : vector<16x128xf32>
    %519 = arith.maximumf %513, %518 : vector<16x128xf32>
    %c0_261 = arith.constant 0 : index
    %c86 = arith.constant 86 : index
    %520 = vector.load %arg3[%c0_261, %c86] : memref<16x128xf32, #tpu.memory_space<vmem>>, vector<16x1xf32>
    %c86_262 = arith.constant 86 : index
    %c0_263 = arith.constant 0 : index
    %521 = vector.load %arg4[%c86_262, %c0_263] : memref<128x128xf32, #tpu.memory_space<vmem>>, vector<1x128xf32>
    %522 = vector.broadcast %520 : vector<16x1xf32> to vector<16x128xf32>
    %523 = vector.broadcast %521 : vector<1x128xf32> to vector<16x128xf32>
    %524 = arith.addf %522, %523 : vector<16x128xf32>
    %525 = arith.maximumf %519, %524 : vector<16x128xf32>
    %c0_264 = arith.constant 0 : index
    %c87 = arith.constant 87 : index
    %526 = vector.load %arg3[%c0_264, %c87] : memref<16x128xf32, #tpu.memory_space<vmem>>, vector<16x1xf32>
    %c87_265 = arith.constant 87 : index
    %c0_266 = arith.constant 0 : index
    %527 = vector.load %arg4[%c87_265, %c0_266] : memref<128x128xf32, #tpu.memory_space<vmem>>, vector<1x128xf32>
    %528 = vector.broadcast %526 : vector<16x1xf32> to vector<16x128xf32>
    %529 = vector.broadcast %527 : vector<1x128xf32> to vector<16x128xf32>
    %530 = arith.addf %528, %529 : vector<16x128xf32>
    %531 = arith.maximumf %525, %530 : vector<16x128xf32>
    %c0_267 = arith.constant 0 : index
    %c88 = arith.constant 88 : index
    %532 = vector.load %arg3[%c0_267, %c88] : memref<16x128xf32, #tpu.memory_space<vmem>>, vector<16x1xf32>
    %c88_268 = arith.constant 88 : index
    %c0_269 = arith.constant 0 : index
    %533 = vector.load %arg4[%c88_268, %c0_269] : memref<128x128xf32, #tpu.memory_space<vmem>>, vector<1x128xf32>
    %534 = vector.broadcast %532 : vector<16x1xf32> to vector<16x128xf32>
    %535 = vector.broadcast %533 : vector<1x128xf32> to vector<16x128xf32>
    %536 = arith.addf %534, %535 : vector<16x128xf32>
    %537 = arith.maximumf %531, %536 : vector<16x128xf32>
    %c0_270 = arith.constant 0 : index
    %c89 = arith.constant 89 : index
    %538 = vector.load %arg3[%c0_270, %c89] : memref<16x128xf32, #tpu.memory_space<vmem>>, vector<16x1xf32>
    %c89_271 = arith.constant 89 : index
    %c0_272 = arith.constant 0 : index
    %539 = vector.load %arg4[%c89_271, %c0_272] : memref<128x128xf32, #tpu.memory_space<vmem>>, vector<1x128xf32>
    %540 = vector.broadcast %538 : vector<16x1xf32> to vector<16x128xf32>
    %541 = vector.broadcast %539 : vector<1x128xf32> to vector<16x128xf32>
    %542 = arith.addf %540, %541 : vector<16x128xf32>
    %543 = arith.maximumf %537, %542 : vector<16x128xf32>
    %c0_273 = arith.constant 0 : index
    %c90 = arith.constant 90 : index
    %544 = vector.load %arg3[%c0_273, %c90] : memref<16x128xf32, #tpu.memory_space<vmem>>, vector<16x1xf32>
    %c90_274 = arith.constant 90 : index
    %c0_275 = arith.constant 0 : index
    %545 = vector.load %arg4[%c90_274, %c0_275] : memref<128x128xf32, #tpu.memory_space<vmem>>, vector<1x128xf32>
    %546 = vector.broadcast %544 : vector<16x1xf32> to vector<16x128xf32>
    %547 = vector.broadcast %545 : vector<1x128xf32> to vector<16x128xf32>
    %548 = arith.addf %546, %547 : vector<16x128xf32>
    %549 = arith.maximumf %543, %548 : vector<16x128xf32>
    %c0_276 = arith.constant 0 : index
    %c91 = arith.constant 91 : index
    %550 = vector.load %arg3[%c0_276, %c91] : memref<16x128xf32, #tpu.memory_space<vmem>>, vector<16x1xf32>
    %c91_277 = arith.constant 91 : index
    %c0_278 = arith.constant 0 : index
    %551 = vector.load %arg4[%c91_277, %c0_278] : memref<128x128xf32, #tpu.memory_space<vmem>>, vector<1x128xf32>
    %552 = vector.broadcast %550 : vector<16x1xf32> to vector<16x128xf32>
    %553 = vector.broadcast %551 : vector<1x128xf32> to vector<16x128xf32>
    %554 = arith.addf %552, %553 : vector<16x128xf32>
    %555 = arith.maximumf %549, %554 : vector<16x128xf32>
    %c0_279 = arith.constant 0 : index
    %c92 = arith.constant 92 : index
    %556 = vector.load %arg3[%c0_279, %c92] : memref<16x128xf32, #tpu.memory_space<vmem>>, vector<16x1xf32>
    %c92_280 = arith.constant 92 : index
    %c0_281 = arith.constant 0 : index
    %557 = vector.load %arg4[%c92_280, %c0_281] : memref<128x128xf32, #tpu.memory_space<vmem>>, vector<1x128xf32>
    %558 = vector.broadcast %556 : vector<16x1xf32> to vector<16x128xf32>
    %559 = vector.broadcast %557 : vector<1x128xf32> to vector<16x128xf32>
    %560 = arith.addf %558, %559 : vector<16x128xf32>
    %561 = arith.maximumf %555, %560 : vector<16x128xf32>
    %c0_282 = arith.constant 0 : index
    %c93 = arith.constant 93 : index
    %562 = vector.load %arg3[%c0_282, %c93] : memref<16x128xf32, #tpu.memory_space<vmem>>, vector<16x1xf32>
    %c93_283 = arith.constant 93 : index
    %c0_284 = arith.constant 0 : index
    %563 = vector.load %arg4[%c93_283, %c0_284] : memref<128x128xf32, #tpu.memory_space<vmem>>, vector<1x128xf32>
    %564 = vector.broadcast %562 : vector<16x1xf32> to vector<16x128xf32>
    %565 = vector.broadcast %563 : vector<1x128xf32> to vector<16x128xf32>
    %566 = arith.addf %564, %565 : vector<16x128xf32>
    %567 = arith.maximumf %561, %566 : vector<16x128xf32>
    %c0_285 = arith.constant 0 : index
    %c94 = arith.constant 94 : index
    %568 = vector.load %arg3[%c0_285, %c94] : memref<16x128xf32, #tpu.memory_space<vmem>>, vector<16x1xf32>
    %c94_286 = arith.constant 94 : index
    %c0_287 = arith.constant 0 : index
    %569 = vector.load %arg4[%c94_286, %c0_287] : memref<128x128xf32, #tpu.memory_space<vmem>>, vector<1x128xf32>
    %570 = vector.broadcast %568 : vector<16x1xf32> to vector<16x128xf32>
    %571 = vector.broadcast %569 : vector<1x128xf32> to vector<16x128xf32>
    %572 = arith.addf %570, %571 : vector<16x128xf32>
    %573 = arith.maximumf %567, %572 : vector<16x128xf32>
    %c0_288 = arith.constant 0 : index
    %c95 = arith.constant 95 : index
    %574 = vector.load %arg3[%c0_288, %c95] : memref<16x128xf32, #tpu.memory_space<vmem>>, vector<16x1xf32>
    %c95_289 = arith.constant 95 : index
    %c0_290 = arith.constant 0 : index
    %575 = vector.load %arg4[%c95_289, %c0_290] : memref<128x128xf32, #tpu.memory_space<vmem>>, vector<1x128xf32>
    %576 = vector.broadcast %574 : vector<16x1xf32> to vector<16x128xf32>
    %577 = vector.broadcast %575 : vector<1x128xf32> to vector<16x128xf32>
    %578 = arith.addf %576, %577 : vector<16x128xf32>
    %579 = arith.maximumf %573, %578 : vector<16x128xf32>
    %c0_291 = arith.constant 0 : index
    %c96 = arith.constant 96 : index
    %580 = vector.load %arg3[%c0_291, %c96] : memref<16x128xf32, #tpu.memory_space<vmem>>, vector<16x1xf32>
    %c96_292 = arith.constant 96 : index
    %c0_293 = arith.constant 0 : index
    %581 = vector.load %arg4[%c96_292, %c0_293] : memref<128x128xf32, #tpu.memory_space<vmem>>, vector<1x128xf32>
    %582 = vector.broadcast %580 : vector<16x1xf32> to vector<16x128xf32>
    %583 = vector.broadcast %581 : vector<1x128xf32> to vector<16x128xf32>
    %584 = arith.addf %582, %583 : vector<16x128xf32>
    %585 = arith.maximumf %579, %584 : vector<16x128xf32>
    %c0_294 = arith.constant 0 : index
    %c97 = arith.constant 97 : index
    %586 = vector.load %arg3[%c0_294, %c97] : memref<16x128xf32, #tpu.memory_space<vmem>>, vector<16x1xf32>
    %c97_295 = arith.constant 97 : index
    %c0_296 = arith.constant 0 : index
    %587 = vector.load %arg4[%c97_295, %c0_296] : memref<128x128xf32, #tpu.memory_space<vmem>>, vector<1x128xf32>
    %588 = vector.broadcast %586 : vector<16x1xf32> to vector<16x128xf32>
    %589 = vector.broadcast %587 : vector<1x128xf32> to vector<16x128xf32>
    %590 = arith.addf %588, %589 : vector<16x128xf32>
    %591 = arith.maximumf %585, %590 : vector<16x128xf32>
    %c0_297 = arith.constant 0 : index
    %c98 = arith.constant 98 : index
    %592 = vector.load %arg3[%c0_297, %c98] : memref<16x128xf32, #tpu.memory_space<vmem>>, vector<16x1xf32>
    %c98_298 = arith.constant 98 : index
    %c0_299 = arith.constant 0 : index
    %593 = vector.load %arg4[%c98_298, %c0_299] : memref<128x128xf32, #tpu.memory_space<vmem>>, vector<1x128xf32>
    %594 = vector.broadcast %592 : vector<16x1xf32> to vector<16x128xf32>
    %595 = vector.broadcast %593 : vector<1x128xf32> to vector<16x128xf32>
    %596 = arith.addf %594, %595 : vector<16x128xf32>
    %597 = arith.maximumf %591, %596 : vector<16x128xf32>
    %c0_300 = arith.constant 0 : index
    %c99 = arith.constant 99 : index
    %598 = vector.load %arg3[%c0_300, %c99] : memref<16x128xf32, #tpu.memory_space<vmem>>, vector<16x1xf32>
    %c99_301 = arith.constant 99 : index
    %c0_302 = arith.constant 0 : index
    %599 = vector.load %arg4[%c99_301, %c0_302] : memref<128x128xf32, #tpu.memory_space<vmem>>, vector<1x128xf32>
    %600 = vector.broadcast %598 : vector<16x1xf32> to vector<16x128xf32>
    %601 = vector.broadcast %599 : vector<1x128xf32> to vector<16x128xf32>
    %602 = arith.addf %600, %601 : vector<16x128xf32>
    %603 = arith.maximumf %597, %602 : vector<16x128xf32>
    %c0_303 = arith.constant 0 : index
    %c100 = arith.constant 100 : index
    %604 = vector.load %arg3[%c0_303, %c100] : memref<16x128xf32, #tpu.memory_space<vmem>>, vector<16x1xf32>
    %c100_304 = arith.constant 100 : index
    %c0_305 = arith.constant 0 : index
    %605 = vector.load %arg4[%c100_304, %c0_305] : memref<128x128xf32, #tpu.memory_space<vmem>>, vector<1x128xf32>
    %606 = vector.broadcast %604 : vector<16x1xf32> to vector<16x128xf32>
    %607 = vector.broadcast %605 : vector<1x128xf32> to vector<16x128xf32>
    %608 = arith.addf %606, %607 : vector<16x128xf32>
    %609 = arith.maximumf %603, %608 : vector<16x128xf32>
    %c0_306 = arith.constant 0 : index
    %c101 = arith.constant 101 : index
    %610 = vector.load %arg3[%c0_306, %c101] : memref<16x128xf32, #tpu.memory_space<vmem>>, vector<16x1xf32>
    %c101_307 = arith.constant 101 : index
    %c0_308 = arith.constant 0 : index
    %611 = vector.load %arg4[%c101_307, %c0_308] : memref<128x128xf32, #tpu.memory_space<vmem>>, vector<1x128xf32>
    %612 = vector.broadcast %610 : vector<16x1xf32> to vector<16x128xf32>
    %613 = vector.broadcast %611 : vector<1x128xf32> to vector<16x128xf32>
    %614 = arith.addf %612, %613 : vector<16x128xf32>
    %615 = arith.maximumf %609, %614 : vector<16x128xf32>
    %c0_309 = arith.constant 0 : index
    %c102 = arith.constant 102 : index
    %616 = vector.load %arg3[%c0_309, %c102] : memref<16x128xf32, #tpu.memory_space<vmem>>, vector<16x1xf32>
    %c102_310 = arith.constant 102 : index
    %c0_311 = arith.constant 0 : index
    %617 = vector.load %arg4[%c102_310, %c0_311] : memref<128x128xf32, #tpu.memory_space<vmem>>, vector<1x128xf32>
    %618 = vector.broadcast %616 : vector<16x1xf32> to vector<16x128xf32>
    %619 = vector.broadcast %617 : vector<1x128xf32> to vector<16x128xf32>
    %620 = arith.addf %618, %619 : vector<16x128xf32>
    %621 = arith.maximumf %615, %620 : vector<16x128xf32>
    %c0_312 = arith.constant 0 : index
    %c103 = arith.constant 103 : index
    %622 = vector.load %arg3[%c0_312, %c103] : memref<16x128xf32, #tpu.memory_space<vmem>>, vector<16x1xf32>
    %c103_313 = arith.constant 103 : index
    %c0_314 = arith.constant 0 : index
    %623 = vector.load %arg4[%c103_313, %c0_314] : memref<128x128xf32, #tpu.memory_space<vmem>>, vector<1x128xf32>
    %624 = vector.broadcast %622 : vector<16x1xf32> to vector<16x128xf32>
    %625 = vector.broadcast %623 : vector<1x128xf32> to vector<16x128xf32>
    %626 = arith.addf %624, %625 : vector<16x128xf32>
    %627 = arith.maximumf %621, %626 : vector<16x128xf32>
    %c0_315 = arith.constant 0 : index
    %c104 = arith.constant 104 : index
    %628 = vector.load %arg3[%c0_315, %c104] : memref<16x128xf32, #tpu.memory_space<vmem>>, vector<16x1xf32>
    %c104_316 = arith.constant 104 : index
    %c0_317 = arith.constant 0 : index
    %629 = vector.load %arg4[%c104_316, %c0_317] : memref<128x128xf32, #tpu.memory_space<vmem>>, vector<1x128xf32>
    %630 = vector.broadcast %628 : vector<16x1xf32> to vector<16x128xf32>
    %631 = vector.broadcast %629 : vector<1x128xf32> to vector<16x128xf32>
    %632 = arith.addf %630, %631 : vector<16x128xf32>
    %633 = arith.maximumf %627, %632 : vector<16x128xf32>
    %c0_318 = arith.constant 0 : index
    %c105 = arith.constant 105 : index
    %634 = vector.load %arg3[%c0_318, %c105] : memref<16x128xf32, #tpu.memory_space<vmem>>, vector<16x1xf32>
    %c105_319 = arith.constant 105 : index
    %c0_320 = arith.constant 0 : index
    %635 = vector.load %arg4[%c105_319, %c0_320] : memref<128x128xf32, #tpu.memory_space<vmem>>, vector<1x128xf32>
    %636 = vector.broadcast %634 : vector<16x1xf32> to vector<16x128xf32>
    %637 = vector.broadcast %635 : vector<1x128xf32> to vector<16x128xf32>
    %638 = arith.addf %636, %637 : vector<16x128xf32>
    %639 = arith.maximumf %633, %638 : vector<16x128xf32>
    %c0_321 = arith.constant 0 : index
    %c106 = arith.constant 106 : index
    %640 = vector.load %arg3[%c0_321, %c106] : memref<16x128xf32, #tpu.memory_space<vmem>>, vector<16x1xf32>
    %c106_322 = arith.constant 106 : index
    %c0_323 = arith.constant 0 : index
    %641 = vector.load %arg4[%c106_322, %c0_323] : memref<128x128xf32, #tpu.memory_space<vmem>>, vector<1x128xf32>
    %642 = vector.broadcast %640 : vector<16x1xf32> to vector<16x128xf32>
    %643 = vector.broadcast %641 : vector<1x128xf32> to vector<16x128xf32>
    %644 = arith.addf %642, %643 : vector<16x128xf32>
    %645 = arith.maximumf %639, %644 : vector<16x128xf32>
    %c0_324 = arith.constant 0 : index
    %c107 = arith.constant 107 : index
    %646 = vector.load %arg3[%c0_324, %c107] : memref<16x128xf32, #tpu.memory_space<vmem>>, vector<16x1xf32>
    %c107_325 = arith.constant 107 : index
    %c0_326 = arith.constant 0 : index
    %647 = vector.load %arg4[%c107_325, %c0_326] : memref<128x128xf32, #tpu.memory_space<vmem>>, vector<1x128xf32>
    %648 = vector.broadcast %646 : vector<16x1xf32> to vector<16x128xf32>
    %649 = vector.broadcast %647 : vector<1x128xf32> to vector<16x128xf32>
    %650 = arith.addf %648, %649 : vector<16x128xf32>
    %651 = arith.maximumf %645, %650 : vector<16x128xf32>
    %c0_327 = arith.constant 0 : index
    %c108 = arith.constant 108 : index
    %652 = vector.load %arg3[%c0_327, %c108] : memref<16x128xf32, #tpu.memory_space<vmem>>, vector<16x1xf32>
    %c108_328 = arith.constant 108 : index
    %c0_329 = arith.constant 0 : index
    %653 = vector.load %arg4[%c108_328, %c0_329] : memref<128x128xf32, #tpu.memory_space<vmem>>, vector<1x128xf32>
    %654 = vector.broadcast %652 : vector<16x1xf32> to vector<16x128xf32>
    %655 = vector.broadcast %653 : vector<1x128xf32> to vector<16x128xf32>
    %656 = arith.addf %654, %655 : vector<16x128xf32>
    %657 = arith.maximumf %651, %656 : vector<16x128xf32>
    %c0_330 = arith.constant 0 : index
    %c109 = arith.constant 109 : index
    %658 = vector.load %arg3[%c0_330, %c109] : memref<16x128xf32, #tpu.memory_space<vmem>>, vector<16x1xf32>
    %c109_331 = arith.constant 109 : index
    %c0_332 = arith.constant 0 : index
    %659 = vector.load %arg4[%c109_331, %c0_332] : memref<128x128xf32, #tpu.memory_space<vmem>>, vector<1x128xf32>
    %660 = vector.broadcast %658 : vector<16x1xf32> to vector<16x128xf32>
    %661 = vector.broadcast %659 : vector<1x128xf32> to vector<16x128xf32>
    %662 = arith.addf %660, %661 : vector<16x128xf32>
    %663 = arith.maximumf %657, %662 : vector<16x128xf32>
    %c0_333 = arith.constant 0 : index
    %c110 = arith.constant 110 : index
    %664 = vector.load %arg3[%c0_333, %c110] : memref<16x128xf32, #tpu.memory_space<vmem>>, vector<16x1xf32>
    %c110_334 = arith.constant 110 : index
    %c0_335 = arith.constant 0 : index
    %665 = vector.load %arg4[%c110_334, %c0_335] : memref<128x128xf32, #tpu.memory_space<vmem>>, vector<1x128xf32>
    %666 = vector.broadcast %664 : vector<16x1xf32> to vector<16x128xf32>
    %667 = vector.broadcast %665 : vector<1x128xf32> to vector<16x128xf32>
    %668 = arith.addf %666, %667 : vector<16x128xf32>
    %669 = arith.maximumf %663, %668 : vector<16x128xf32>
    %c0_336 = arith.constant 0 : index
    %c111 = arith.constant 111 : index
    %670 = vector.load %arg3[%c0_336, %c111] : memref<16x128xf32, #tpu.memory_space<vmem>>, vector<16x1xf32>
    %c111_337 = arith.constant 111 : index
    %c0_338 = arith.constant 0 : index
    %671 = vector.load %arg4[%c111_337, %c0_338] : memref<128x128xf32, #tpu.memory_space<vmem>>, vector<1x128xf32>
    %672 = vector.broadcast %670 : vector<16x1xf32> to vector<16x128xf32>
    %673 = vector.broadcast %671 : vector<1x128xf32> to vector<16x128xf32>
    %674 = arith.addf %672, %673 : vector<16x128xf32>
    %675 = arith.maximumf %669, %674 : vector<16x128xf32>
    %c0_339 = arith.constant 0 : index
    %c112 = arith.constant 112 : index
    %676 = vector.load %arg3[%c0_339, %c112] : memref<16x128xf32, #tpu.memory_space<vmem>>, vector<16x1xf32>
    %c112_340 = arith.constant 112 : index
    %c0_341 = arith.constant 0 : index
    %677 = vector.load %arg4[%c112_340, %c0_341] : memref<128x128xf32, #tpu.memory_space<vmem>>, vector<1x128xf32>
    %678 = vector.broadcast %676 : vector<16x1xf32> to vector<16x128xf32>
    %679 = vector.broadcast %677 : vector<1x128xf32> to vector<16x128xf32>
    %680 = arith.addf %678, %679 : vector<16x128xf32>
    %681 = arith.maximumf %675, %680 : vector<16x128xf32>
    %c0_342 = arith.constant 0 : index
    %c113 = arith.constant 113 : index
    %682 = vector.load %arg3[%c0_342, %c113] : memref<16x128xf32, #tpu.memory_space<vmem>>, vector<16x1xf32>
    %c113_343 = arith.constant 113 : index
    %c0_344 = arith.constant 0 : index
    %683 = vector.load %arg4[%c113_343, %c0_344] : memref<128x128xf32, #tpu.memory_space<vmem>>, vector<1x128xf32>
    %684 = vector.broadcast %682 : vector<16x1xf32> to vector<16x128xf32>
    %685 = vector.broadcast %683 : vector<1x128xf32> to vector<16x128xf32>
    %686 = arith.addf %684, %685 : vector<16x128xf32>
    %687 = arith.maximumf %681, %686 : vector<16x128xf32>
    %c0_345 = arith.constant 0 : index
    %c114 = arith.constant 114 : index
    %688 = vector.load %arg3[%c0_345, %c114] : memref<16x128xf32, #tpu.memory_space<vmem>>, vector<16x1xf32>
    %c114_346 = arith.constant 114 : index
    %c0_347 = arith.constant 0 : index
    %689 = vector.load %arg4[%c114_346, %c0_347] : memref<128x128xf32, #tpu.memory_space<vmem>>, vector<1x128xf32>
    %690 = vector.broadcast %688 : vector<16x1xf32> to vector<16x128xf32>
    %691 = vector.broadcast %689 : vector<1x128xf32> to vector<16x128xf32>
    %692 = arith.addf %690, %691 : vector<16x128xf32>
    %693 = arith.maximumf %687, %692 : vector<16x128xf32>
    %c0_348 = arith.constant 0 : index
    %c115 = arith.constant 115 : index
    %694 = vector.load %arg3[%c0_348, %c115] : memref<16x128xf32, #tpu.memory_space<vmem>>, vector<16x1xf32>
    %c115_349 = arith.constant 115 : index
    %c0_350 = arith.constant 0 : index
    %695 = vector.load %arg4[%c115_349, %c0_350] : memref<128x128xf32, #tpu.memory_space<vmem>>, vector<1x128xf32>
    %696 = vector.broadcast %694 : vector<16x1xf32> to vector<16x128xf32>
    %697 = vector.broadcast %695 : vector<1x128xf32> to vector<16x128xf32>
    %698 = arith.addf %696, %697 : vector<16x128xf32>
    %699 = arith.maximumf %693, %698 : vector<16x128xf32>
    %c0_351 = arith.constant 0 : index
    %c116 = arith.constant 116 : index
    %700 = vector.load %arg3[%c0_351, %c116] : memref<16x128xf32, #tpu.memory_space<vmem>>, vector<16x1xf32>
    %c116_352 = arith.constant 116 : index
    %c0_353 = arith.constant 0 : index
    %701 = vector.load %arg4[%c116_352, %c0_353] : memref<128x128xf32, #tpu.memory_space<vmem>>, vector<1x128xf32>
    %702 = vector.broadcast %700 : vector<16x1xf32> to vector<16x128xf32>
    %703 = vector.broadcast %701 : vector<1x128xf32> to vector<16x128xf32>
    %704 = arith.addf %702, %703 : vector<16x128xf32>
    %705 = arith.maximumf %699, %704 : vector<16x128xf32>
    %c0_354 = arith.constant 0 : index
    %c117 = arith.constant 117 : index
    %706 = vector.load %arg3[%c0_354, %c117] : memref<16x128xf32, #tpu.memory_space<vmem>>, vector<16x1xf32>
    %c117_355 = arith.constant 117 : index
    %c0_356 = arith.constant 0 : index
    %707 = vector.load %arg4[%c117_355, %c0_356] : memref<128x128xf32, #tpu.memory_space<vmem>>, vector<1x128xf32>
    %708 = vector.broadcast %706 : vector<16x1xf32> to vector<16x128xf32>
    %709 = vector.broadcast %707 : vector<1x128xf32> to vector<16x128xf32>
    %710 = arith.addf %708, %709 : vector<16x128xf32>
    %711 = arith.maximumf %705, %710 : vector<16x128xf32>
    %c0_357 = arith.constant 0 : index
    %c118 = arith.constant 118 : index
    %712 = vector.load %arg3[%c0_357, %c118] : memref<16x128xf32, #tpu.memory_space<vmem>>, vector<16x1xf32>
    %c118_358 = arith.constant 118 : index
    %c0_359 = arith.constant 0 : index
    %713 = vector.load %arg4[%c118_358, %c0_359] : memref<128x128xf32, #tpu.memory_space<vmem>>, vector<1x128xf32>
    %714 = vector.broadcast %712 : vector<16x1xf32> to vector<16x128xf32>
    %715 = vector.broadcast %713 : vector<1x128xf32> to vector<16x128xf32>
    %716 = arith.addf %714, %715 : vector<16x128xf32>
    %717 = arith.maximumf %711, %716 : vector<16x128xf32>
    %c0_360 = arith.constant 0 : index
    %c119 = arith.constant 119 : index
    %718 = vector.load %arg3[%c0_360, %c119] : memref<16x128xf32, #tpu.memory_space<vmem>>, vector<16x1xf32>
    %c119_361 = arith.constant 119 : index
    %c0_362 = arith.constant 0 : index
    %719 = vector.load %arg4[%c119_361, %c0_362] : memref<128x128xf32, #tpu.memory_space<vmem>>, vector<1x128xf32>
    %720 = vector.broadcast %718 : vector<16x1xf32> to vector<16x128xf32>
    %721 = vector.broadcast %719 : vector<1x128xf32> to vector<16x128xf32>
    %722 = arith.addf %720, %721 : vector<16x128xf32>
    %723 = arith.maximumf %717, %722 : vector<16x128xf32>
    %c0_363 = arith.constant 0 : index
    %c120 = arith.constant 120 : index
    %724 = vector.load %arg3[%c0_363, %c120] : memref<16x128xf32, #tpu.memory_space<vmem>>, vector<16x1xf32>
    %c120_364 = arith.constant 120 : index
    %c0_365 = arith.constant 0 : index
    %725 = vector.load %arg4[%c120_364, %c0_365] : memref<128x128xf32, #tpu.memory_space<vmem>>, vector<1x128xf32>
    %726 = vector.broadcast %724 : vector<16x1xf32> to vector<16x128xf32>
    %727 = vector.broadcast %725 : vector<1x128xf32> to vector<16x128xf32>
    %728 = arith.addf %726, %727 : vector<16x128xf32>
    %729 = arith.maximumf %723, %728 : vector<16x128xf32>
    %c0_366 = arith.constant 0 : index
    %c121 = arith.constant 121 : index
    %730 = vector.load %arg3[%c0_366, %c121] : memref<16x128xf32, #tpu.memory_space<vmem>>, vector<16x1xf32>
    %c121_367 = arith.constant 121 : index
    %c0_368 = arith.constant 0 : index
    %731 = vector.load %arg4[%c121_367, %c0_368] : memref<128x128xf32, #tpu.memory_space<vmem>>, vector<1x128xf32>
    %732 = vector.broadcast %730 : vector<16x1xf32> to vector<16x128xf32>
    %733 = vector.broadcast %731 : vector<1x128xf32> to vector<16x128xf32>
    %734 = arith.addf %732, %733 : vector<16x128xf32>
    %735 = arith.maximumf %729, %734 : vector<16x128xf32>
    %c0_369 = arith.constant 0 : index
    %c122 = arith.constant 122 : index
    %736 = vector.load %arg3[%c0_369, %c122] : memref<16x128xf32, #tpu.memory_space<vmem>>, vector<16x1xf32>
    %c122_370 = arith.constant 122 : index
    %c0_371 = arith.constant 0 : index
    %737 = vector.load %arg4[%c122_370, %c0_371] : memref<128x128xf32, #tpu.memory_space<vmem>>, vector<1x128xf32>
    %738 = vector.broadcast %736 : vector<16x1xf32> to vector<16x128xf32>
    %739 = vector.broadcast %737 : vector<1x128xf32> to vector<16x128xf32>
    %740 = arith.addf %738, %739 : vector<16x128xf32>
    %741 = arith.maximumf %735, %740 : vector<16x128xf32>
    %c0_372 = arith.constant 0 : index
    %c123 = arith.constant 123 : index
    %742 = vector.load %arg3[%c0_372, %c123] : memref<16x128xf32, #tpu.memory_space<vmem>>, vector<16x1xf32>
    %c123_373 = arith.constant 123 : index
    %c0_374 = arith.constant 0 : index
    %743 = vector.load %arg4[%c123_373, %c0_374] : memref<128x128xf32, #tpu.memory_space<vmem>>, vector<1x128xf32>
    %744 = vector.broadcast %742 : vector<16x1xf32> to vector<16x128xf32>
    %745 = vector.broadcast %743 : vector<1x128xf32> to vector<16x128xf32>
    %746 = arith.addf %744, %745 : vector<16x128xf32>
    %747 = arith.maximumf %741, %746 : vector<16x128xf32>
    %c0_375 = arith.constant 0 : index
    %c124 = arith.constant 124 : index
    %748 = vector.load %arg3[%c0_375, %c124] : memref<16x128xf32, #tpu.memory_space<vmem>>, vector<16x1xf32>
    %c124_376 = arith.constant 124 : index
    %c0_377 = arith.constant 0 : index
    %749 = vector.load %arg4[%c124_376, %c0_377] : memref<128x128xf32, #tpu.memory_space<vmem>>, vector<1x128xf32>
    %750 = vector.broadcast %748 : vector<16x1xf32> to vector<16x128xf32>
    %751 = vector.broadcast %749 : vector<1x128xf32> to vector<16x128xf32>
    %752 = arith.addf %750, %751 : vector<16x128xf32>
    %753 = arith.maximumf %747, %752 : vector<16x128xf32>
    %c0_378 = arith.constant 0 : index
    %c125 = arith.constant 125 : index
    %754 = vector.load %arg3[%c0_378, %c125] : memref<16x128xf32, #tpu.memory_space<vmem>>, vector<16x1xf32>
    %c125_379 = arith.constant 125 : index
    %c0_380 = arith.constant 0 : index
    %755 = vector.load %arg4[%c125_379, %c0_380] : memref<128x128xf32, #tpu.memory_space<vmem>>, vector<1x128xf32>
    %756 = vector.broadcast %754 : vector<16x1xf32> to vector<16x128xf32>
    %757 = vector.broadcast %755 : vector<1x128xf32> to vector<16x128xf32>
    %758 = arith.addf %756, %757 : vector<16x128xf32>
    %759 = arith.maximumf %753, %758 : vector<16x128xf32>
    %c0_381 = arith.constant 0 : index
    %c126 = arith.constant 126 : index
    %760 = vector.load %arg3[%c0_381, %c126] : memref<16x128xf32, #tpu.memory_space<vmem>>, vector<16x1xf32>
    %c126_382 = arith.constant 126 : index
    %c0_383 = arith.constant 0 : index
    %761 = vector.load %arg4[%c126_382, %c0_383] : memref<128x128xf32, #tpu.memory_space<vmem>>, vector<1x128xf32>
    %762 = vector.broadcast %760 : vector<16x1xf32> to vector<16x128xf32>
    %763 = vector.broadcast %761 : vector<1x128xf32> to vector<16x128xf32>
    %764 = arith.addf %762, %763 : vector<16x128xf32>
    %765 = arith.maximumf %759, %764 : vector<16x128xf32>
    %c0_384 = arith.constant 0 : index
    %c127 = arith.constant 127 : index
    %766 = vector.load %arg3[%c0_384, %c127] : memref<16x128xf32, #tpu.memory_space<vmem>>, vector<16x1xf32>
    %c127_385 = arith.constant 127 : index
    %c0_386 = arith.constant 0 : index
    %767 = vector.load %arg4[%c127_385, %c0_386] : memref<128x128xf32, #tpu.memory_space<vmem>>, vector<1x128xf32>
    %768 = vector.broadcast %766 : vector<16x1xf32> to vector<16x128xf32>
    %769 = vector.broadcast %767 : vector<1x128xf32> to vector<16x128xf32>
    %770 = arith.addf %768, %769 : vector<16x128xf32>
    %771 = arith.maximumf %765, %770 : vector<16x128xf32>
    %c0_387 = arith.constant 0 : index
    %c0_388 = arith.constant 0 : index
    %772 = vector.load %arg6[%c0_387, %c0_388] : memref<16x128xf32, #tpu.memory_space<vmem>>, vector<16x128xf32>
    tpu.vector_store %arg6[%c0_387, %c0_388], %771 {strides = array<i32>} : memref<16x128xf32, #tpu.memory_space<vmem>>, vector<16x128xf32>,
    %c0_i32_389 = arith.constant 0 : i32
    %773 = arith.cmpi eq, %arg2, %c0_i32_389 : i32
    %774 = arith.extui %773 : i1 to i32
    %c0_i32_390 = arith.constant 0 : i32
    %775 = arith.cmpi ne, %774, %c0_i32_390 : i32
    scf.if %775 {
      %c0_391 = arith.constant 0 : index
      %c0_392 = arith.constant 0 : index
      %776 = vector.load %arg5[%c0_391, %c0_392] : memref<16x128xf32, #tpu.memory_space<vmem>>, vector<16x128xf32>
      tpu.vector_store %arg5[%c0_391, %c0_392], %771 {strides = array<i32>} : memref<16x128xf32, #tpu.memory_space<vmem>>, vector<16x128xf32>,
    } else {
    }
    return
  }
  func.func @transform_0(%arg0: i32, %arg1: i32, %arg2: i32) -> (i32, i32) {
    %c0_i32 = arith.constant 0 : i32
    return %arg0, %arg2 : i32, i32
  }
  func.func @transform_1(%arg0: i32, %arg1: i32, %arg2: i32) -> (i32, i32) {
    %c0_i32 = arith.constant 0 : i32
    return %arg2, %arg1 : i32, i32
  }
  func.func @transform_2(%arg0: i32, %arg1: i32, %arg2: i32) -> (i32, i32) {
    %c0_i32 = arith.constant 0 : i32
    return %arg0, %arg1 : i32, i32
  }
}

</mosaic_0001>

<llo_original>
// kernel: hnet_max.1
$region0: #{hnet_max.1}
  #allocation0 [shape = 'u32[]', space=smem, size = 0x4, offset = 0x4, fixed_abs, tag = 'smem constant byte address 0x4 - core index']
  #allocation1 [shape = 'u32[144,128]{1,0:T(1,128)}', space=vmem, size = 0x12000, scoped, tag = 'internal scratch']
  #allocation2 [shape = 'f32[16,128]{1,0:T(8,128)}', space=vmem, size = 0x2000, scoped, tag = 'scratch operand']
  %s0 = inlined_call_operand.vmem [shape: f32[16,128], index: 0, kind: input, shape index: {}]
  %s1 = inlined_call_operand.vmem [shape: f32[128,128], index: 1, kind: input, shape index: {}]
  %s2 = inlined_call_operand.hbm [shape: f32[16,128], index: 2, kind: output, shape index: {}]
  %s3 = sld [smem:[#allocation0]]
  $region26: #{hnet_max.1} parent=0
    _
  %s5 = ssub.s32 1, %s3
  %s6 = scalar_select 0, %s5, %s3
  $region1: #{hnet_max.1} parent=0
    #allocation3 [shape = 'u8[8192]{0}', space=vmem, size = 0x2000, scoped, tag = 'output window, operand 0, single buffered']
    #allocation4 [shape = 's32[1]{0}', space=sflag, size = 0x4, scoped, tag = 'scoped memory for hnet_max.1']
    %7 = vsyncpa [#allocation4], 0
    // Predicated region
    $region2: #{hnet_max.1} parent=1 // pred_check
      _
    $region3: #{hnet_max.1} parent=1 // pred_check_branch
      %9 = sbr.rel (0) target = $region5
    $region4: #{hnet_max.1} parent=1 // pred_region
      _
    $region5: #{hnet_max.1} parent=1 // pred_fallthru
      _
    // Predicated region
    $region6: #{hnet_max.1} parent=1 // pred_check
      _
    $region7: #{hnet_max.1} parent=1 // pred_check_branch
      %11 = sbr.rel (0) target = $region9
    $region8: #{hnet_max.1} parent=1 // pred_region
      _
    $region9: #{hnet_max.1} parent=1 // pred_fallthru
      _
    %p12 = scmp.eq.s32.totalorder 0, 0
    // Predicated region
    $region10: #{hnet_max.1} parent=1 // pred_check
      %p13 = pneg %p12
    $region11: #{hnet_max.1} parent=1 // pred_check_branch
      %15 = sbr.rel (%p13) target = $region13
    $region12: #{hnet_max.1} parent=1 // pred_region
      %16 = vst [vmem:[#allocation2] sm:$0xff] -3e+38
      %17 = vst [vmem:[#allocation2 + $0x8] sm:$0xff] -3e+38
    $region13: #{hnet_max.1} parent=1 // pred_fallthru
      _
    %v18 = vld [vmem:[#allocation2] sm:$0xff]
    %v19 = vld [vmem:[#allocation2 + $0x8] sm:$0xff]
    %v20 = vld [vmem:[%s0] sm:$0xff]
    %v21 = vld [vmem:[%s0 + $0x8] sm:$0xff]
    %v22 = vld [vmem:[%s1] sm:$0x1]
    %24 = vset.pattern.permute.xlu0 0
    %25 = vperm.xlu0 %24, %v20
    %v26 = vpop.permute.xlu0 %25
    %29 = vset.pattern.permute.xlu0 0
    %30 = vperm.xlu0 %29, %v21
    %v31 = vpop.permute.xlu0 %30
    %v33 = vlaneseq
    %v34 = vshrl.u32 %v33, 7
    %v35 = vsub.s32 0, %v34
    %v36 = vrot.slane %v22, %v35
    %v37 = vadd.f32 %v26, %v36
    %v38 = vadd.f32 %v31, %v36
    %v39 = vmax.f32 %v18, %v37
    %v40 = vmax.f32 %v19, %v38
    %v41 = vld [vmem:[%s1 + $0x1] sm:$0x1]
    %42 = vset.pattern.permute.xlu0 1
    %43 = vperm.xlu0 %42, %v20
    %v44 = vpop.permute.xlu0 %43
    %46 = vset.pattern.permute.xlu0 1
    %47 = vperm.xlu0 %46, %v21
    %v48 = vpop.permute.xlu0 %47
    %v50 = vlaneseq
    %v51 = vshrl.u32 %v50, 7
    %v52 = vsub.s32 0, %v51
    %v53 = vrot.slane %v41, %v52
    %v54 = vadd.f32 %v44, %v53
    %v55 = vadd.f32 %v48, %v53
    %v56 = vmax.f32 %v39, %v54
    %v57 = vmax.f32 %v40, %v55
    %v58 = vld [vmem:[%s1 + $0x2] sm:$0x1]
    %59 = vset.pattern.permute.xlu0 2
    %60 = vperm.xlu0 %59, %v20
    %v61 = vpop.permute.xlu0 %60
    %63 = vset.pattern.permute.xlu0 2
    %64 = vperm.xlu0 %63, %v21
    %v65 = vpop.permute.xlu0 %64
    %v67 = vlaneseq
    %v68 = vshrl.u32 %v67, 7
    %v69 = vsub.s32 0, %v68
    %v70 = vrot.slane %v58, %v69
    %v71 = vadd.f32 %v61, %v70
    %v72 = vadd.f32 %v65, %v70
    %v73 = vmax.f32 %v56, %v71
    %v74 = vmax.f32 %v57, %v72
    %v75 = vld [vmem:[%s1 + $0x3] sm:$0x1]
    %76 = vset.pattern.permute.xlu0 3
    %77 = vperm.xlu0 %76, %v20
    %v78 = vpop.permute.xlu0 %77
    %80 = vset.pattern.permute.xlu0 3
    %81 = vperm.xlu0 %80, %v21
    %v82 = vpop.permute.xlu0 %81
    %v84 = vlaneseq
    %v85 = vshrl.u32 %v84, 7
    %v86 = vsub.s32 0, %v85
    %v87 = vrot.slane %v75, %v86
    %v88 = vadd.f32 %v78, %v87
    %v89 = vadd.f32 %v82, %v87
    %v90 = vmax.f32 %v73, %v88
    %v91 = vmax.f32 %v74, %v89
    %v92 = vld [vmem:[%s1 + $0x4] sm:$0x1]
    %93 = vset.pattern.permute.xlu0 4
    %94 = vperm.xlu0 %93, %v20
    %v95 = vpop.permute.xlu0 %94
    %97 = vset.pattern.permute.xlu0 4
    %98 = vperm.xlu0 %97, %v21
    %v99 = vpop.permute.xlu0 %98
    %v101 = vlaneseq
    %v102 = vshrl.u32 %v101, 7
    %v103 = vsub.s32 0, %v102
    %v104 = vrot.slane %v92, %v103
    %v105 = vadd.f32 %v95, %v104
    %v106 = vadd.f32 %v99, %v104
    %v107 = vmax.f32 %v90, %v105
    %v108 = vmax.f32 %v91, %v106
    %v109 = vld [vmem:[%s1 + $0x5] sm:$0x1]
    %110 = vset.pattern.permute.xlu0 5
    %111 = vperm.xlu0 %110, %v20
    %v112 = vpop.permute.xlu0 %111
    %114 = vset.pattern.permute.xlu0 5
    %115 = vperm.xlu0 %114, %v21
    %v116 = vpop.permute.xlu0 %115
    %v118 = vlaneseq
    %v119 = vshrl.u32 %v118, 7
    %v120 = vsub.s32 0, %v119
    %v121 = vrot.slane %v109, %v120
    %v122 = vadd.f32 %v112, %v121
    %v123 = vadd.f32 %v116, %v121
    %v124 = vmax.f32 %v107, %v122
    %v125 = vmax.f32 %v108, %v123
    %v126 = vld [vmem:[%s1 + $0x6] sm:$0x1]
    %127 = vset.pattern.permute.xlu0 6
    %128 = vperm.xlu0 %127, %v20
    %v129 = vpop.permute.xlu0 %128
    %131 = vset.pattern.permute.xlu0 6
    %132 = vperm.xlu0 %131, %v21
    %v133 = vpop.permute.xlu0 %132
    %v135 = vlaneseq
    %v136 = vshrl.u32 %v135, 7
    %v137 = vsub.s32 0, %v136
    %v138 = vrot.slane %v126, %v137
    %v139 = vadd.f32 %v129, %v138
    %v140 = vadd.f32 %v133, %v138
    %v141 = vmax.f32 %v124, %v139
    %v142 = vmax.f32 %v125, %v140
    %v143 = vld [vmem:[%s1 + $0x7] sm:$0x1]
    %144 = vset.pattern.permute.xlu0 7
    %145 = vperm.xlu0 %144, %v20
    %v146 = vpop.permute.xlu0 %145
    %148 = vset.pattern.permute.xlu0 7
    %149 = vperm.xlu0 %148, %v21
    %v150 = vpop.permute.xlu0 %149
    %v152 = vlaneseq
    %v153 = vshrl.u32 %v152, 7
    %v154 = vsub.s32 0, %v153
    %v155 = vrot.slane %v143, %v154
    %v156 = vadd.f32 %v146, %v155
    %v157 = vadd.f32 %v150, %v155
    %v158 = vmax.f32 %v141, %v156
    %v159 = vmax.f32 %v142, %v157
    %v160 = vld [vmem:[%s1 + $0x8] sm:$0x1]
    %161 = vset.pattern.permute.xlu0 8
    %162 = vperm.xlu0 %161, %v20
    %v163 = vpop.permute.xlu0 %162
    %165 = vset.pattern.permute.xlu0 8
    %166 = vperm.xlu0 %165, %v21
    %v167 = vpop.permute.xlu0 %166
    %v169 = vlaneseq
    %v170 = vshrl.u32 %v169, 7
    %v171 = vsub.s32 0, %v170
    %v172 = vrot.slane %v160, %v171
    %v173 = vadd.f32 %v163, %v172
    %v174 = vadd.f32 %v167, %v172
    %v175 = vmax.f32 %v158, %v173
    %v176 = vmax.f32 %v159, %v174
    %v177 = vld [vmem:[%s1 + $0x9] sm:$0x1]
    %178 = vset.pattern.permute.xlu0 9
    %179 = vperm.xlu0 %178, %v20
    %v180 = vpop.permute.xlu0 %179
    %182 = vset.pattern.permute.xlu0 9
    %183 = vperm.xlu0 %182, %v21
    %v184 = vpop.permute.xlu0 %183
    %v186 = vlaneseq
    %v187 = vshrl.u32 %v186, 7
    %v188 = vsub.s32 0, %v187
    %v189 = vrot.slane %v177, %v188
    %v190 = vadd.f32 %v180, %v189
    %v191 = vadd.f32 %v184, %v189
    %v192 = vmax.f32 %v175, %v190
    %v193 = vmax.f32 %v176, %v191
    %v194 = vld [vmem:[%s1 + $0xa] sm:$0x1]
    %195 = vset.pattern.permute.xlu0 10
    %196 = vperm.xlu0 %195, %v20
    %v197 = vpop.permute.xlu0 %196
    %199 = vset.pattern.permute.xlu0 10
    %200 = vperm.xlu0 %199, %v21
    %v201 = vpop.permute.xlu0 %200
    %v203 = vlaneseq
    %v204 = vshrl.u32 %v203, 7
    %v205 = vsub.s32 0, %v204
    %v206 = vrot.slane %v194, %v205
    %v207 = vadd.f32 %v197, %v206
    %v208 = vadd.f32 %v201, %v206
    %v209 = vmax.f32 %v192, %v207
    %v210 = vmax.f32 %v193, %v208
    %v211 = vld [vmem:[%s1 + $0xb] sm:$0x1]
    %212 = vset.pattern.permute.xlu0 11
    %213 = vperm.xlu0 %212, %v20
    %v214 = vpop.permute.xlu0 %213
    %216 = vset.pattern.permute.xlu0 11
    %217 = vperm.xlu0 %216, %v21
    %v218 = vpop.permute.xlu0 %217
    %v220 = vlaneseq
    %v221 = vshrl.u32 %v220, 7
    %v222 = vsub.s32 0, %v221
    %v223 = vrot.slane %v211, %v222
    %v224 = vadd.f32 %v214, %v223
    %v225 = vadd.f32 %v218, %v223
    %v226 = vmax.f32 %v209, %v224
    %v227 = vmax.f32 %v210, %v225
    %v228 = vld [vmem:[%s1 + $0xc] sm:$0x1]
    %229 = vset.pattern.permute.xlu0 12
    %230 = vperm.xlu0 %229, %v20
    %v231 = vpop.permute.xlu0 %230
    %233 = vset.pattern.permute.xlu0 12
    %234 = vperm.xlu0 %233, %v21
    %v235 = vpop.permute.xlu0 %234
    %v237 = vlaneseq
    %v238 = vshrl.u32 %v237, 7
    %v239 = vsub.s32 0, %v238
    %v240 = vrot.slane %v228, %v239
    %v241 = vadd.f32 %v231, %v240
    %v242 = vadd.f32 %v235, %v240
    %v243 = vmax.f32 %v226, %v241
    %v244 = vmax.f32 %v227, %v242
    %v245 = vld [vmem:[%s1 + $0xd] sm:$0x1]
    %246 = vset.pattern.permute.xlu0 13
    %247 = vperm.xlu0 %246, %v20
    %v248 = vpop.permute.xlu0 %247
    %250 = vset.pattern.permute.xlu0 13
    %251 = vperm.xlu0 %250, %v21
    %v252 = vpop.permute.xlu0 %251
    %v254 = vlaneseq
    %v255 = vshrl.u32 %v254, 7
    %v256 = vsub.s32 0, %v255
    %v257 = vrot.slane %v245, %v256
    %v258 = vadd.f32 %v248, %v257
    %v259 = vadd.f32 %v252, %v257
    %v260 = vmax.f32 %v243, %v258
    %v261 = vmax.f32 %v244, %v259
    %v262 = vld [vmem:[%s1 + $0xe] sm:$0x1]
    %263 = vset.pattern.permute.xlu0 14
    %264 = vperm.xlu0 %263, %v20
    %v265 = vpop.permute.xlu0 %264
    %267 = vset.pattern.permute.xlu0 14
    %268 = vperm.xlu0 %267, %v21
    %v269 = vpop.permute.xlu0 %268
    %v271 = vlaneseq
    %v272 = vshrl.u32 %v271, 7
    %v273 = vsub.s32 0, %v272
    %v274 = vrot.slane %v262, %v273
    %v275 = vadd.f32 %v265, %v274
    %v276 = vadd.f32 %v269, %v274
    %v277 = vmax.f32 %v260, %v275
    %v278 = vmax.f32 %v261, %v276
    %v279 = vld [vmem:[%s1 + $0xf] sm:$0x1]
    %280 = vset.pattern.permute.xlu0 15
    %281 = vperm.xlu0 %280, %v20
    %v282 = vpop.permute.xlu0 %281
    %284 = vset.pattern.permute.xlu0 15
    %285 = vperm.xlu0 %284, %v21
    %v286 = vpop.permute.xlu0 %285
    %v288 = vlaneseq
    %v289 = vshrl.u32 %v288, 7
    %v290 = vsub.s32 0, %v289
    %v291 = vrot.slane %v279, %v290
    %v292 = vadd.f32 %v282, %v291
    %v293 = vadd.f32 %v286, %v291
    %v294 = vmax.f32 %v277, %v292
    %v295 = vmax.f32 %v278, %v293
    %v296 = vld [vmem:[%s1 + $0x10] sm:$0x1]
    %297 = vset.pattern.permute.xlu0 16
    %298 = vperm.xlu0 %297, %v20
    %v299 = vpop.permute.xlu0 %298
    %301 = vset.pattern.permute.xlu0 16
    %302 = vperm.xlu0 %301, %v21
    %v303 = vpop.permute.xlu0 %302
    %v305 = vlaneseq
    %v306 = vshrl.u32 %v305, 7
    %v307 = vsub.s32 0, %v306
    %v308 = vrot.slane %v296, %v307
    %v309 = vadd.f32 %v299, %v308
    %v310 = vadd.f32 %v303, %v308
    %v311 = vmax.f32 %v294, %v309
    %v312 = vmax.f32 %v295, %v310
    %v313 = vld [vmem:[%s1 + $0x11] sm:$0x1]
    %314 = vset.pattern.permute.xlu0 17
    %315 = vperm.xlu0 %314, %v20
    %v316 = vpop.permute.xlu0 %315
    %318 = vset.pattern.permute.xlu0 17
    %319 = vperm.xlu0 %318, %v21
    %v320 = vpop.permute.xlu0 %319
    %v322 = vlaneseq
    %v323 = vshrl.u32 %v322, 7
    %v324 = vsub.s32 0, %v323
    %v325 = vrot.slane %v313, %v324
    %v326 = vadd.f32 %v316, %v325
    %v327 = vadd.f32 %v320, %v325
    %v328 = vmax.f32 %v311, %v326
    %v329 = vmax.f32 %v312, %v327
    %v330 = vld [vmem:[%s1 + $0x12] sm:$0x1]
    %331 = vset.pattern.permute.xlu0 18
    %332 = vperm.xlu0 %331, %v20
    %v333 = vpop.permute.xlu0 %332
    %335 = vset.pattern.permute.xlu0 18
    %336 = vperm.xlu0 %335, %v21
    %v337 = vpop.permute.xlu0 %336
    %v339 = vlaneseq
    %v340 = vshrl.u32 %v339, 7
    %v341 = vsub.s32 0, %v340
    %v342 = vrot.slane %v330, %v341
    %v343 = vadd.f32 %v333, %v342
    %v344 = vadd.f32 %v337, %v342
    %v345 = vmax.f32 %v328, %v343
    %v346 = vmax.f32 %v329, %v344
    %v347 = vld [vmem:[%s1 + $0x13] sm:$0x1]
    %348 = vset.pattern.permute.xlu0 19
    %349 = vperm.xlu0 %348, %v20
    %v350 = vpop.permute.xlu0 %349
    %352 = vset.pattern.permute.xlu0 19
    %353 = vperm.xlu0 %352, %v21
    %v354 = vpop.permute.xlu0 %353
    %v356 = vlaneseq
    %v357 = vshrl.u32 %v356, 7
    %v358 = vsub.s32 0, %v357
    %v359 = vrot.slane %v347, %v358
    %v360 = vadd.f32 %v350, %v359
    %v361 = vadd.f32 %v354, %v359
    %v362 = vmax.f32 %v345, %v360
    %v363 = vmax.f32 %v346, %v361
    %v364 = vld [vmem:[%s1 + $0x14] sm:$0x1]
    %365 = vset.pattern.permute.xlu0 20
    %366 = vperm.xlu0 %365, %v20
    %v367 = vpop.permute.xlu0 %366
    %369 = vset.pattern.permute.xlu0 20
    %370 = vperm.xlu0 %369, %v21
    %v371 = vpop.permute.xlu0 %370
    %v373 = vlaneseq
    %v374 = vshrl.u32 %v373, 7
    %v375 = vsub.s32 0, %v374
    %v376 = vrot.slane %v364, %v375
    %v377 = vadd.f32 %v367, %v376
    %v378 = vadd.f32 %v371, %v376
    %v379 = vmax.f32 %v362, %v377
    %v380 = vmax.f32 %v363, %v378
    %v381 = vld [vmem:[%s1 + $0x15] sm:$0x1]
    %382 = vset.pattern.permute.xlu0 21
    %383 = vperm.xlu0 %382, %v20
    %v384 = vpop.permute.xlu0 %383
    %386 = vset.pattern.permute.xlu0 21
    %387 = vperm.xlu0 %386, %v21
    %v388 = vpop.permute.xlu0 %387
    %v390 = vlaneseq
    %v391 = vshrl.u32 %v390, 7
    %v392 = vsub.s32 0, %v391
    %v393 = vrot.slane %v381, %v392
    %v394 = vadd.f32 %v384, %v393
    %v395 = vadd.f32 %v388, %v393
    %v396 = vmax.f32 %v379, %v394
    %v397 = vmax.f32 %v380, %v395
    %v398 = vld [vmem:[%s1 + $0x16] sm:$0x1]
    %399 = vset.pattern.permute.xlu0 22
    %400 = vperm.xlu0 %399, %v20
    %v401 = vpop.permute.xlu0 %400
    %403 = vset.pattern.permute.xlu0 22
    %404 = vperm.xlu0 %403, %v21
    %v405 = vpop.permute.xlu0 %404
    %v407 = vlaneseq
    %v408 = vshrl.u32 %v407, 7
    %v409 = vsub.s32 0, %v408
    %v410 = vrot.slane %v398, %v409
    %v411 = vadd.f32 %v401, %v410
    %v412 = vadd.f32 %v405, %v410
    %v413 = vmax.f32 %v396, %v411
    %v414 = vmax.f32 %v397, %v412
    %v415 = vld [vmem:[%s1 + $0x17] sm:$0x1]
    %416 = vset.pattern.permute.xlu0 23
    %417 = vperm.xlu0 %416, %v20
    %v418 = vpop.permute.xlu0 %417
    %420 = vset.pattern.permute.xlu0 23
    %421 = vperm.xlu0 %420, %v21
    %v422 = vpop.permute.xlu0 %421
    %v424 = vlaneseq
    %v425 = vshrl.u32 %v424, 7
    %v426 = vsub.s32 0, %v425
    %v427 = vrot.slane %v415, %v426
    %v428 = vadd.f32 %v418, %v427
    %v429 = vadd.f32 %v422, %v427
    %v430 = vmax.f32 %v413, %v428
    %v431 = vmax.f32 %v414, %v429
    %v432 = vld [vmem:[%s1 + $0x18] sm:$0x1]
    %433 = vset.pattern.permute.xlu0 24
    %434 = vperm.xlu0 %433, %v20
    %v435 = vpop.permute.xlu0 %434
    %437 = vset.pattern.permute.xlu0 24
    %438 = vperm.xlu0 %437, %v21
    %v439 = vpop.permute.xlu0 %438
    %v441 = vlaneseq
    %v442 = vshrl.u32 %v441, 7
    %v443 = vsub.s32 0, %v442
    %v444 = vrot.slane %v432, %v443
    %v445 = vadd.f32 %v435, %v444
    %v446 = vadd.f32 %v439, %v444
    %v447 = vmax.f32 %v430, %v445
    %v448 = vmax.f32 %v431, %v446
    %v449 = vld [vmem:[%s1 + $0x19] sm:$0x1]
    %450 = vset.pattern.permute.xlu0 25
    %451 = vperm.xlu0 %450, %v20
    %v452 = vpop.permute.xlu0 %451
    %454 = vset.pattern.permute.xlu0 25
    %455 = vperm.xlu0 %454, %v21
    %v456 = vpop.permute.xlu0 %455
    %v458 = vlaneseq
    %v459 = vshrl.u32 %v458, 7
    %v460 = vsub.s32 0, %v459
    %v461 = vrot.slane %v449, %v460
    %v462 = vadd.f32 %v452, %v461
    %v463 = vadd.f32 %v456, %v461
    %v464 = vmax.f32 %v447, %v462
    %v465 = vmax.f32 %v448, %v463
    %v466 = vld [vmem:[%s1 + $0x1a] sm:$0x1]
    %467 = vset.pattern.permute.xlu0 26
    %468 = vperm.xlu0 %467, %v20
    %v469 = vpop.permute.xlu0 %468
    %471 = vset.pattern.permute.xlu0 26
    %472 = vperm.xlu0 %471, %v21
    %v473 = vpop.permute.xlu0 %472
    %v475 = vlaneseq
    %v476 = vshrl.u32 %v475, 7
    %v477 = vsub.s32 0, %v476
    %v478 = vrot.slane %v466, %v477
    %v479 = vadd.f32 %v469, %v478
    %v480 = vadd.f32 %v473, %v478
    %v481 = vmax.f32 %v464, %v479
    %v482 = vmax.f32 %v465, %v480
    %v483 = vld [vmem:[%s1 + $0x1b] sm:$0x1]
    %484 = vset.pattern.permute.xlu0 27
    %485 = vperm.xlu0 %484, %v20
    %v486 = vpop.permute.xlu0 %485
    %488 = vset.pattern.permute.xlu0 27
    %489 = vperm.xlu0 %488, %v21
    %v490 = vpop.permute.xlu0 %489
    %v492 = vlaneseq
    %v493 = vshrl.u32 %v492, 7
    %v494 = vsub.s32 0, %v493
    %v495 = vrot.slane %v483, %v494
    %v496 = vadd.f32 %v486, %v495
    %v497 = vadd.f32 %v490, %v495
    %v498 = vmax.f32 %v481, %v496
    %v499 = vmax.f32 %v482, %v497
    %v500 = vld [vmem:[%s1 + $0x1c] sm:$0x1]
    %501 = vset.pattern.permute.xlu0 28
    %502 = vperm.xlu0 %501, %v20
    %v503 = vpop.permute.xlu0 %502
    %505 = vset.pattern.permute.xlu0 28
    %506 = vperm.xlu0 %505, %v21
    %v507 = vpop.permute.xlu0 %506
    %v509 = vlaneseq
    %v510 = vshrl.u32 %v509, 7
    %v511 = vsub.s32 0, %v510
    %v512 = vrot.slane %v500, %v511
    %v513 = vadd.f32 %v503, %v512
    %v514 = vadd.f32 %v507, %v512
    %v515 = vmax.f32 %v498, %v513
    %v516 = vmax.f32 %v499, %v514
    %v517 = vld [vmem:[%s1 + $0x1d] sm:$0x1]
    %518 = vset.pattern.permute.xlu0 29
    %519 = vperm.xlu0 %518, %v20
    %v520 = vpop.permute.xlu0 %519
    %522 = vset.pattern.permute.xlu0 29
    %523 = vperm.xlu0 %522, %v21
    %v524 = vpop.permute.xlu0 %523
    %v526 = vlaneseq
    %v527 = vshrl.u32 %v526, 7
    %v528 = vsub.s32 0, %v527
    %v529 = vrot.slane %v517, %v528
    %v530 = vadd.f32 %v520, %v529
    %v531 = vadd.f32 %v524, %v529
    %v532 = vmax.f32 %v515, %v530
    %v533 = vmax.f32 %v516, %v531
    %v534 = vld [vmem:[%s1 + $0x1e] sm:$0x1]
    %535 = vset.pattern.permute.xlu0 30
    %536 = vperm.xlu0 %535, %v20
    %v537 = vpop.permute.xlu0 %536
    %539 = vset.pattern.permute.xlu0 30
    %540 = vperm.xlu0 %539, %v21
    %v541 = vpop.permute.xlu0 %540
    %v543 = vlaneseq
    %v544 = vshrl.u32 %v543, 7
    %v545 = vsub.s32 0, %v544
    %v546 = vrot.slane %v534, %v545
    %v547 = vadd.f32 %v537, %v546
    %v548 = vadd.f32 %v541, %v546
    %v549 = vmax.f32 %v532, %v547
    %v550 = vmax.f32 %v533, %v548
    %v551 = vld [vmem:[%s1 + $0x1f] sm:$0x1]
    %552 = vset.pattern.permute.xlu0 31
    %553 = vperm.xlu0 %552, %v20
    %v554 = vpop.permute.xlu0 %553
    %556 = vset.pattern.permute.xlu0 31
    %557 = vperm.xlu0 %556, %v21
    %v558 = vpop.permute.xlu0 %557
    %v560 = vlaneseq
    %v561 = vshrl.u32 %v560, 7
    %v562 = vsub.s32 0, %v561
    %v563 = vrot.slane %v551, %v562
    %v564 = vadd.f32 %v554, %v563
    %v565 = vadd.f32 %v558, %v563
    %v566 = vmax.f32 %v549, %v564
    %v567 = vmax.f32 %v550, %v565
    %v568 = vld [vmem:[%s1 + $0x20] sm:$0x1]
    %569 = vset.pattern.permute.xlu0 32
    %570 = vperm.xlu0 %569, %v20
    %v571 = vpop.permute.xlu0 %570
    %573 = vset.pattern.permute.xlu0 32
    %574 = vperm.xlu0 %573, %v21
    %v575 = vpop.permute.xlu0 %574
    %v577 = vlaneseq
    %v578 = vshrl.u32 %v577, 7
    %v579 = vsub.s32 0, %v578
    %v580 = vrot.slane %v568, %v579
    %v581 = vadd.f32 %v571, %v580
    %v582 = vadd.f32 %v575, %v580
    %v583 = vmax.f32 %v566, %v581
    %v584 = vmax.f32 %v567, %v582
    %v585 = vld [vmem:[%s1 + $0x21] sm:$0x1]
    %586 = vset.pattern.permute.xlu0 33
    %587 = vperm.xlu0 %586, %v20
    %v588 = vpop.permute.xlu0 %587
    %590 = vset.pattern.permute.xlu0 33
    %591 = vperm.xlu0 %590, %v21
    %v592 = vpop.permute.xlu0 %591
    %v594 = vlaneseq
    %v595 = vshrl.u32 %v594, 7
    %v596 = vsub.s32 0, %v595
    %v597 = vrot.slane %v585, %v596
    %v598 = vadd.f32 %v588, %v597
    %v599 = vadd.f32 %v592, %v597
    %v600 = vmax.f32 %v583, %v598
    %v601 = vmax.f32 %v584, %v599
    %v602 = vld [vmem:[%s1 + $0x22] sm:$0x1]
    %603 = vset.pattern.permute.xlu0 34
    %604 = vperm.xlu0 %603, %v20
    %v605 = vpop.permute.xlu0 %604
    %607 = vset.pattern.permute.xlu0 34
    %608 = vperm.xlu0 %607, %v21
    %v609 = vpop.permute.xlu0 %608
    %v611 = vlaneseq
    %v612 = vshrl.u32 %v611, 7
    %v613 = vsub.s32 0, %v612
    %v614 = vrot.slane %v602, %v613
    %v615 = vadd.f32 %v605, %v614
    %v616 = vadd.f32 %v609, %v614
    %v617 = vmax.f32 %v600, %v615
    %v618 = vmax.f32 %v601, %v616
    %v619 = vld [vmem:[%s1 + $0x23] sm:$0x1]
    %620 = vset.pattern.permute.xlu0 35
    %621 = vperm.xlu0 %620, %v20
    %v622 = vpop.permute.xlu0 %621
    %624 = vset.pattern.permute.xlu0 35
    %625 = vperm.xlu0 %624, %v21
    %v626 = vpop.permute.xlu0 %625
    %v628 = vlaneseq
    %v629 = vshrl.u32 %v628, 7
    %v630 = vsub.s32 0, %v629
    %v631 = vrot.slane %v619, %v630
    %v632 = vadd.f32 %v622, %v631
    %v633 = vadd.f32 %v626, %v631
    %v634 = vmax.f32 %v617, %v632
    %v635 = vmax.f32 %v618, %v633
    %v636 = vld [vmem:[%s1 + $0x24] sm:$0x1]
    %637 = vset.pattern.permute.xlu0 36
    %638 = vperm.xlu0 %637, %v20
    %v639 = vpop.permute.xlu0 %638
    %641 = vset.pattern.permute.xlu0 36
    %642 = vperm.xlu0 %641, %v21
    %v643 = vpop.permute.xlu0 %642
    %v645 = vlaneseq
    %v646 = vshrl.u32 %v645, 7
    %v647 = vsub.s32 0, %v646
    %v648 = vrot.slane %v636, %v647
    %v649 = vadd.f32 %v639, %v648
    %v650 = vadd.f32 %v643, %v648
    %v651 = vmax.f32 %v634, %v649
    %v652 = vmax.f32 %v635, %v650
    %v653 = vld [vmem:[%s1 + $0x25] sm:$0x1]
    %654 = vset.pattern.permute.xlu0 37
    %655 = vperm.xlu0 %654, %v20
    %v656 = vpop.permute.xlu0 %655
    %658 = vset.pattern.permute.xlu0 37
    %659 = vperm.xlu0 %658, %v21
    %v660 = vpop.permute.xlu0 %659
    %v662 = vlaneseq
    %v663 = vshrl.u32 %v662, 7
    %v664 = vsub.s32 0, %v663
    %v665 = vrot.slane %v653, %v664
    %v666 = vadd.f32 %v656, %v665
    %v667 = vadd.f32 %v660, %v665
    %v668 = vmax.f32 %v651, %v666
    %v669 = vmax.f32 %v652, %v667
    %v670 = vld [vmem:[%s1 + $0x26] sm:$0x1]
    %671 = vset.pattern.permute.xlu0 38
    %672 = vperm.xlu0 %671, %v20
    %v673 = vpop.permute.xlu0 %672
    %675 = vset.pattern.permute.xlu0 38
    %676 = vperm.xlu0 %675, %v21
    %v677 = vpop.permute.xlu0 %676
    %v679 = vlaneseq
    %v680 = vshrl.u32 %v679, 7
    %v681 = vsub.s32 0, %v680
    %v682 = vrot.slane %v670, %v681
    %v683 = vadd.f32 %v673, %v682
    %v684 = vadd.f32 %v677, %v682
    %v685 = vmax.f32 %v668, %v683
    %v686 = vmax.f32 %v669, %v684
    %v687 = vld [vmem:[%s1 + $0x27] sm:$0x1]
    %688 = vset.pattern.permute.xlu0 39
    %689 = vperm.xlu0 %688, %v20
    %v690 = vpop.permute.xlu0 %689
    %692 = vset.pattern.permute.xlu0 39
    %693 = vperm.xlu0 %692, %v21
    %v694 = vpop.permute.xlu0 %693
    %v696 = vlaneseq
    %v697 = vshrl.u32 %v696, 7
    %v698 = vsub.s32 0, %v697
    %v699 = vrot.slane %v687, %v698
    %v700 = vadd.f32 %v690, %v699
    %v701 = vadd.f32 %v694, %v699
    %v702 = vmax.f32 %v685, %v700
    %v703 = vmax.f32 %v686, %v701
    %v704 = vld [vmem:[%s1 + $0x28] sm:$0x1]
    %705 = vset.pattern.permute.xlu0 40
    %706 = vperm.xlu0 %705, %v20
    %v707 = vpop.permute.xlu0 %706
    %709 = vset.pattern.permute.xlu0 40
    %710 = vperm.xlu0 %709, %v21
    %v711 = vpop.permute.xlu0 %710
    %v713 = vlaneseq
    %v714 = vshrl.u32 %v713, 7
    %v715 = vsub.s32 0, %v714
    %v716 = vrot.slane %v704, %v715
    %v717 = vadd.f32 %v707, %v716
    %v718 = vadd.f32 %v711, %v716
    %v719 = vmax.f32 %v702, %v717
    %v720 = vmax.f32 %v703, %v718
    %v721 = vld [vmem:[%s1 + $0x29] sm:$0x1]
    %722 = vset.pattern.permute.xlu0 41
    %723 = vperm.xlu0 %722, %v20
    %v724 = vpop.permute.xlu0 %723
    %726 = vset.pattern.permute.xlu0 41
    %727 = vperm.xlu0 %726, %v21
    %v728 = vpop.permute.xlu0 %727
    %v730 = vlaneseq
    %v731 = vshrl.u32 %v730, 7
    %v732 = vsub.s32 0, %v731
    %v733 = vrot.slane %v721, %v732
    %v734 = vadd.f32 %v724, %v733
    %v735 = vadd.f32 %v728, %v733
    %v736 = vmax.f32 %v719, %v734
    %v737 = vmax.f32 %v720, %v735
    %v738 = vld [vmem:[%s1 + $0x2a] sm:$0x1]
    %739 = vset.pattern.permute.xlu0 42
    %740 = vperm.xlu0 %739, %v20
    %v741 = vpop.permute.xlu0 %740
    %743 = vset.pattern.permute.xlu0 42
    %744 = vperm.xlu0 %743, %v21
    %v745 = vpop.permute.xlu0 %744
    %v747 = vlaneseq
    %v748 = vshrl.u32 %v747, 7
    %v749 = vsub.s32 0, %v748
    %v750 = vrot.slane %v738, %v749
    %v751 = vadd.f32 %v741, %v750
    %v752 = vadd.f32 %v745, %v750
    %v753 = vmax.f32 %v736, %v751
    %v754 = vmax.f32 %v737, %v752
    %v755 = vld [vmem:[%s1 + $0x2b] sm:$0x1]
    %756 = vset.pattern.permute.xlu0 43
    %757 = vperm.xlu0 %756, %v20
    %v758 = vpop.permute.xlu0 %757
    %760 = vset.pattern.permute.xlu0 43
    %761 = vperm.xlu0 %760, %v21
    %v762 = vpop.permute.xlu0 %761
    %v764 = vlaneseq
    %v765 = vshrl.u32 %v764, 7
    %v766 = vsub.s32 0, %v765
    %v767 = vrot.slane %v755, %v766
    %v768 = vadd.f32 %v758, %v767
    %v769 = vadd.f32 %v762, %v767
    %v770 = vmax.f32 %v753, %v768
    %v771 = vmax.f32 %v754, %v769
    %v772 = vld [vmem:[%s1 + $0x2c] sm:$0x1]
    %773 = vset.pattern.permute.xlu0 44
    %774 = vperm.xlu0 %773, %v20
    %v775 = vpop.permute.xlu0 %774
    %777 = vset.pattern.permute.xlu0 44
    %778 = vperm.xlu0 %777, %v21
    %v779 = vpop.permute.xlu0 %778
    %v781 = vlaneseq
    %v782 = vshrl.u32 %v781, 7
    %v783 = vsub.s32 0, %v782
    %v784 = vrot.slane %v772, %v783
    %v785 = vadd.f32 %v775, %v784
    %v786 = vadd.f32 %v779, %v784
    %v787 = vmax.f32 %v770, %v785
    %v788 = vmax.f32 %v771, %v786
    %v789 = vld [vmem:[%s1 + $0x2d] sm:$0x1]
    %790 = vset.pattern.permute.xlu0 45
    %791 = vperm.xlu0 %790, %v20
    %v792 = vpop.permute.xlu0 %791
    %794 = vset.pattern.permute.xlu0 45
    %795 = vperm.xlu0 %794, %v21
    %v796 = vpop.permute.xlu0 %795
    %v798 = vlaneseq
    %v799 = vshrl.u32 %v798, 7
    %v800 = vsub.s32 0, %v799
    %v801 = vrot.slane %v789, %v800
    %v802 = vadd.f32 %v792, %v801
    %v803 = vadd.f32 %v796, %v801
    %v804 = vmax.f32 %v787, %v802
    %v805 = vmax.f32 %v788, %v803
    %v806 = vld [vmem:[%s1 + $0x2e] sm:$0x1]
    %807 = vset.pattern.permute.xlu0 46
    %808 = vperm.xlu0 %807, %v20
    %v809 = vpop.permute.xlu0 %808
    %811 = vset.pattern.permute.xlu0 46
    %812 = vperm.xlu0 %811, %v21
    %v813 = vpop.permute.xlu0 %812
    %v815 = vlaneseq
    %v816 = vshrl.u32 %v815, 7
    %v817 = vsub.s32 0, %v816
    %v818 = vrot.slane %v806, %v817
    %v819 = vadd.f32 %v809, %v818
    %v820 = vadd.f32 %v813, %v818
    %v821 = vmax.f32 %v804, %v819
    %v822 = vmax.f32 %v805, %v820
    %v823 = vld [vmem:[%s1 + $0x2f] sm:$0x1]
    %824 = vset.pattern.permute.xlu0 47
    %825 = vperm.xlu0 %824, %v20
    %v826 = vpop.permute.xlu0 %825
    %828 = vset.pattern.permute.xlu0 47
    %829 = vperm.xlu0 %828, %v21
    %v830 = vpop.permute.xlu0 %829
    %v832 = vlaneseq
    %v833 = vshrl.u32 %v832, 7
    %v834 = vsub.s32 0, %v833
    %v835 = vrot.slane %v823, %v834
    %v836 = vadd.f32 %v826, %v835
    %v837 = vadd.f32 %v830, %v835
    %v838 = vmax.f32 %v821, %v836
    %v839 = vmax.f32 %v822, %v837
    %v840 = vld [vmem:[%s1 + $0x30] sm:$0x1]
    %841 = vset.pattern.permute.xlu0 48
    %842 = vperm.xlu0 %841, %v20
    %v843 = vpop.permute.xlu0 %842
    %845 = vset.pattern.permute.xlu0 48
    %846 = vperm.xlu0 %845, %v21
    %v847 = vpop.permute.xlu0 %846
    %v849 = vlaneseq
    %v850 = vshrl.u32 %v849, 7
    %v851 = vsub.s32 0, %v850
    %v852 = vrot.slane %v840, %v851
    %v853 = vadd.f32 %v843, %v852
    %v854 = vadd.f32 %v847, %v852
    %v855 = vmax.f32 %v838, %v853
    %v856 = vmax.f32 %v839, %v854
    %v857 = vld [vmem:[%s1 + $0x31] sm:$0x1]
    %858 = vset.pattern.permute.xlu0 49
    %859 = vperm.xlu0 %858, %v20
    %v860 = vpop.permute.xlu0 %859
    %862 = vset.pattern.permute.xlu0 49
    %863 = vperm.xlu0 %862, %v21
    %v864 = vpop.permute.xlu0 %863
    %v866 = vlaneseq
    %v867 = vshrl.u32 %v866, 7
    %v868 = vsub.s32 0, %v867
    %v869 = vrot.slane %v857, %v868
    %v870 = vadd.f32 %v860, %v869
    %v871 = vadd.f32 %v864, %v869
    %v872 = vmax.f32 %v855, %v870
    %v873 = vmax.f32 %v856, %v871
    %v874 = vld [vmem:[%s1 + $0x32] sm:$0x1]
    %875 = vset.pattern.permute.xlu0 50
    %876 = vperm.xlu0 %875, %v20
    %v877 = vpop.permute.xlu0 %876
    %879 = vset.pattern.permute.xlu0 50
    %880 = vperm.xlu0 %879, %v21
    %v881 = vpop.permute.xlu0 %880
    %v883 = vlaneseq
    %v884 = vshrl.u32 %v883, 7
    %v885 = vsub.s32 0, %v884
    %v886 = vrot.slane %v874, %v885
    %v887 = vadd.f32 %v877, %v886
    %v888 = vadd.f32 %v881, %v886
    %v889 = vmax.f32 %v872, %v887
    %v890 = vmax.f32 %v873, %v888
    %v891 = vld [vmem:[%s1 + $0x33] sm:$0x1]
    %892 = vset.pattern.permute.xlu0 51
    %893 = vperm.xlu0 %892, %v20
    %v894 = vpop.permute.xlu0 %893
    %896 = vset.pattern.permute.xlu0 51
    %897 = vperm.xlu0 %896, %v21
    %v898 = vpop.permute.xlu0 %897
    %v900 = vlaneseq
    %v901 = vshrl.u32 %v900, 7
    %v902 = vsub.s32 0, %v901
    %v903 = vrot.slane %v891, %v902
    %v904 = vadd.f32 %v894, %v903
    %v905 = vadd.f32 %v898, %v903
    %v906 = vmax.f32 %v889, %v904
    %v907 = vmax.f32 %v890, %v905
    %v908 = vld [vmem:[%s1 + $0x34] sm:$0x1]
    %909 = vset.pattern.permute.xlu0 52
    %910 = vperm.xlu0 %909, %v20
    %v911 = vpop.permute.xlu0 %910
    %913 = vset.pattern.permute.xlu0 52
    %914 = vperm.xlu0 %913, %v21
    %v915 = vpop.permute.xlu0 %914
    %v917 = vlaneseq
    %v918 = vshrl.u32 %v917, 7
    %v919 = vsub.s32 0, %v918
    %v920 = vrot.slane %v908, %v919
    %v921 = vadd.f32 %v911, %v920
    %v922 = vadd.f32 %v915, %v920
    %v923 = vmax.f32 %v906, %v921
    %v924 = vmax.f32 %v907, %v922
    %v925 = vld [vmem:[%s1 + $0x35] sm:$0x1]
    %926 = vset.pattern.permute.xlu0 53
    %927 = vperm.xlu0 %926, %v20
    %v928 = vpop.permute.xlu0 %927
    %930 = vset.pattern.permute.xlu0 53
    %931 = vperm.xlu0 %930, %v21
    %v932 = vpop.permute.xlu0 %931
    %v934 = vlaneseq
    %v935 = vshrl.u32 %v934, 7
    %v936 = vsub.s32 0, %v935
    %v937 = vrot.slane %v925, %v936
    %v938 = vadd.f32 %v928, %v937
    %v939 = vadd.f32 %v932, %v937
    %v940 = vmax.f32 %v923, %v938
    %v941 = vmax.f32 %v924, %v939
    %v942 = vld [vmem:[%s1 + $0x36] sm:$0x1]
    %943 = vset.pattern.permute.xlu0 54
    %944 = vperm.xlu0 %943, %v20
    %v945 = vpop.permute.xlu0 %944
    %947 = vset.pattern.permute.xlu0 54
    %948 = vperm.xlu0 %947, %v21
    %v949 = vpop.permute.xlu0 %948
    %v951 = vlaneseq
    %v952 = vshrl.u32 %v951, 7
    %v953 = vsub.s32 0, %v952
    %v954 = vrot.slane %v942, %v953
    %v955 = vadd.f32 %v945, %v954
    %v956 = vadd.f32 %v949, %v954
    %v957 = vmax.f32 %v940, %v955
    %v958 = vmax.f32 %v941, %v956
    %v959 = vld [vmem:[%s1 + $0x37] sm:$0x1]
    %960 = vset.pattern.permute.xlu0 55
    %961 = vperm.xlu0 %960, %v20
    %v962 = vpop.permute.xlu0 %961
    %964 = vset.pattern.permute.xlu0 55
    %965 = vperm.xlu0 %964, %v21
    %v966 = vpop.permute.xlu0 %965
    %v968 = vlaneseq
    %v969 = vshrl.u32 %v968, 7
    %v970 = vsub.s32 0, %v969
    %v971 = vrot.slane %v959, %v970
    %v972 = vadd.f32 %v962, %v971
    %v973 = vadd.f32 %v966, %v971
    %v974 = vmax.f32 %v957, %v972
    %v975 = vmax.f32 %v958, %v973
    %v976 = vld [vmem:[%s1 + $0x38] sm:$0x1]
    %977 = vset.pattern.permute.xlu0 56
    %978 = vperm.xlu0 %977, %v20
    %v979 = vpop.permute.xlu0 %978
    %981 = vset.pattern.permute.xlu0 56
    %982 = vperm.xlu0 %981, %v21
    %v983 = vpop.permute.xlu0 %982
    %v985 = vlaneseq
    %v986 = vshrl.u32 %v985, 7
    %v987 = vsub.s32 0, %v986
    %v988 = vrot.slane %v976, %v987
    %v989 = vadd.f32 %v979, %v988
    %v990 = vadd.f32 %v983, %v988
    %v991 = vmax.f32 %v974, %v989
    %v992 = vmax.f32 %v975, %v990
    %v993 = vld [vmem:[%s1 + $0x39] sm:$0x1]
    %994 = vset.pattern.permute.xlu0 57
    %995 = vperm.xlu0 %994, %v20
    %v996 = vpop.permute.xlu0 %995
    %998 = vset.pattern.permute.xlu0 57
    %999 = vperm.xlu0 %998, %v21
    %v1000 = vpop.permute.xlu0 %999
    %v1002 = vlaneseq
    %v1003 = vshrl.u32 %v1002, 7
    %v1004 = vsub.s32 0, %v1003
    %v1005 = vrot.slane %v993, %v1004
    %v1006 = vadd.f32 %v996, %v1005
    %v1007 = vadd.f32 %v1000, %v1005
    %v1008 = vmax.f32 %v991, %v1006
    %v1009 = vmax.f32 %v992, %v1007
    %v1010 = vld [vmem:[%s1 + $0x3a] sm:$0x1]
    %1011 = vset.pattern.permute.xlu0 58
    %1012 = vperm.xlu0 %1011, %v20
    %v1013 = vpop.permute.xlu0 %1012
    %1015 = vset.pattern.permute.xlu0 58
    %1016 = vperm.xlu0 %1015, %v21
    %v1017 = vpop.permute.xlu0 %1016
    %v1019 = vlaneseq
    %v1020 = vshrl.u32 %v1019, 7
    %v1021 = vsub.s32 0, %v1020
    %v1022 = vrot.slane %v1010, %v1021
    %v1023 = vadd.f32 %v1013, %v1022
    %v1024 = vadd.f32 %v1017, %v1022
    %v1025 = vmax.f32 %v1008, %v1023
    %v1026 = vmax.f32 %v1009, %v1024
    %v1027 = vld [vmem:[%s1 + $0x3b] sm:$0x1]
    %1028 = vset.pattern.permute.xlu0 59
    %1029 = vperm.xlu0 %1028, %v20
    %v1030 = vpop.permute.xlu0 %1029
    %1032 = vset.pattern.permute.xlu0 59
    %1033 = vperm.xlu0 %1032, %v21
    %v1034 = vpop.permute.xlu0 %1033
    %v1036 = vlaneseq
    %v1037 = vshrl.u32 %v1036, 7
    %v1038 = vsub.s32 0, %v1037
    %v1039 = vrot.slane %v1027, %v1038
    %v1040 = vadd.f32 %v1030, %v1039
    %v1041 = vadd.f32 %v1034, %v1039
    %v1042 = vmax.f32 %v1025, %v1040
    %v1043 = vmax.f32 %v1026, %v1041
    %v1044 = vld [vmem:[%s1 + $0x3c] sm:$0x1]
    %1045 = vset.pattern.permute.xlu0 60
    %1046 = vperm.xlu0 %1045, %v20
    %v1047 = vpop.permute.xlu0 %1046
    %1049 = vset.pattern.permute.xlu0 60
    %1050 = vperm.xlu0 %1049, %v21
    %v1051 = vpop.permute.xlu0 %1050
    %v1053 = vlaneseq
    %v1054 = vshrl.u32 %v1053, 7
    %v1055 = vsub.s32 0, %v1054
    %v1056 = vrot.slane %v1044, %v1055
    %v1057 = vadd.f32 %v1047, %v1056
    %v1058 = vadd.f32 %v1051, %v1056
    %v1059 = vmax.f32 %v1042, %v1057
    %v1060 = vmax.f32 %v1043, %v1058
    %v1061 = vld [vmem:[%s1 + $0x3d] sm:$0x1]
    %1062 = vset.pattern.permute.xlu0 61
    %1063 = vperm.xlu0 %1062, %v20
    %v1064 = vpop.permute.xlu0 %1063
    %1066 = vset.pattern.permute.xlu0 61
    %1067 = vperm.xlu0 %1066, %v21
    %v1068 = vpop.permute.xlu0 %1067
    %v1070 = vlaneseq
    %v1071 = vshrl.u32 %v1070, 7
    %v1072 = vsub.s32 0, %v1071
    %v1073 = vrot.slane %v1061, %v1072
    %v1074 = vadd.f32 %v1064, %v1073
    %v1075 = vadd.f32 %v1068, %v1073
    %v1076 = vmax.f32 %v1059, %v1074
    %v1077 = vmax.f32 %v1060, %v1075
    %v1078 = vld [vmem:[%s1 + $0x3e] sm:$0x1]
    %1079 = vset.pattern.permute.xlu0 62
    %1080 = vperm.xlu0 %1079, %v20
    %v1081 = vpop.permute.xlu0 %1080
    %1083 = vset.pattern.permute.xlu0 62
    %1084 = vperm.xlu0 %1083, %v21
    %v1085 = vpop.permute.xlu0 %1084
    %v1087 = vlaneseq
    %v1088 = vshrl.u32 %v1087, 7
    %v1089 = vsub.s32 0, %v1088
    %v1090 = vrot.slane %v1078, %v1089
    %v1091 = vadd.f32 %v1081, %v1090
    %v1092 = vadd.f32 %v1085, %v1090
    %v1093 = vmax.f32 %v1076, %v1091
    %v1094 = vmax.f32 %v1077, %v1092
    %v1095 = vld [vmem:[%s1 + $0x3f] sm:$0x1]
    %1096 = vset.pattern.permute.xlu0 63
    %1097 = vperm.xlu0 %1096, %v20
    %v1098 = vpop.permute.xlu0 %1097
    %1100 = vset.pattern.permute.xlu0 63
    %1101 = vperm.xlu0 %1100, %v21
    %v1102 = vpop.permute.xlu0 %1101
    %v1104 = vlaneseq
    %v1105 = vshrl.u32 %v1104, 7
    %v1106 = vsub.s32 0, %v1105
    %v1107 = vrot.slane %v1095, %v1106
    %v1108 = vadd.f32 %v1098, %v1107
    %v1109 = vadd.f32 %v1102, %v1107
    %v1110 = vmax.f32 %v1093, %v1108
    %v1111 = vmax.f32 %v1094, %v1109
    %v1112 = vld [vmem:[%s1 + $0x40] sm:$0x1]
    %1113 = vset.pattern.permute.xlu0 64
    %1114 = vperm.xlu0 %1113, %v20
    %v1115 = vpop.permute.xlu0 %1114
    %1117 = vset.pattern.permute.xlu0 64
    %1118 = vperm.xlu0 %1117, %v21
    %v1119 = vpop.permute.xlu0 %1118
    %v1121 = vlaneseq
    %v1122 = vshrl.u32 %v1121, 7
    %v1123 = vsub.s32 0, %v1122
    %v1124 = vrot.slane %v1112, %v1123
    %v1125 = vadd.f32 %v1115, %v1124
    %v1126 = vadd.f32 %v1119, %v1124
    %v1127 = vmax.f32 %v1110, %v1125
    %v1128 = vmax.f32 %v1111, %v1126
    %v1129 = vld [vmem:[%s1 + $0x41] sm:$0x1]
    %1130 = vset.pattern.permute.xlu0 65
    %1131 = vperm.xlu0 %1130, %v20
    %v1132 = vpop.permute.xlu0 %1131
    %1134 = vset.pattern.permute.xlu0 65
    %1135 = vperm.xlu0 %1134, %v21
    %v1136 = vpop.permute.xlu0 %1135
    %v1138 = vlaneseq
    %v1139 = vshrl.u32 %v1138, 7
    %v1140 = vsub.s32 0, %v1139
    %v1141 = vrot.slane %v1129, %v1140
    %v1142 = vadd.f32 %v1132, %v1141
    %v1143 = vadd.f32 %v1136, %v1141
    %v1144 = vmax.f32 %v1127, %v1142
    %v1145 = vmax.f32 %v1128, %v1143
    %v1146 = vld [vmem:[%s1 + $0x42] sm:$0x1]
    %1147 = vset.pattern.permute.xlu0 66
    %1148 = vperm.xlu0 %1147, %v20
    %v1149 = vpop.permute.xlu0 %1148
    %1151 = vset.pattern.permute.xlu0 66
    %1152 = vperm.xlu0 %1151, %v21
    %v1153 = vpop.permute.xlu0 %1152
    %v1155 = vlaneseq
    %v1156 = vshrl.u32 %v1155, 7
    %v1157 = vsub.s32 0, %v1156
    %v1158 = vrot.slane %v1146, %v1157
    %v1159 = vadd.f32 %v1149, %v1158
    %v1160 = vadd.f32 %v1153, %v1158
    %v1161 = vmax.f32 %v1144, %v1159
    %v1162 = vmax.f32 %v1145, %v1160
    %v1163 = vld [vmem:[%s1 + $0x43] sm:$0x1]
    %1164 = vset.pattern.permute.xlu0 67
    %1165 = vperm.xlu0 %1164, %v20
    %v1166 = vpop.permute.xlu0 %1165
    %1168 = vset.pattern.permute.xlu0 67
    %1169 = vperm.xlu0 %1168, %v21
    %v1170 = vpop.permute.xlu0 %1169
    %v1172 = vlaneseq
    %v1173 = vshrl.u32 %v1172, 7
    %v1174 = vsub.s32 0, %v1173
    %v1175 = vrot.slane %v1163, %v1174
    %v1176 = vadd.f32 %v1166, %v1175
    %v1177 = vadd.f32 %v1170, %v1175
    %v1178 = vmax.f32 %v1161, %v1176
    %v1179 = vmax.f32 %v1162, %v1177
    %v1180 = vld [vmem:[%s1 + $0x44] sm:$0x1]
    %1181 = vset.pattern.permute.xlu0 68
    %1182 = vperm.xlu0 %1181, %v20
    %v1183 = vpop.permute.xlu0 %1182
    %1185 = vset.pattern.permute.xlu0 68
    %1186 = vperm.xlu0 %1185, %v21
    %v1187 = vpop.permute.xlu0 %1186
    %v1189 = vlaneseq
    %v1190 = vshrl.u32 %v1189, 7
    %v1191 = vsub.s32 0, %v1190
    %v1192 = vrot.slane %v1180, %v1191
    %v1193 = vadd.f32 %v1183, %v1192
    %v1194 = vadd.f32 %v1187, %v1192
    %v1195 = vmax.f32 %v1178, %v1193
    %v1196 = vmax.f32 %v1179, %v1194
    %v1197 = vld [vmem:[%s1 + $0x45] sm:$0x1]
    %1198 = vset.pattern.permute.xlu0 69
    %1199 = vperm.xlu0 %1198, %v20
    %v1200 = vpop.permute.xlu0 %1199
    %1202 = vset.pattern.permute.xlu0 69
    %1203 = vperm.xlu0 %1202, %v21
    %v1204 = vpop.permute.xlu0 %1203
    %v1206 = vlaneseq
    %v1207 = vshrl.u32 %v1206, 7
    %v1208 = vsub.s32 0, %v1207
    %v1209 = vrot.slane %v1197, %v1208
    %v1210 = vadd.f32 %v1200, %v1209
    %v1211 = vadd.f32 %v1204, %v1209
    %v1212 = vmax.f32 %v1195, %v1210
    %v1213 = vmax.f32 %v1196, %v1211
    %v1214 = vld [vmem:[%s1 + $0x46] sm:$0x1]
    %1215 = vset.pattern.permute.xlu0 70
    %1216 = vperm.xlu0 %1215, %v20
    %v1217 = vpop.permute.xlu0 %1216
    %1219 = vset.pattern.permute.xlu0 70
    %1220 = vperm.xlu0 %1219, %v21
    %v1221 = vpop.permute.xlu0 %1220
    %v1223 = vlaneseq
    %v1224 = vshrl.u32 %v1223, 7
    %v1225 = vsub.s32 0, %v1224
    %v1226 = vrot.slane %v1214, %v1225
    %v1227 = vadd.f32 %v1217, %v1226
    %v1228 = vadd.f32 %v1221, %v1226
    %v1229 = vmax.f32 %v1212, %v1227
    %v1230 = vmax.f32 %v1213, %v1228
    %v1231 = vld [vmem:[%s1 + $0x47] sm:$0x1]
    %1232 = vset.pattern.permute.xlu0 71
    %1233 = vperm.xlu0 %1232, %v20
    %v1234 = vpop.permute.xlu0 %1233
    %1236 = vset.pattern.permute.xlu0 71
    %1237 = vperm.xlu0 %1236, %v21
    %v1238 = vpop.permute.xlu0 %1237
    %v1240 = vlaneseq
    %v1241 = vshrl.u32 %v1240, 7
    %v1242 = vsub.s32 0, %v1241
    %v1243 = vrot.slane %v1231, %v1242
    %v1244 = vadd.f32 %v1234, %v1243
    %v1245 = vadd.f32 %v1238, %v1243
    %v1246 = vmax.f32 %v1229, %v1244
    %v1247 = vmax.f32 %v1230, %v1245
    %v1248 = vld [vmem:[%s1 + $0x48] sm:$0x1]
    %1249 = vset.pattern.permute.xlu0 72
    %1250 = vperm.xlu0 %1249, %v20
    %v1251 = vpop.permute.xlu0 %1250
    %1253 = vset.pattern.permute.xlu0 72
    %1254 = vperm.xlu0 %1253, %v21
    %v1255 = vpop.permute.xlu0 %1254
    %v1257 = vlaneseq
    %v1258 = vshrl.u32 %v1257, 7
    %v1259 = vsub.s32 0, %v1258
    %v1260 = vrot.slane %v1248, %v1259
    %v1261 = vadd.f32 %v1251, %v1260
    %v1262 = vadd.f32 %v1255, %v1260
    %v1263 = vmax.f32 %v1246, %v1261
    %v1264 = vmax.f32 %v1247, %v1262
    %v1265 = vld [vmem:[%s1 + $0x49] sm:$0x1]
    %1266 = vset.pattern.permute.xlu0 73
    %1267 = vperm.xlu0 %1266, %v20
    %v1268 = vpop.permute.xlu0 %1267
    %1270 = vset.pattern.permute.xlu0 73
    %1271 = vperm.xlu0 %1270, %v21
    %v1272 = vpop.permute.xlu0 %1271
    %v1274 = vlaneseq
    %v1275 = vshrl.u32 %v1274, 7
    %v1276 = vsub.s32 0, %v1275
    %v1277 = vrot.slane %v1265, %v1276
    %v1278 = vadd.f32 %v1268, %v1277
    %v1279 = vadd.f32 %v1272, %v1277
    %v1280 = vmax.f32 %v1263, %v1278
    %v1281 = vmax.f32 %v1264, %v1279
    %v1282 = vld [vmem:[%s1 + $0x4a] sm:$0x1]
    %1283 = vset.pattern.permute.xlu0 74
    %1284 = vperm.xlu0 %1283, %v20
    %v1285 = vpop.permute.xlu0 %1284
    %1287 = vset.pattern.permute.xlu0 74
    %1288 = vperm.xlu0 %1287, %v21
    %v1289 = vpop.permute.xlu0 %1288
    %v1291 = vlaneseq
    %v1292 = vshrl.u32 %v1291, 7
    %v1293 = vsub.s32 0, %v1292
    %v1294 = vrot.slane %v1282, %v1293
    %v1295 = vadd.f32 %v1285, %v1294
    %v1296 = vadd.f32 %v1289, %v1294
    %v1297 = vmax.f32 %v1280, %v1295
    %v1298 = vmax.f32 %v1281, %v1296
    %v1299 = vld [vmem:[%s1 + $0x4b] sm:$0x1]
    %1300 = vset.pattern.permute.xlu0 75
    %1301 = vperm.xlu0 %1300, %v20
    %v1302 = vpop.permute.xlu0 %1301
    %1304 = vset.pattern.permute.xlu0 75
    %1305 = vperm.xlu0 %1304, %v21
    %v1306 = vpop.permute.xlu0 %1305
    %v1308 = vlaneseq
    %v1309 = vshrl.u32 %v1308, 7
    %v1310 = vsub.s32 0, %v1309
    %v1311 = vrot.slane %v1299, %v1310
    %v1312 = vadd.f32 %v1302, %v1311
    %v1313 = vadd.f32 %v1306, %v1311
    %v1314 = vmax.f32 %v1297, %v1312
    %v1315 = vmax.f32 %v1298, %v1313
    %v1316 = vld [vmem:[%s1 + $0x4c] sm:$0x1]
    %1317 = vset.pattern.permute.xlu0 76
    %1318 = vperm.xlu0 %1317, %v20
    %v1319 = vpop.permute.xlu0 %1318
    %1321 = vset.pattern.permute.xlu0 76
    %1322 = vperm.xlu0 %1321, %v21
    %v1323 = vpop.permute.xlu0 %1322
    %v1325 = vlaneseq
    %v1326 = vshrl.u32 %v1325, 7
    %v1327 = vsub.s32 0, %v1326
    %v1328 = vrot.slane %v1316, %v1327
    %v1329 = vadd.f32 %v1319, %v1328
    %v1330 = vadd.f32 %v1323, %v1328
    %v1331 = vmax.f32 %v1314, %v1329
    %v1332 = vmax.f32 %v1315, %v1330
    %v1333 = vld [vmem:[%s1 + $0x4d] sm:$0x1]
    %1334 = vset.pattern.permute.xlu0 77
    %1335 = vperm.xlu0 %1334, %v20
    %v1336 = vpop.permute.xlu0 %1335
    %1338 = vset.pattern.permute.xlu0 77
    %1339 = vperm.xlu0 %1338, %v21
    %v1340 = vpop.permute.xlu0 %1339
    %v1342 = vlaneseq
    %v1343 = vshrl.u32 %v1342, 7
    %v1344 = vsub.s32 0, %v1343
    %v1345 = vrot.slane %v1333, %v1344
    %v1346 = vadd.f32 %v1336, %v1345
    %v1347 = vadd.f32 %v1340, %v1345
    %v1348 = vmax.f32 %v1331, %v1346
    %v1349 = vmax.f32 %v1332, %v1347
    %v1350 = vld [vmem:[%s1 + $0x4e] sm:$0x1]
    %1351 = vset.pattern.permute.xlu0 78
    %1352 = vperm.xlu0 %1351, %v20
    %v1353 = vpop.permute.xlu0 %1352
    %1355 = vset.pattern.permute.xlu0 78
    %1356 = vperm.xlu0 %1355, %v21
    %v1357 = vpop.permute.xlu0 %1356
    %v1359 = vlaneseq
    %v1360 = vshrl.u32 %v1359, 7
    %v1361 = vsub.s32 0, %v1360
    %v1362 = vrot.slane %v1350, %v1361
    %v1363 = vadd.f32 %v1353, %v1362
    %v1364 = vadd.f32 %v1357, %v1362
    %v1365 = vmax.f32 %v1348, %v1363
    %v1366 = vmax.f32 %v1349, %v1364
    %v1367 = vld [vmem:[%s1 + $0x4f] sm:$0x1]
    %1368 = vset.pattern.permute.xlu0 79
    %1369 = vperm.xlu0 %1368, %v20
    %v1370 = vpop.permute.xlu0 %1369
    %1372 = vset.pattern.permute.xlu0 79
    %1373 = vperm.xlu0 %1372, %v21
    %v1374 = vpop.permute.xlu0 %1373
    %v1376 = vlaneseq
    %v1377 = vshrl.u32 %v1376, 7
    %v1378 = vsub.s32 0, %v1377
    %v1379 = vrot.slane %v1367, %v1378
    %v1380 = vadd.f32 %v1370, %v1379
    %v1381 = vadd.f32 %v1374, %v1379
    %v1382 = vmax.f32 %v1365, %v1380
    %v1383 = vmax.f32 %v1366, %v1381
    %v1384 = vld [vmem:[%s1 + $0x50] sm:$0x1]
    %1385 = vset.pattern.permute.xlu0 80
    %1386 = vperm.xlu0 %1385, %v20
    %v1387 = vpop.permute.xlu0 %1386
    %1389 = vset.pattern.permute.xlu0 80
    %1390 = vperm.xlu0 %1389, %v21
    %v1391 = vpop.permute.xlu0 %1390
    %v1393 = vlaneseq
    %v1394 = vshrl.u32 %v1393, 7
    %v1395 = vsub.s32 0, %v1394
    %v1396 = vrot.slane %v1384, %v1395
    %v1397 = vadd.f32 %v1387, %v1396
    %v1398 = vadd.f32 %v1391, %v1396
    %v1399 = vmax.f32 %v1382, %v1397
    %v1400 = vmax.f32 %v1383, %v1398
    %v1401 = vld [vmem:[%s1 + $0x51] sm:$0x1]
    %1402 = vset.pattern.permute.xlu0 81
    %1403 = vperm.xlu0 %1402, %v20
    %v1404 = vpop.permute.xlu0 %1403
    %1406 = vset.pattern.permute.xlu0 81
    %1407 = vperm.xlu0 %1406, %v21
    %v1408 = vpop.permute.xlu0 %1407
    %v1410 = vlaneseq
    %v1411 = vshrl.u32 %v1410, 7
    %v1412 = vsub.s32 0, %v1411
    %v1413 = vrot.slane %v1401, %v1412
    %v1414 = vadd.f32 %v1404, %v1413
    %v1415 = vadd.f32 %v1408, %v1413
    %v1416 = vmax.f32 %v1399, %v1414
    %v1417 = vmax.f32 %v1400, %v1415
    %v1418 = vld [vmem:[%s1 + $0x52] sm:$0x1]
    %1419 = vset.pattern.permute.xlu0 82
    %1420 = vperm.xlu0 %1419, %v20
    %v1421 = vpop.permute.xlu0 %1420
    %1423 = vset.pattern.permute.xlu0 82
    %1424 = vperm.xlu0 %1423, %v21
    %v1425 = vpop.permute.xlu0 %1424
    %v1427 = vlaneseq
    %v1428 = vshrl.u32 %v1427, 7
    %v1429 = vsub.s32 0, %v1428
    %v1430 = vrot.slane %v1418, %v1429
    %v1431 = vadd.f32 %v1421, %v1430
    %v1432 = vadd.f32 %v1425, %v1430
    %v1433 = vmax.f32 %v1416, %v1431
    %v1434 = vmax.f32 %v1417, %v1432
    %v1435 = vld [vmem:[%s1 + $0x53] sm:$0x1]
    %1436 = vset.pattern.permute.xlu0 83
    %1437 = vperm.xlu0 %1436, %v20
    %v1438 = vpop.permute.xlu0 %1437
    %1440 = vset.pattern.permute.xlu0 83
    %1441 = vperm.xlu0 %1440, %v21
    %v1442 = vpop.permute.xlu0 %1441
    %v1444 = vlaneseq
    %v1445 = vshrl.u32 %v1444, 7
    %v1446 = vsub.s32 0, %v1445
    %v1447 = vrot.slane %v1435, %v1446
    %v1448 = vadd.f32 %v1438, %v1447
    %v1449 = vadd.f32 %v1442, %v1447
    %v1450 = vmax.f32 %v1433, %v1448
    %v1451 = vmax.f32 %v1434, %v1449
    %v1452 = vld [vmem:[%s1 + $0x54] sm:$0x1]
    %1453 = vset.pattern.permute.xlu0 84
    %1454 = vperm.xlu0 %1453, %v20
    %v1455 = vpop.permute.xlu0 %1454
    %1457 = vset.pattern.permute.xlu0 84
    %1458 = vperm.xlu0 %1457, %v21
    %v1459 = vpop.permute.xlu0 %1458
    %v1461 = vlaneseq
    %v1462 = vshrl.u32 %v1461, 7
    %v1463 = vsub.s32 0, %v1462
    %v1464 = vrot.slane %v1452, %v1463
    %v1465 = vadd.f32 %v1455, %v1464
    %v1466 = vadd.f32 %v1459, %v1464
    %v1467 = vmax.f32 %v1450, %v1465
    %v1468 = vmax.f32 %v1451, %v1466
    %v1469 = vld [vmem:[%s1 + $0x55] sm:$0x1]
    %1470 = vset.pattern.permute.xlu0 85
    %1471 = vperm.xlu0 %1470, %v20
    %v1472 = vpop.permute.xlu0 %1471
    %1474 = vset.pattern.permute.xlu0 85
    %1475 = vperm.xlu0 %1474, %v21
    %v1476 = vpop.permute.xlu0 %1475
    %v1478 = vlaneseq
    %v1479 = vshrl.u32 %v1478, 7
    %v1480 = vsub.s32 0, %v1479
    %v1481 = vrot.slane %v1469, %v1480
    %v1482 = vadd.f32 %v1472, %v1481
    %v1483 = vadd.f32 %v1476, %v1481
    %v1484 = vmax.f32 %v1467, %v1482
    %v1485 = vmax.f32 %v1468, %v1483
    %v1486 = vld [vmem:[%s1 + $0x56] sm:$0x1]
    %1487 = vset.pattern.permute.xlu0 86
    %1488 = vperm.xlu0 %1487, %v20
    %v1489 = vpop.permute.xlu0 %1488
    %1491 = vset.pattern.permute.xlu0 86
    %1492 = vperm.xlu0 %1491, %v21
    %v1493 = vpop.permute.xlu0 %1492
    %v1495 = vlaneseq
    %v1496 = vshrl.u32 %v1495, 7
    %v1497 = vsub.s32 0, %v1496
    %v1498 = vrot.slane %v1486, %v1497
    %v1499 = vadd.f32 %v1489, %v1498
    %v1500 = vadd.f32 %v1493, %v1498
    %v1501 = vmax.f32 %v1484, %v1499
    %v1502 = vmax.f32 %v1485, %v1500
    %v1503 = vld [vmem:[%s1 + $0x57] sm:$0x1]
    %1504 = vset.pattern.permute.xlu0 87
    %1505 = vperm.xlu0 %1504, %v20
    %v1506 = vpop.permute.xlu0 %1505
    %1508 = vset.pattern.permute.xlu0 87
    %1509 = vperm.xlu0 %1508, %v21
    %v1510 = vpop.permute.xlu0 %1509
    %v1512 = vlaneseq
    %v1513 = vshrl.u32 %v1512, 7
    %v1514 = vsub.s32 0, %v1513
    %v1515 = vrot.slane %v1503, %v1514
    %v1516 = vadd.f32 %v1506, %v1515
    %v1517 = vadd.f32 %v1510, %v1515
    %v1518 = vmax.f32 %v1501, %v1516
    %v1519 = vmax.f32 %v1502, %v1517
    %v1520 = vld [vmem:[%s1 + $0x58] sm:$0x1]
    %1521 = vset.pattern.permute.xlu0 88
    %1522 = vperm.xlu0 %1521, %v20
    %v1523 = vpop.permute.xlu0 %1522
    %1525 = vset.pattern.permute.xlu0 88
    %1526 = vperm.xlu0 %1525, %v21
    %v1527 = vpop.permute.xlu0 %1526
    %v1529 = vlaneseq
    %v1530 = vshrl.u32 %v1529, 7
    %v1531 = vsub.s32 0, %v1530
    %v1532 = vrot.slane %v1520, %v1531
    %v1533 = vadd.f32 %v1523, %v1532
    %v1534 = vadd.f32 %v1527, %v1532
    %v1535 = vmax.f32 %v1518, %v1533
    %v1536 = vmax.f32 %v1519, %v1534
    %v1537 = vld [vmem:[%s1 + $0x59] sm:$0x1]
    %1538 = vset.pattern.permute.xlu0 89
    %1539 = vperm.xlu0 %1538, %v20
    %v1540 = vpop.permute.xlu0 %1539
    %1542 = vset.pattern.permute.xlu0 89
    %1543 = vperm.xlu0 %1542, %v21
    %v1544 = vpop.permute.xlu0 %1543
    %v1546 = vlaneseq
    %v1547 = vshrl.u32 %v1546, 7
    %v1548 = vsub.s32 0, %v1547
    %v1549 = vrot.slane %v1537, %v1548
    %v1550 = vadd.f32 %v1540, %v1549
    %v1551 = vadd.f32 %v1544, %v1549
    %v1552 = vmax.f32 %v1535, %v1550
    %v1553 = vmax.f32 %v1536, %v1551
    %v1554 = vld [vmem:[%s1 + $0x5a] sm:$0x1]
    %1555 = vset.pattern.permute.xlu0 90
    %1556 = vperm.xlu0 %1555, %v20
    %v1557 = vpop.permute.xlu0 %1556
    %1559 = vset.pattern.permute.xlu0 90
    %1560 = vperm.xlu0 %1559, %v21
    %v1561 = vpop.permute.xlu0 %1560
    %v1563 = vlaneseq
    %v1564 = vshrl.u32 %v1563, 7
    %v1565 = vsub.s32 0, %v1564
    %v1566 = vrot.slane %v1554, %v1565
    %v1567 = vadd.f32 %v1557, %v1566
    %v1568 = vadd.f32 %v1561, %v1566
    %v1569 = vmax.f32 %v1552, %v1567
    %v1570 = vmax.f32 %v1553, %v1568
    %v1571 = vld [vmem:[%s1 + $0x5b] sm:$0x1]
    %1572 = vset.pattern.permute.xlu0 91
    %1573 = vperm.xlu0 %1572, %v20
    %v1574 = vpop.permute.xlu0 %1573
    %1576 = vset.pattern.permute.xlu0 91
    %1577 = vperm.xlu0 %1576, %v21
    %v1578 = vpop.permute.xlu0 %1577
    %v1580 = vlaneseq
    %v1581 = vshrl.u32 %v1580, 7
    %v1582 = vsub.s32 0, %v1581
    %v1583 = vrot.slane %v1571, %v1582
    %v1584 = vadd.f32 %v1574, %v1583
    %v1585 = vadd.f32 %v1578, %v1583
    %v1586 = vmax.f32 %v1569, %v1584
    %v1587 = vmax.f32 %v1570, %v1585
    %v1588 = vld [vmem:[%s1 + $0x5c] sm:$0x1]
    %1589 = vset.pattern.permute.xlu0 92
    %1590 = vperm.xlu0 %1589, %v20
    %v1591 = vpop.permute.xlu0 %1590
    %1593 = vset.pattern.permute.xlu0 92
    %1594 = vperm.xlu0 %1593, %v21
    %v1595 = vpop.permute.xlu0 %1594
    %v1597 = vlaneseq
    %v1598 = vshrl.u32 %v1597, 7
    %v1599 = vsub.s32 0, %v1598
    %v1600 = vrot.slane %v1588, %v1599
    %v1601 = vadd.f32 %v1591, %v1600
    %v1602 = vadd.f32 %v1595, %v1600
    %v1603 = vmax.f32 %v1586, %v1601
    %v1604 = vmax.f32 %v1587, %v1602
    %v1605 = vld [vmem:[%s1 + $0x5d] sm:$0x1]
    %1606 = vset.pattern.permute.xlu0 93
    %1607 = vperm.xlu0 %1606, %v20
    %v1608 = vpop.permute.xlu0 %1607
    %1610 = vset.pattern.permute.xlu0 93
    %1611 = vperm.xlu0 %1610, %v21
    %v1612 = vpop.permute.xlu0 %1611
    %v1614 = vlaneseq
    %v1615 = vshrl.u32 %v1614, 7
    %v1616 = vsub.s32 0, %v1615
    %v1617 = vrot.slane %v1605, %v1616
    %v1618 = vadd.f32 %v1608, %v1617
    %v1619 = vadd.f32 %v1612, %v1617
    %v1620 = vmax.f32 %v1603, %v1618
    %v1621 = vmax.f32 %v1604, %v1619
    %v1622 = vld [vmem:[%s1 + $0x5e] sm:$0x1]
    %1623 = vset.pattern.permute.xlu0 94
    %1624 = vperm.xlu0 %1623, %v20
    %v1625 = vpop.permute.xlu0 %1624
    %1627 = vset.pattern.permute.xlu0 94
    %1628 = vperm.xlu0 %1627, %v21
    %v1629 = vpop.permute.xlu0 %1628
    %v1631 = vlaneseq
    %v1632 = vshrl.u32 %v1631, 7
    %v1633 = vsub.s32 0, %v1632
    %v1634 = vrot.slane %v1622, %v1633
    %v1635 = vadd.f32 %v1625, %v1634
    %v1636 = vadd.f32 %v1629, %v1634
    %v1637 = vmax.f32 %v1620, %v1635
    %v1638 = vmax.f32 %v1621, %v1636
    %v1639 = vld [vmem:[%s1 + $0x5f] sm:$0x1]
    %1640 = vset.pattern.permute.xlu0 95
    %1641 = vperm.xlu0 %1640, %v20
    %v1642 = vpop.permute.xlu0 %1641
    %1644 = vset.pattern.permute.xlu0 95
    %1645 = vperm.xlu0 %1644, %v21
    %v1646 = vpop.permute.xlu0 %1645
    %v1648 = vlaneseq
    %v1649 = vshrl.u32 %v1648, 7
    %v1650 = vsub.s32 0, %v1649
    %v1651 = vrot.slane %v1639, %v1650
    %v1652 = vadd.f32 %v1642, %v1651
    %v1653 = vadd.f32 %v1646, %v1651
    %v1654 = vmax.f32 %v1637, %v1652
    %v1655 = vmax.f32 %v1638, %v1653
    %v1656 = vld [vmem:[%s1 + $0x60] sm:$0x1]
    %1657 = vset.pattern.permute.xlu0 96
    %1658 = vperm.xlu0 %1657, %v20
    %v1659 = vpop.permute.xlu0 %1658
    %1661 = vset.pattern.permute.xlu0 96
    %1662 = vperm.xlu0 %1661, %v21
    %v1663 = vpop.permute.xlu0 %1662
    %v1665 = vlaneseq
    %v1666 = vshrl.u32 %v1665, 7
    %v1667 = vsub.s32 0, %v1666
    %v1668 = vrot.slane %v1656, %v1667
    %v1669 = vadd.f32 %v1659, %v1668
    %v1670 = vadd.f32 %v1663, %v1668
    %v1671 = vmax.f32 %v1654, %v1669
    %v1672 = vmax.f32 %v1655, %v1670
    %v1673 = vld [vmem:[%s1 + $0x61] sm:$0x1]
    %1674 = vset.pattern.permute.xlu0 97
    %1675 = vperm.xlu0 %1674, %v20
    %v1676 = vpop.permute.xlu0 %1675
    %1678 = vset.pattern.permute.xlu0 97
    %1679 = vperm.xlu0 %1678, %v21
    %v1680 = vpop.permute.xlu0 %1679
    %v1682 = vlaneseq
    %v1683 = vshrl.u32 %v1682, 7
    %v1684 = vsub.s32 0, %v1683
    %v1685 = vrot.slane %v1673, %v1684
    %v1686 = vadd.f32 %v1676, %v1685
    %v1687 = vadd.f32 %v1680, %v1685
    %v1688 = vmax.f32 %v1671, %v1686
    %v1689 = vmax.f32 %v1672, %v1687
    %v1690 = vld [vmem:[%s1 + $0x62] sm:$0x1]
    %1691 = vset.pattern.permute.xlu0 98
    %1692 = vperm.xlu0 %1691, %v20
    %v1693 = vpop.permute.xlu0 %1692
    %1695 = vset.pattern.permute.xlu0 98
    %1696 = vperm.xlu0 %1695, %v21
    %v1697 = vpop.permute.xlu0 %1696
    %v1699 = vlaneseq
    %v1700 = vshrl.u32 %v1699, 7
    %v1701 = vsub.s32 0, %v1700
    %v1702 = vrot.slane %v1690, %v1701
    %v1703 = vadd.f32 %v1693, %v1702
    %v1704 = vadd.f32 %v1697, %v1702
    %v1705 = vmax.f32 %v1688, %v1703
    %v1706 = vmax.f32 %v1689, %v1704
    %v1707 = vld [vmem:[%s1 + $0x63] sm:$0x1]
    %1708 = vset.pattern.permute.xlu0 99
    %1709 = vperm.xlu0 %1708, %v20
    %v1710 = vpop.permute.xlu0 %1709
    %1712 = vset.pattern.permute.xlu0 99
    %1713 = vperm.xlu0 %1712, %v21
    %v1714 = vpop.permute.xlu0 %1713
    %v1716 = vlaneseq
    %v1717 = vshrl.u32 %v1716, 7
    %v1718 = vsub.s32 0, %v1717
    %v1719 = vrot.slane %v1707, %v1718
    %v1720 = vadd.f32 %v1710, %v1719
    %v1721 = vadd.f32 %v1714, %v1719
    %v1722 = vmax.f32 %v1705, %v1720
    %v1723 = vmax.f32 %v1706, %v1721
    %v1724 = vld [vmem:[%s1 + $0x64] sm:$0x1]
    %1725 = vset.pattern.permute.xlu0 100
    %1726 = vperm.xlu0 %1725, %v20
    %v1727 = vpop.permute.xlu0 %1726
    %1729 = vset.pattern.permute.xlu0 100
    %1730 = vperm.xlu0 %1729, %v21
    %v1731 = vpop.permute.xlu0 %1730
    %v1733 = vlaneseq
    %v1734 = vshrl.u32 %v1733, 7
    %v1735 = vsub.s32 0, %v1734
    %v1736 = vrot.slane %v1724, %v1735
    %v1737 = vadd.f32 %v1727, %v1736
    %v1738 = vadd.f32 %v1731, %v1736
    %v1739 = vmax.f32 %v1722, %v1737
    %v1740 = vmax.f32 %v1723, %v1738
    %v1741 = vld [vmem:[%s1 + $0x65] sm:$0x1]
    %1742 = vset.pattern.permute.xlu0 101
    %1743 = vperm.xlu0 %1742, %v20
    %v1744 = vpop.permute.xlu0 %1743
    %1746 = vset.pattern.permute.xlu0 101
    %1747 = vperm.xlu0 %1746, %v21
    %v1748 = vpop.permute.xlu0 %1747
    %v1750 = vlaneseq
    %v1751 = vshrl.u32 %v1750, 7
    %v1752 = vsub.s32 0, %v1751
    %v1753 = vrot.slane %v1741, %v1752
    %v1754 = vadd.f32 %v1744, %v1753
    %v1755 = vadd.f32 %v1748, %v1753
    %v1756 = vmax.f32 %v1739, %v1754
    %v1757 = vmax.f32 %v1740, %v1755
    %v1758 = vld [vmem:[%s1 + $0x66] sm:$0x1]
    %1759 = vset.pattern.permute.xlu0 102
    %1760 = vperm.xlu0 %1759, %v20
    %v1761 = vpop.permute.xlu0 %1760
    %1763 = vset.pattern.permute.xlu0 102
    %1764 = vperm.xlu0 %1763, %v21
    %v1765 = vpop.permute.xlu0 %1764
    %v1767 = vlaneseq
    %v1768 = vshrl.u32 %v1767, 7
    %v1769 = vsub.s32 0, %v1768
    %v1770 = vrot.slane %v1758, %v1769
    %v1771 = vadd.f32 %v1761, %v1770
    %v1772 = vadd.f32 %v1765, %v1770
    %v1773 = vmax.f32 %v1756, %v1771
    %v1774 = vmax.f32 %v1757, %v1772
    %v1775 = vld [vmem:[%s1 + $0x67] sm:$0x1]
    %1776 = vset.pattern.permute.xlu0 103
    %1777 = vperm.xlu0 %1776, %v20
    %v1778 = vpop.permute.xlu0 %1777
    %1780 = vset.pattern.permute.xlu0 103
    %1781 = vperm.xlu0 %1780, %v21
    %v1782 = vpop.permute.xlu0 %1781
    %v1784 = vlaneseq
    %v1785 = vshrl.u32 %v1784, 7
    %v1786 = vsub.s32 0, %v1785
    %v1787 = vrot.slane %v1775, %v1786
    %v1788 = vadd.f32 %v1778, %v1787
    %v1789 = vadd.f32 %v1782, %v1787
    %v1790 = vmax.f32 %v1773, %v1788
    %v1791 = vmax.f32 %v1774, %v1789
    %v1792 = vld [vmem:[%s1 + $0x68] sm:$0x1]
    %1793 = vset.pattern.permute.xlu0 104
    %1794 = vperm.xlu0 %1793, %v20
    %v1795 = vpop.permute.xlu0 %1794
    %1797 = vset.pattern.permute.xlu0 104
    %1798 = vperm.xlu0 %1797, %v21
    %v1799 = vpop.permute.xlu0 %1798
    %v1801 = vlaneseq
    %v1802 = vshrl.u32 %v1801, 7
    %v1803 = vsub.s32 0, %v1802
    %v1804 = vrot.slane %v1792, %v1803
    %v1805 = vadd.f32 %v1795, %v1804
    %v1806 = vadd.f32 %v1799, %v1804
    %v1807 = vmax.f32 %v1790, %v1805
    %v1808 = vmax.f32 %v1791, %v1806
    %v1809 = vld [vmem:[%s1 + $0x69] sm:$0x1]
    %1810 = vset.pattern.permute.xlu0 105
    %1811 = vperm.xlu0 %1810, %v20
    %v1812 = vpop.permute.xlu0 %1811
    %1814 = vset.pattern.permute.xlu0 105
    %1815 = vperm.xlu0 %1814, %v21
    %v1816 = vpop.permute.xlu0 %1815
    %v1818 = vlaneseq
    %v1819 = vshrl.u32 %v1818, 7
    %v1820 = vsub.s32 0, %v1819
    %v1821 = vrot.slane %v1809, %v1820
    %v1822 = vadd.f32 %v1812, %v1821
    %v1823 = vadd.f32 %v1816, %v1821
    %v1824 = vmax.f32 %v1807, %v1822
    %v1825 = vmax.f32 %v1808, %v1823
    %v1826 = vld [vmem:[%s1 + $0x6a] sm:$0x1]
    %1827 = vset.pattern.permute.xlu0 106
    %1828 = vperm.xlu0 %1827, %v20
    %v1829 = vpop.permute.xlu0 %1828
    %1831 = vset.pattern.permute.xlu0 106
    %1832 = vperm.xlu0 %1831, %v21
    %v1833 = vpop.permute.xlu0 %1832
    %v1835 = vlaneseq
    %v1836 = vshrl.u32 %v1835, 7
    %v1837 = vsub.s32 0, %v1836
    %v1838 = vrot.slane %v1826, %v1837
    %v1839 = vadd.f32 %v1829, %v1838
    %v1840 = vadd.f32 %v1833, %v1838
    %v1841 = vmax.f32 %v1824, %v1839
    %v1842 = vmax.f32 %v1825, %v1840
    %v1843 = vld [vmem:[%s1 + $0x6b] sm:$0x1]
    %1844 = vset.pattern.permute.xlu0 107
    %1845 = vperm.xlu0 %1844, %v20
    %v1846 = vpop.permute.xlu0 %1845
    %1848 = vset.pattern.permute.xlu0 107
    %1849 = vperm.xlu0 %1848, %v21
    %v1850 = vpop.permute.xlu0 %1849
    %v1852 = vlaneseq
    %v1853 = vshrl.u32 %v1852, 7
    %v1854 = vsub.s32 0, %v1853
    %v1855 = vrot.slane %v1843, %v1854
    %v1856 = vadd.f32 %v1846, %v1855
    %v1857 = vadd.f32 %v1850, %v1855
    %v1858 = vmax.f32 %v1841, %v1856
    %v1859 = vmax.f32 %v1842, %v1857
    %v1860 = vld [vmem:[%s1 + $0x6c] sm:$0x1]
    %1861 = vset.pattern.permute.xlu0 108
    %1862 = vperm.xlu0 %1861, %v20
    %v1863 = vpop.permute.xlu0 %1862
    %1865 = vset.pattern.permute.xlu0 108
    %1866 = vperm.xlu0 %1865, %v21
    %v1867 = vpop.permute.xlu0 %1866
    %v1869 = vlaneseq
    %v1870 = vshrl.u32 %v1869, 7
    %v1871 = vsub.s32 0, %v1870
    %v1872 = vrot.slane %v1860, %v1871
    %v1873 = vadd.f32 %v1863, %v1872
    %v1874 = vadd.f32 %v1867, %v1872
    %v1875 = vmax.f32 %v1858, %v1873
    %v1876 = vmax.f32 %v1859, %v1874
    %v1877 = vld [vmem:[%s1 + $0x6d] sm:$0x1]
    %1878 = vset.pattern.permute.xlu0 109
    %1879 = vperm.xlu0 %1878, %v20
    %v1880 = vpop.permute.xlu0 %1879
    %1882 = vset.pattern.permute.xlu0 109
    %1883 = vperm.xlu0 %1882, %v21
    %v1884 = vpop.permute.xlu0 %1883
    %v1886 = vlaneseq
    %v1887 = vshrl.u32 %v1886, 7
    %v1888 = vsub.s32 0, %v1887
    %v1889 = vrot.slane %v1877, %v1888
    %v1890 = vadd.f32 %v1880, %v1889
    %v1891 = vadd.f32 %v1884, %v1889
    %v1892 = vmax.f32 %v1875, %v1890
    %v1893 = vmax.f32 %v1876, %v1891
    %v1894 = vld [vmem:[%s1 + $0x6e] sm:$0x1]
    %1895 = vset.pattern.permute.xlu0 110
    %1896 = vperm.xlu0 %1895, %v20
    %v1897 = vpop.permute.xlu0 %1896
    %1899 = vset.pattern.permute.xlu0 110
    %1900 = vperm.xlu0 %1899, %v21
    %v1901 = vpop.permute.xlu0 %1900
    %v1903 = vlaneseq
    %v1904 = vshrl.u32 %v1903, 7
    %v1905 = vsub.s32 0, %v1904
    %v1906 = vrot.slane %v1894, %v1905
    %v1907 = vadd.f32 %v1897, %v1906
    %v1908 = vadd.f32 %v1901, %v1906
    %v1909 = vmax.f32 %v1892, %v1907
    %v1910 = vmax.f32 %v1893, %v1908
    %v1911 = vld [vmem:[%s1 + $0x6f] sm:$0x1]
    %1912 = vset.pattern.permute.xlu0 111
    %1913 = vperm.xlu0 %1912, %v20
    %v1914 = vpop.permute.xlu0 %1913
    %1916 = vset.pattern.permute.xlu0 111
    %1917 = vperm.xlu0 %1916, %v21
    %v1918 = vpop.permute.xlu0 %1917
    %v1920 = vlaneseq
    %v1921 = vshrl.u32 %v1920, 7
    %v1922 = vsub.s32 0, %v1921
    %v1923 = vrot.slane %v1911, %v1922
    %v1924 = vadd.f32 %v1914, %v1923
    %v1925 = vadd.f32 %v1918, %v1923
    %v1926 = vmax.f32 %v1909, %v1924
    %v1927 = vmax.f32 %v1910, %v1925
    %v1928 = vld [vmem:[%s1 + $0x70] sm:$0x1]
    %1929 = vset.pattern.permute.xlu0 112
    %1930 = vperm.xlu0 %1929, %v20
    %v1931 = vpop.permute.xlu0 %1930
    %1933 = vset.pattern.permute.xlu0 112
    %1934 = vperm.xlu0 %1933, %v21
    %v1935 = vpop.permute.xlu0 %1934
    %v1937 = vlaneseq
    %v1938 = vshrl.u32 %v1937, 7
    %v1939 = vsub.s32 0, %v1938
    %v1940 = vrot.slane %v1928, %v1939
    %v1941 = vadd.f32 %v1931, %v1940
    %v1942 = vadd.f32 %v1935, %v1940
    %v1943 = vmax.f32 %v1926, %v1941
    %v1944 = vmax.f32 %v1927, %v1942
    %v1945 = vld [vmem:[%s1 + $0x71] sm:$0x1]
    %1946 = vset.pattern.permute.xlu0 113
    %1947 = vperm.xlu0 %1946, %v20
    %v1948 = vpop.permute.xlu0 %1947
    %1950 = vset.pattern.permute.xlu0 113
    %1951 = vperm.xlu0 %1950, %v21
    %v1952 = vpop.permute.xlu0 %1951
    %v1954 = vlaneseq
    %v1955 = vshrl.u32 %v1954, 7
    %v1956 = vsub.s32 0, %v1955
    %v1957 = vrot.slane %v1945, %v1956
    %v1958 = vadd.f32 %v1948, %v1957
    %v1959 = vadd.f32 %v1952, %v1957
    %v1960 = vmax.f32 %v1943, %v1958
    %v1961 = vmax.f32 %v1944, %v1959
    %v1962 = vld [vmem:[%s1 + $0x72] sm:$0x1]
    %1963 = vset.pattern.permute.xlu0 114
    %1964 = vperm.xlu0 %1963, %v20
    %v1965 = vpop.permute.xlu0 %1964
    %1967 = vset.pattern.permute.xlu0 114
    %1968 = vperm.xlu0 %1967, %v21
    %v1969 = vpop.permute.xlu0 %1968
    %v1971 = vlaneseq
    %v1972 = vshrl.u32 %v1971, 7
    %v1973 = vsub.s32 0, %v1972
    %v1974 = vrot.slane %v1962, %v1973
    %v1975 = vadd.f32 %v1965, %v1974
    %v1976 = vadd.f32 %v1969, %v1974
    %v1977 = vmax.f32 %v1960, %v1975
    %v1978 = vmax.f32 %v1961, %v1976
    %v1979 = vld [vmem:[%s1 + $0x73] sm:$0x1]
    %1980 = vset.pattern.permute.xlu0 115
    %1981 = vperm.xlu0 %1980, %v20
    %v1982 = vpop.permute.xlu0 %1981
    %1984 = vset.pattern.permute.xlu0 115
    %1985 = vperm.xlu0 %1984, %v21
    %v1986 = vpop.permute.xlu0 %1985
    %v1988 = vlaneseq
    %v1989 = vshrl.u32 %v1988, 7
    %v1990 = vsub.s32 0, %v1989
    %v1991 = vrot.slane %v1979, %v1990
    %v1992 = vadd.f32 %v1982, %v1991
    %v1993 = vadd.f32 %v1986, %v1991
    %v1994 = vmax.f32 %v1977, %v1992
    %v1995 = vmax.f32 %v1978, %v1993
    %v1996 = vld [vmem:[%s1 + $0x74] sm:$0x1]
    %1997 = vset.pattern.permute.xlu0 116
    %1998 = vperm.xlu0 %1997, %v20
    %v1999 = vpop.permute.xlu0 %1998
    %2001 = vset.pattern.permute.xlu0 116
    %2002 = vperm.xlu0 %2001, %v21
    %v2003 = vpop.permute.xlu0 %2002
    %v2005 = vlaneseq
    %v2006 = vshrl.u32 %v2005, 7
    %v2007 = vsub.s32 0, %v2006
    %v2008 = vrot.slane %v1996, %v2007
    %v2009 = vadd.f32 %v1999, %v2008
    %v2010 = vadd.f32 %v2003, %v2008
    %v2011 = vmax.f32 %v1994, %v2009
    %v2012 = vmax.f32 %v1995, %v2010
    %v2013 = vld [vmem:[%s1 + $0x75] sm:$0x1]
    %2014 = vset.pattern.permute.xlu0 117
    %2015 = vperm.xlu0 %2014, %v20
    %v2016 = vpop.permute.xlu0 %2015
    %2018 = vset.pattern.permute.xlu0 117
    %2019 = vperm.xlu0 %2018, %v21
    %v2020 = vpop.permute.xlu0 %2019
    %v2022 = vlaneseq
    %v2023 = vshrl.u32 %v2022, 7
    %v2024 = vsub.s32 0, %v2023
    %v2025 = vrot.slane %v2013, %v2024
    %v2026 = vadd.f32 %v2016, %v2025
    %v2027 = vadd.f32 %v2020, %v2025
    %v2028 = vmax.f32 %v2011, %v2026
    %v2029 = vmax.f32 %v2012, %v2027
    %v2030 = vld [vmem:[%s1 + $0x76] sm:$0x1]
    %2031 = vset.pattern.permute.xlu0 118
    %2032 = vperm.xlu0 %2031, %v20
    %v2033 = vpop.permute.xlu0 %2032
    %2035 = vset.pattern.permute.xlu0 118
    %2036 = vperm.xlu0 %2035, %v21
    %v2037 = vpop.permute.xlu0 %2036
    %v2039 = vlaneseq
    %v2040 = vshrl.u32 %v2039, 7
    %v2041 = vsub.s32 0, %v2040
    %v2042 = vrot.slane %v2030, %v2041
    %v2043 = vadd.f32 %v2033, %v2042
    %v2044 = vadd.f32 %v2037, %v2042
    %v2045 = vmax.f32 %v2028, %v2043
    %v2046 = vmax.f32 %v2029, %v2044
    %v2047 = vld [vmem:[%s1 + $0x77] sm:$0x1]
    %2048 = vset.pattern.permute.xlu0 119
    %2049 = vperm.xlu0 %2048, %v20
    %v2050 = vpop.permute.xlu0 %2049
    %2052 = vset.pattern.permute.xlu0 119
    %2053 = vperm.xlu0 %2052, %v21
    %v2054 = vpop.permute.xlu0 %2053
    %v2056 = vlaneseq
    %v2057 = vshrl.u32 %v2056, 7
    %v2058 = vsub.s32 0, %v2057
    %v2059 = vrot.slane %v2047, %v2058
    %v2060 = vadd.f32 %v2050, %v2059
    %v2061 = vadd.f32 %v2054, %v2059
    %v2062 = vmax.f32 %v2045, %v2060
    %v2063 = vmax.f32 %v2046, %v2061
    %v2064 = vld [vmem:[%s1 + $0x78] sm:$0x1]
    %2065 = vset.pattern.permute.xlu0 120
    %2066 = vperm.xlu0 %2065, %v20
    %v2067 = vpop.permute.xlu0 %2066
    %2069 = vset.pattern.permute.xlu0 120
    %2070 = vperm.xlu0 %2069, %v21
    %v2071 = vpop.permute.xlu0 %2070
    %v2073 = vlaneseq
    %v2074 = vshrl.u32 %v2073, 7
    %v2075 = vsub.s32 0, %v2074
    %v2076 = vrot.slane %v2064, %v2075
    %v2077 = vadd.f32 %v2067, %v2076
    %v2078 = vadd.f32 %v2071, %v2076
    %v2079 = vmax.f32 %v2062, %v2077
    %v2080 = vmax.f32 %v2063, %v2078
    %v2081 = vld [vmem:[%s1 + $0x79] sm:$0x1]
    %2082 = vset.pattern.permute.xlu0 121
    %2083 = vperm.xlu0 %2082, %v20
    %v2084 = vpop.permute.xlu0 %2083
    %2086 = vset.pattern.permute.xlu0 121
    %2087 = vperm.xlu0 %2086, %v21
    %v2088 = vpop.permute.xlu0 %2087
    %v2090 = vlaneseq
    %v2091 = vshrl.u32 %v2090, 7
    %v2092 = vsub.s32 0, %v2091
    %v2093 = vrot.slane %v2081, %v2092
    %v2094 = vadd.f32 %v2084, %v2093
    %v2095 = vadd.f32 %v2088, %v2093
    %v2096 = vmax.f32 %v2079, %v2094
    %v2097 = vmax.f32 %v2080, %v2095
    %v2098 = vld [vmem:[%s1 + $0x7a] sm:$0x1]
    %2099 = vset.pattern.permute.xlu0 122
    %2100 = vperm.xlu0 %2099, %v20
    %v2101 = vpop.permute.xlu0 %2100
    %2103 = vset.pattern.permute.xlu0 122
    %2104 = vperm.xlu0 %2103, %v21
    %v2105 = vpop.permute.xlu0 %2104
    %v2107 = vlaneseq
    %v2108 = vshrl.u32 %v2107, 7
    %v2109 = vsub.s32 0, %v2108
    %v2110 = vrot.slane %v2098, %v2109
    %v2111 = vadd.f32 %v2101, %v2110
    %v2112 = vadd.f32 %v2105, %v2110
    %v2113 = vmax.f32 %v2096, %v2111
    %v2114 = vmax.f32 %v2097, %v2112
    %v2115 = vld [vmem:[%s1 + $0x7b] sm:$0x1]
    %2116 = vset.pattern.permute.xlu0 123
    %2117 = vperm.xlu0 %2116, %v20
    %v2118 = vpop.permute.xlu0 %2117
    %2120 = vset.pattern.permute.xlu0 123
    %2121 = vperm.xlu0 %2120, %v21
    %v2122 = vpop.permute.xlu0 %2121
    %v2124 = vlaneseq
    %v2125 = vshrl.u32 %v2124, 7
    %v2126 = vsub.s32 0, %v2125
    %v2127 = vrot.slane %v2115, %v2126
    %v2128 = vadd.f32 %v2118, %v2127
    %v2129 = vadd.f32 %v2122, %v2127
    %v2130 = vmax.f32 %v2113, %v2128
    %v2131 = vmax.f32 %v2114, %v2129
    %v2132 = vld [vmem:[%s1 + $0x7c] sm:$0x1]
    %2133 = vset.pattern.permute.xlu0 124
    %2134 = vperm.xlu0 %2133, %v20
    %v2135 = vpop.permute.xlu0 %2134
    %2137 = vset.pattern.permute.xlu0 124
    %2138 = vperm.xlu0 %2137, %v21
    %v2139 = vpop.permute.xlu0 %2138
    %v2141 = vlaneseq
    %v2142 = vshrl.u32 %v2141, 7
    %v2143 = vsub.s32 0, %v2142
    %v2144 = vrot.slane %v2132, %v2143
    %v2145 = vadd.f32 %v2135, %v2144
    %v2146 = vadd.f32 %v2139, %v2144
    %v2147 = vmax.f32 %v2130, %v2145
    %v2148 = vmax.f32 %v2131, %v2146
    %v2149 = vld [vmem:[%s1 + $0x7d] sm:$0x1]
    %2150 = vset.pattern.permute.xlu0 125
    %2151 = vperm.xlu0 %2150, %v20
    %v2152 = vpop.permute.xlu0 %2151
    %2154 = vset.pattern.permute.xlu0 125
    %2155 = vperm.xlu0 %2154, %v21
    %v2156 = vpop.permute.xlu0 %2155
    %v2158 = vlaneseq
    %v2159 = vshrl.u32 %v2158, 7
    %v2160 = vsub.s32 0, %v2159
    %v2161 = vrot.slane %v2149, %v2160
    %v2162 = vadd.f32 %v2152, %v2161
    %v2163 = vadd.f32 %v2156, %v2161
    %v2164 = vmax.f32 %v2147, %v2162
    %v2165 = vmax.f32 %v2148, %v2163
    %v2166 = vld [vmem:[%s1 + $0x7e] sm:$0x1]
    %2167 = vset.pattern.permute.xlu0 126
    %2168 = vperm.xlu0 %2167, %v20
    %v2169 = vpop.permute.xlu0 %2168
    %2171 = vset.pattern.permute.xlu0 126
    %2172 = vperm.xlu0 %2171, %v21
    %v2173 = vpop.permute.xlu0 %2172
    %v2175 = vlaneseq
    %v2176 = vshrl.u32 %v2175, 7
    %v2177 = vsub.s32 0, %v2176
    %v2178 = vrot.slane %v2166, %v2177
    %v2179 = vadd.f32 %v2169, %v2178
    %v2180 = vadd.f32 %v2173, %v2178
    %v2181 = vmax.f32 %v2164, %v2179
    %v2182 = vmax.f32 %v2165, %v2180
    %v2183 = vld [vmem:[%s1 + $0x7f] sm:$0x1]
    %2184 = vset.pattern.permute.xlu0 127
    %2185 = vperm.xlu0 %2184, %v20
    %v2186 = vpop.permute.xlu0 %2185
    %2188 = vset.pattern.permute.xlu0 127
    %2189 = vperm.xlu0 %2188, %v21
    %v2190 = vpop.permute.xlu0 %2189
    %v2192 = vlaneseq
    %v2193 = vshrl.u32 %v2192, 7
    %v2194 = vsub.s32 0, %v2193
    %v2195 = vrot.slane %v2183, %v2194
    %v2196 = vadd.f32 %v2186, %v2195
    %v2197 = vadd.f32 %v2190, %v2195
    %v2198 = vmax.f32 %v2181, %v2196
    %v2199 = vmax.f32 %v2182, %v2197
    %2200 = vst [vmem:[#allocation2] sm:$0xff] %v2198
    %2201 = vst [vmem:[#allocation2 + $0x8] sm:$0xff] %v2199
    // Predicated region
    $region14: #{hnet_max.1} parent=1 // pred_check
      %p2202 = pneg %p12
    $region15: #{hnet_max.1} parent=1 // pred_check_branch
      %2204 = sbr.rel (%p2202) target = $region17
    $region16: #{hnet_max.1} parent=1 // pred_region
      %2205 = vst [vmem:[#allocation3] sm:$0xff] %v2198
      %2206 = vst [vmem:[#allocation3 + $0x8] sm:$0xff] %v2199
    $region17: #{hnet_max.1} parent=1 // pred_fallthru
      _
    // Predicated region
    $region18: #{hnet_max.1} parent=1 // pred_check
      _
    $region19: #{hnet_max.1} parent=1 // pred_check_branch
      %2208 = sbr.rel (0) target = $region21
    $region20: #{hnet_max.1} parent=1 // pred_region
      %s2210 = ssub.s32 256, 256
      %2211 = vsyncadd [#allocation4], %s2210
      %s2212 = sshll.u32 [#allocation3], 4
      %s2213 = int_to_ptr.vmem [resolvable:$true] %s2212
      %2218 = dma.vmem_to_hbm [thread:$0]  %s2213, 256, %s2, [#allocation4], 128, 128, 8
    $region21: #{hnet_max.1} parent=1 // pred_fallthru
      _
    // Predicated region
    $region22: #{hnet_max.1} parent=1 // pred_check
      _
    $region23: #{hnet_max.1} parent=1 // pred_check_branch
      %2220 = sbr.rel (0) target = $region25
    $region24: #{hnet_max.1} parent=1 // pred_region
      %2221 = dma.done [#allocation4], 256
    $region25: #{hnet_max.1} parent=1 // pred_fallthru
      _
    %2222 = vsyncpa [#allocation4], 1

</llo_original>
